<compile_context>
chip_gen: v6e
topology: v6e:2x2x1
jax: 0.10.0
libtpu: 0.0.40
codegen_flags: <defaults>
</compile_context>

<pallas_src>
import functools

import jax
import jax.numpy as jnp
from jax.experimental import pallas as pl
from jax.experimental.pallas import tpu as pltpu


def _round_up(x, m):
    return ((x + m - 1) // m) * m


def _vmem_limit_bytes():
    # Generation-aware VMEM budget: ~3/4 of physical capacity
    # (v5e/v6e: 128 MiB -> 96 MiB, v7x: 64 MiB -> 48 MiB).
    try:
        cap = int(pltpu.get_tpu_info().vmem_capacity_bytes)
    except Exception:
        cap = 64 * 1024 * 1024
    return int(min(cap * 3 // 4, 96 * 1024 * 1024))


_VMEM_LIMIT = _vmem_limit_bytes()


def _pick_tile_oh(oh, ow_pad, target_elems=64 * 1024):
    """Output-row tile: big enough to amortize the ~0.35us per-grid-step
    overhead, small enough that the per-tile working set stays modest."""
    t = max(1, target_elems // max(ow_pad * 128, 1))
    t = min(t, oh)
    if t > 8:
        t -= t % 8
    return max(t, 1)


def _prep_conv_input(x_nhwc, kh, kw, stride, pad, oh_pad, ow_pad):
    """Pad, cast to bf16 and split into stride*stride phase images so the
    kernel only ever needs contiguous (unit-stride) tap slices.

    Returns (N, stride*stride, PH, PW, Cin) bf16 with
      phase[a*stride+b][u, v, :] == x_padded[stride*u + a, stride*v + b, :].
    Total HBM traffic is ~1x the input (vs. the 9x im2col it replaces); the
    bf16 cast rides the mandatory pad pass."""
    ph = oh_pad + (kh - 1) // stride
    pw = ow_pad + (kw - 1) // stride
    xp = jnp.pad(x_nhwc.astype(jnp.bfloat16),
                 ((0, 0), (pad, pad), (pad, pad), (0, 0)))
    phases = []
    for a in range(stride):
        for b in range(stride):
            p = xp[:, a::stride, b::stride, :]
            p = p[:, :ph, :pw, :]
            p = jnp.pad(p, ((0, 0), (0, ph - p.shape[1]),
                            (0, pw - p.shape[2]), (0, 0)))
            phases.append(p)
    return jnp.stack(phases, axis=1)


# ---------------------------------------------------------------------------
# Fused backbone conv: in-kernel tap accumulation + bias + ReLU.
# ---------------------------------------------------------------------------
def _conv_relu_kernel(x_ref, w_ref, b_ref, o_ref, *,
                      tile_oh, ow, kh, kw, cin, cout, stride):
    r0 = pl.program_id(1) * tile_oh
    m = tile_oh * ow
    acc = jnp.zeros((m, cout), jnp.float32)
    # Accumulate the KH*KW taps straight from the resident phase images
    # (no HBM im2col).  Every tap slice is contiguous.
    for i in range(kh):
        for j in range(kw):
            pidx = (i % stride) * stride + (j % stride)
            tap = x_ref[0, pidx,
                        pl.ds(r0 + i // stride, tile_oh),
                        pl.ds(j // stride, ow), :]
            acc = acc + jnp.dot(tap.reshape(m, cin), w_ref[i * kw + j],
                                preferred_element_type=jnp.float32)
    acc = jnp.maximum(acc + b_ref[...], 0.0)
    o_ref[...] = acc.reshape(1, tile_oh, ow, cout).astype(o_ref.dtype)


def conv2d_relu(x_nhwc, w, b, *, stride, pad):
    """x: (N,H,W,Cin) f32, w: (KH,KW,Cin,Cout), b: (Cout,) -> (N,OH,OW,Cout)."""
    n, h, width, cin = x_nhwc.shape
    kh, kw, _, cout = w.shape
    oh = (h + 2 * pad - kh) // stride + 1
    ow = (width + 2 * pad - kw) // stride + 1
    ow_pad = _round_up(ow, 8)                 # keep in-kernel reshapes aligned
    tile_oh = _pick_tile_oh(oh, ow_pad)
    oh_pad = _round_up(oh, tile_oh)

    xph = _prep_conv_input(x_nhwc, kh, kw, stride, pad, oh_pad, ow_pad)
    s2, ph, pw = xph.shape[1], xph.shape[2], xph.shape[3]
    wk = w.reshape(kh * kw, cin, cout).astype(jnp.bfloat16)
    bk = b.reshape(1, cout).astype(jnp.float32)

    kern = functools.partial(_conv_relu_kernel, tile_oh=tile_oh, ow=ow_pad,
                             kh=kh, kw=kw, cin=cin, cout=cout, stride=stride)
    grid_spec = pl.GridSpec(
        grid=(n, oh_pad // tile_oh),
        in_specs=[
            # Whole (small) phase image per batch element, resident across row
            # tiles.  TODO(synk): halo row band + pl.Buffered(1) for very
            # large images on v7x (64 MiB VMEM).
            pl.BlockSpec((1, s2, ph, pw, cin), lambda i, r: (i, 0, 0, 0, 0)),
            pl.BlockSpec((kh * kw, cin, cout), lambda i, r: (0, 0, 0)),
            pl.BlockSpec((1, cout), lambda i, r: (0, 0)),
        ],
        out_specs=pl.BlockSpec((1, tile_oh, ow_pad, cout),
                               lambda i, r: (i, r, 0, 0)),
    )
    out = pl.pallas_call(
        kern,
        out_shape=jax.ShapeDtypeStruct((n, oh_pad, ow_pad, cout), jnp.float32),
        grid_spec=grid_spec,
        compiler_params=pltpu.CompilerParams(
            dimension_semantics=("parallel", "parallel"),
            vmem_limit_bytes=_VMEM_LIMIT),
    )(xph, wk, bk)
    return out[:, :oh, :ow, :]


def upsample_nearest(x_nhwc, factor):
    x = jnp.repeat(x_nhwc, factor, axis=1)
    x = jnp.repeat(x, factor, axis=2)
    return x


# ---------------------------------------------------------------------------
# Fused MaskDetectors kernel: filter_size conv (tap accumulation, no im2col)
# + ReLU + 1x1 classifier + exact sigmoid epilogue.  Both results share one
# lane-dense 128-channel output block (emb in [0:cfb], masks in [cfb:cfb+cls]).
# ---------------------------------------------------------------------------
def _detector_kernel(x_ref, wd_ref, bd_ref, wc_ref, bc_ref, o_ref, *,
                     tile_oh, ow, kh, kw, cin, cfb, cpad):
    r0 = pl.program_id(1) * tile_oh
    m = tile_oh * ow
    acc = jnp.zeros((m, cpad), jnp.float32)
    for i in range(kh):
        for j in range(kw):
            tap = x_ref[0, 0, pl.ds(r0 + i, tile_oh), pl.ds(j, ow), :]
            acc = acc + jnp.dot(tap.reshape(m, cin), wd_ref[i * kw + j],
                                preferred_element_type=jnp.float32)
    # Mask embeddings (ReLU).  Padded lanes >= cfb stay exactly 0.
    emb = jnp.maximum(acc + bd_ref[...], 0.0)
    # 1x1 classifier epilogue on the same VMEM tile; exact sigmoid (the
    # approximate reciprocal could exceed 1.0).
    logits = jnp.dot(emb.astype(jnp.bfloat16), wc_ref[...],
                     preferred_element_type=jnp.float32) + bc_ref[...]
    masks = 1.0 / (1.0 + jnp.exp(-logits))
    lane = jax.lax.broadcasted_iota(jnp.int32, (m, cpad), 1)
    combined = jnp.where(lane < cfb, emb, masks)
    o_ref[...] = combined.reshape(1, tile_oh, ow, cpad).astype(o_ref.dtype)


def mask_detectors(merged, wd, bd, wc, bc, *, pad):
    """merged: (N,H,W,Cin) f32.  Returns (predicted_masks, mask_embeddings)
    in NHWC with their true channel counts."""
    n, h, width, cin = merged.shape
    kh, kw, _, cfb = wd.shape
    ccls = wc.shape[-1]
    cpad = 128
    assert cfb + ccls <= cpad, "channel packing assumes filter_banks+classes<=128"

    oh = h + 2 * pad - kh + 1
    ow = width + 2 * pad - kw + 1
    ow_pad = _round_up(ow, 8)
    tile_oh = _pick_tile_oh(oh, ow_pad)
    oh_pad = _round_up(oh, tile_oh)

    xph = _prep_conv_input(merged, kh, kw, 1, pad, oh_pad, ow_pad)
    ph, pw = xph.shape[2], xph.shape[3]

    # Zero-padded weights: detector writes lanes [0:cfb], classifier writes
    # lanes [cfb:cfb+ccls]; padded lanes contribute nothing.
    wd_p = jnp.zeros((kh * kw, cin, cpad), jnp.bfloat16)
    wd_p = wd_p.at[..., :cfb].set(
        wd.reshape(kh * kw, cin, cfb).astype(jnp.bfloat16))
    bd_p = jnp.zeros((1, cpad), jnp.float32).at[0, :cfb].set(bd)
    wc_p = jnp.zeros((cpad, cpad), jnp.bfloat16)
    wc_p = wc_p.at[:cfb, cfb:cfb + ccls].set(
        wc.reshape(cfb, ccls).astype(jnp.bfloat16))
    bc_p = jnp.zeros((1, cpad), jnp.float32).at[0, cfb:cfb + ccls].set(bc)

    kern = functools.partial(_detector_kernel, tile_oh=tile_oh, ow=ow_pad,
                             kh=kh, kw=kw, cin=cin, cfb=cfb, cpad=cpad)
    grid_spec = pl.GridSpec(
        grid=(n, oh_pad // tile_oh),
        in_specs=[
            pl.BlockSpec((1, 1, ph, pw, cin), lambda i, r: (i, 0, 0, 0, 0)),
            pl.BlockSpec((kh * kw, cin, cpad), lambda i, r: (0, 0, 0)),
            pl.BlockSpec((1, cpad), lambda i, r: (0, 0)),
            pl.BlockSpec((cpad, cpad), lambda i, r: (0, 0)),
            pl.BlockSpec((1, cpad), lambda i, r: (0, 0)),
        ],
        out_specs=pl.BlockSpec((1, tile_oh, ow_pad, cpad),
                               lambda i, r: (i, r, 0, 0)),
    )
    comb = pl.pallas_call(
        kern,
        out_shape=jax.ShapeDtypeStruct((n, oh_pad, ow_pad, cpad), jnp.float32),
        grid_spec=grid_spec,
        compiler_params=pltpu.CompilerParams(
            dimension_semantics=("parallel", "parallel"),
            vmem_limit_bytes=_VMEM_LIMIT),
    )(xph, wd_p, bd_p, wc_p, bc_p)

    comb = comb[:, :oh, :ow, :]
    masks = comb[..., cfb:cfb + ccls]
    mask_emb = comb[..., :cfb]
    return masks, mask_emb


# ---------------------------------------------------------------------------
# Model
# ---------------------------------------------------------------------------
class PallasModel:
    def __init__(self, classes, filter_banks, filter_size, scale,
                 in_channels=3, key=None):
        self.scale = scale
        self.classes = classes
        self.filter_banks = filter_banks
        self.filter_size = filter_size

        c2, c4, c8 = 8, 16, 32          # backbone channel widths
        self.c2, self.c4, self.c8 = c2, c4, c8
        cm = c2 + c4 + c8               # merged channels

        if key is None:
            key = jax.random.PRNGKey(42)
        keys = jax.random.split(key, 10)

        def winit(k, shape):
            fan_in = shape[0] * shape[1] * shape[2]
            return (jax.random.normal(k, shape, jnp.float32)
                    * (1.0 / jnp.sqrt(fan_in)))

        # Backbone: three strided 3x3 convs
        self.w1 = winit(keys[0], (3, 3, in_channels, c2))
        self.b1 = jnp.zeros((c2,), jnp.float32)
        self.w2 = winit(keys[1], (3, 3, c2, c4))
        self.b2 = jnp.zeros((c4,), jnp.float32)
        self.w3 = winit(keys[2], (3, 3, c4, c8))
        self.b3 = jnp.zeros((c8,), jnp.float32)

        # MaskDetectors: filter_size conv -> filter_banks, then 1x1 -> classes
        self.wd = winit(keys[3], (filter_size, filter_size, cm, filter_banks))
        self.bd = jnp.zeros((filter_banks,), jnp.float32)
        self.wc = winit(keys[4], (1, 1, filter_banks, classes))
        self.bc = jnp.zeros((classes,), jnp.float32)

        # TODO(synk): MaskRefiners / Classifiers exist in __init__ of the
        # original module but are not used in forward(); omitted.

    def __call__(self, x_nchw):
        # NCHW (PyTorch) -> NHWC (kernel layout)
        x = jnp.transpose(x_nchw, (0, 2, 3, 1)).astype(jnp.float32)

        # Backbone feature pyramid (fused conv+bias+ReLU kernels)
        e2 = conv2d_relu(x,  self.w1, self.b1, stride=2, pad=1)   # H/2
        e4 = conv2d_relu(e2, self.w2, self.b2, stride=2, pad=1)   # H/4
        e8 = conv2d_relu(e4, self.w3, self.b3, stride=2, pad=1)   # H/8
        # TODO(synk): upsample+concat kept in XLA since `merged` is returned.
        merged = jnp.concatenate(
            [e2, upsample_nearest(e4, 2), upsample_nearest(e8, 4)], axis=-1)

        # MaskDetectors: fused conv + ReLU + 1x1 classifier + sigmoid
        masks, mask_emb = mask_detectors(
            merged, self.wd, self.bd, self.wc, self.bc,
            pad=self.filter_size // 2)

        to_nchw = lambda t: jnp.transpose(t, (0, 3, 1, 2))
        return (to_nchw(masks),       # predicted_masks   (N, classes, H/2, W/2)
                to_nchw(mask_emb),    # mask_embeddings   (N, filter_banks, H/2, W/2)
                to_nchw(merged),      # embeddings_merged (N, 56, H/2, W/2)
                to_nchw(e2),          # embeddings_2
                to_nchw(e4),          # embeddings_4
                to_nchw(e8))          # embeddings_8


# ---------------------------------------------------------------------------
if __name__ == "__main__":
    classes, filter_banks, filter_size, scale = 4, 8, 3, 2
    model = PallasModel(classes, filter_banks, filter_size, scale,
                        in_channels=3, key=jax.random.PRNGKey(42))

    x = jax.random.normal(jax.random.PRNGKey(0), (2, 3, 16, 16), jnp.float32)

    fwd = jax.jit(model.__call__)
    outs = fwd(x)
    outs = jax.block_until_ready(outs)

    # light sanity checks on shapes / values
    assert outs[0].shape == (2, classes, 8, 8)
    assert outs[1].shape == (2, filter_banks, 8, 8)
    assert outs[2].shape == (2, 8 + 16 + 32, 8, 8)
    assert outs[3].shape == (2, 8, 8, 8)
    assert outs[4].shape == (2, 16, 4, 4)
    assert outs[5].shape == (2, 32, 2, 2)
    assert bool(jnp.all(jnp.isfinite(outs[0])))
    assert bool(jnp.all((outs[0] >= 0.0) & (outs[0] <= 1.0)))   # sigmoid range
    assert bool(jnp.all(outs[1] >= 0.0))                        # ReLU range

    print("KERNEL_OK")
</pallas_src>

<mosaic_0001>
module attributes {stable_mosaic.version = 11 : i64} {
  func.func @_conv_relu_kernel(%arg0: i32, %arg1: i32, %arg2: memref<1x4x9x9x3xbf16, #tpu.memory_space<vmem>>, %arg3: memref<9x3x8xbf16, #tpu.memory_space<vmem>>, %arg4: memref<1x8xf32, #tpu.memory_space<vmem>>, %arg5: memref<1x8x8x8xf32, #tpu.memory_space<vmem>>) attributes {dimension_semantics = [#tpu.dimension_semantics<parallel>, #tpu.dimension_semantics<parallel>], iteration_bounds = array<i64: 2, 1>, scalar_prefetch = 0 : i64, scratch_operands = 0 : i64, tpu.core_type = #tpu.core_type<tc>, window_params = [{transform_indices = @transform_0, window_bounds = array<i64: 1, 4, 9, 9, 3>}, {pipeline_mode = #tpu.pipeline_mode<synchronous>, transform_indices = @transform_1, window_bounds = array<i64: 9, 3, 8>}, {pipeline_mode = #tpu.pipeline_mode<synchronous>, transform_indices = @transform_2, window_bounds = array<i64: 1, 8>}, {transform_indices = @transform_3, window_bounds = array<i64: 1, 8, 8, 8>}]} {
    %c8_i32 = arith.constant 8 : i32
    %0 = arith.muli %arg1, %c8_i32 : i32
    %cst = arith.constant 0.000000e+00 : f32
    %1 = vector.broadcast %cst : f32 to vector<64x8xf32>
    %c0_i32 = arith.constant 0 : i32
    %2 = arith.addi %0, %c0_i32 : i32
    %c0 = arith.constant 0 : index
    %c0_0 = arith.constant 0 : index
    %3 = arith.index_cast %2 : i32 to index
    %c0_1 = arith.constant 0 : index
    %c0_2 = arith.constant 0 : index
    %4 = vector.load %arg2[%c0, %c0_0, %3, %c0_1, %c0_2] : memref<1x4x9x9x3xbf16, #tpu.memory_space<vmem>>, vector<1x1x8x8x3xbf16>
    %5 = vector.shape_cast %4 : vector<1x1x8x8x3xbf16> to vector<8x8x3xbf16>
    %6 = vector.shape_cast %5 : vector<8x8x3xbf16> to vector<64x3xbf16>
    %c0_3 = arith.constant 0 : index
    %c0_4 = arith.constant 0 : index
    %c0_5 = arith.constant 0 : index
    %7 = vector.load %arg3[%c0_3, %c0_4, %c0_5] : memref<9x3x8xbf16, #tpu.memory_space<vmem>>, vector<1x3x8xbf16>
    %8 = vector.shape_cast %7 : vector<1x3x8xbf16> to vector<3x8xbf16>
    %cst_6 = arith.constant dense<0.000000e+00> : vector<64x8xf32>
    %9 = tpu.matmul %6, %8, %cst_6 {dimension_numbers = #tpu.dot_dimension_numbers<[1], [0], [0], [1], [0, 0, 1, 1], [], []>} : vector<64x3xbf16>, vector<3x8xbf16>, vector<64x8xf32> -> vector<64x8xf32>
    %10 = arith.addf %1, %9 : vector<64x8xf32>
    %c0_i32_7 = arith.constant 0 : i32
    %11 = arith.addi %0, %c0_i32_7 : i32
    %c0_8 = arith.constant 0 : index
    %c1 = arith.constant 1 : index
    %12 = arith.index_cast %11 : i32 to index
    %c0_9 = arith.constant 0 : index
    %c0_10 = arith.constant 0 : index
    %13 = vector.load %arg2[%c0_8, %c1, %12, %c0_9, %c0_10] : memref<1x4x9x9x3xbf16, #tpu.memory_space<vmem>>, vector<1x1x8x8x3xbf16>
    %14 = vector.shape_cast %13 : vector<1x1x8x8x3xbf16> to vector<8x8x3xbf16>
    %15 = vector.shape_cast %14 : vector<8x8x3xbf16> to vector<64x3xbf16>
    %c1_11 = arith.constant 1 : index
    %c0_12 = arith.constant 0 : index
    %c0_13 = arith.constant 0 : index
    %16 = vector.load %arg3[%c1_11, %c0_12, %c0_13] : memref<9x3x8xbf16, #tpu.memory_space<vmem>>, vector<1x3x8xbf16>
    %17 = vector.shape_cast %16 : vector<1x3x8xbf16> to vector<3x8xbf16>
    %cst_14 = arith.constant dense<0.000000e+00> : vector<64x8xf32>
    %18 = tpu.matmul %15, %17, %cst_14 {dimension_numbers = #tpu.dot_dimension_numbers<[1], [0], [0], [1], [0, 0, 1, 1], [], []>} : vector<64x3xbf16>, vector<3x8xbf16>, vector<64x8xf32> -> vector<64x8xf32>
    %19 = arith.addf %10, %18 : vector<64x8xf32>
    %c0_i32_15 = arith.constant 0 : i32
    %20 = arith.addi %0, %c0_i32_15 : i32
    %c0_16 = arith.constant 0 : index
    %c0_17 = arith.constant 0 : index
    %21 = arith.index_cast %20 : i32 to index
    %c1_18 = arith.constant 1 : index
    %c0_19 = arith.constant 0 : index
    %22 = vector.load %arg2[%c0_16, %c0_17, %21, %c1_18, %c0_19] : memref<1x4x9x9x3xbf16, #tpu.memory_space<vmem>>, vector<1x1x8x8x3xbf16>
    %23 = vector.shape_cast %22 : vector<1x1x8x8x3xbf16> to vector<8x8x3xbf16>
    %24 = vector.shape_cast %23 : vector<8x8x3xbf16> to vector<64x3xbf16>
    %c2 = arith.constant 2 : index
    %c0_20 = arith.constant 0 : index
    %c0_21 = arith.constant 0 : index
    %25 = vector.load %arg3[%c2, %c0_20, %c0_21] : memref<9x3x8xbf16, #tpu.memory_space<vmem>>, vector<1x3x8xbf16>
    %26 = vector.shape_cast %25 : vector<1x3x8xbf16> to vector<3x8xbf16>
    %cst_22 = arith.constant dense<0.000000e+00> : vector<64x8xf32>
    %27 = tpu.matmul %24, %26, %cst_22 {dimension_numbers = #tpu.dot_dimension_numbers<[1], [0], [0], [1], [0, 0, 1, 1], [], []>} : vector<64x3xbf16>, vector<3x8xbf16>, vector<64x8xf32> -> vector<64x8xf32>
    %28 = arith.addf %19, %27 : vector<64x8xf32>
    %c0_i32_23 = arith.constant 0 : i32
    %29 = arith.addi %0, %c0_i32_23 : i32
    %c0_24 = arith.constant 0 : index
    %c2_25 = arith.constant 2 : index
    %30 = arith.index_cast %29 : i32 to index
    %c0_26 = arith.constant 0 : index
    %c0_27 = arith.constant 0 : index
    %31 = vector.load %arg2[%c0_24, %c2_25, %30, %c0_26, %c0_27] : memref<1x4x9x9x3xbf16, #tpu.memory_space<vmem>>, vector<1x1x8x8x3xbf16>
    %32 = vector.shape_cast %31 : vector<1x1x8x8x3xbf16> to vector<8x8x3xbf16>
    %33 = vector.shape_cast %32 : vector<8x8x3xbf16> to vector<64x3xbf16>
    %c3 = arith.constant 3 : index
    %c0_28 = arith.constant 0 : index
    %c0_29 = arith.constant 0 : index
    %34 = vector.load %arg3[%c3, %c0_28, %c0_29] : memref<9x3x8xbf16, #tpu.memory_space<vmem>>, vector<1x3x8xbf16>
    %35 = vector.shape_cast %34 : vector<1x3x8xbf16> to vector<3x8xbf16>
    %cst_30 = arith.constant dense<0.000000e+00> : vector<64x8xf32>
    %36 = tpu.matmul %33, %35, %cst_30 {dimension_numbers = #tpu.dot_dimension_numbers<[1], [0], [0], [1], [0, 0, 1, 1], [], []>} : vector<64x3xbf16>, vector<3x8xbf16>, vector<64x8xf32> -> vector<64x8xf32>
    %37 = arith.addf %28, %36 : vector<64x8xf32>
    %c0_i32_31 = arith.constant 0 : i32
    %38 = arith.addi %0, %c0_i32_31 : i32
    %c0_32 = arith.constant 0 : index
    %c3_33 = arith.constant 3 : index
    %39 = arith.index_cast %38 : i32 to index
    %c0_34 = arith.constant 0 : index
    %c0_35 = arith.constant 0 : index
    %40 = vector.load %arg2[%c0_32, %c3_33, %39, %c0_34, %c0_35] : memref<1x4x9x9x3xbf16, #tpu.memory_space<vmem>>, vector<1x1x8x8x3xbf16>
    %41 = vector.shape_cast %40 : vector<1x1x8x8x3xbf16> to vector<8x8x3xbf16>
    %42 = vector.shape_cast %41 : vector<8x8x3xbf16> to vector<64x3xbf16>
    %c4 = arith.constant 4 : index
    %c0_36 = arith.constant 0 : index
    %c0_37 = arith.constant 0 : index
    %43 = vector.load %arg3[%c4, %c0_36, %c0_37] : memref<9x3x8xbf16, #tpu.memory_space<vmem>>, vector<1x3x8xbf16>
    %44 = vector.shape_cast %43 : vector<1x3x8xbf16> to vector<3x8xbf16>
    %cst_38 = arith.constant dense<0.000000e+00> : vector<64x8xf32>
    %45 = tpu.matmul %42, %44, %cst_38 {dimension_numbers = #tpu.dot_dimension_numbers<[1], [0], [0], [1], [0, 0, 1, 1], [], []>} : vector<64x3xbf16>, vector<3x8xbf16>, vector<64x8xf32> -> vector<64x8xf32>
    %46 = arith.addf %37, %45 : vector<64x8xf32>
    %c0_i32_39 = arith.constant 0 : i32
    %47 = arith.addi %0, %c0_i32_39 : i32
    %c0_40 = arith.constant 0 : index
    %c2_41 = arith.constant 2 : index
    %48 = arith.index_cast %47 : i32 to index
    %c1_42 = arith.constant 1 : index
    %c0_43 = arith.constant 0 : index
    %49 = vector.load %arg2[%c0_40, %c2_41, %48, %c1_42, %c0_43] : memref<1x4x9x9x3xbf16, #tpu.memory_space<vmem>>, vector<1x1x8x8x3xbf16>
    %50 = vector.shape_cast %49 : vector<1x1x8x8x3xbf16> to vector<8x8x3xbf16>
    %51 = vector.shape_cast %50 : vector<8x8x3xbf16> to vector<64x3xbf16>
    %c5 = arith.constant 5 : index
    %c0_44 = arith.constant 0 : index
    %c0_45 = arith.constant 0 : index
    %52 = vector.load %arg3[%c5, %c0_44, %c0_45] : memref<9x3x8xbf16, #tpu.memory_space<vmem>>, vector<1x3x8xbf16>
    %53 = vector.shape_cast %52 : vector<1x3x8xbf16> to vector<3x8xbf16>
    %cst_46 = arith.constant dense<0.000000e+00> : vector<64x8xf32>
    %54 = tpu.matmul %51, %53, %cst_46 {dimension_numbers = #tpu.dot_dimension_numbers<[1], [0], [0], [1], [0, 0, 1, 1], [], []>} : vector<64x3xbf16>, vector<3x8xbf16>, vector<64x8xf32> -> vector<64x8xf32>
    %55 = arith.addf %46, %54 : vector<64x8xf32>
    %c1_i32 = arith.constant 1 : i32
    %56 = arith.addi %0, %c1_i32 : i32
    %c0_47 = arith.constant 0 : index
    %c0_48 = arith.constant 0 : index
    %57 = arith.index_cast %56 : i32 to index
    %c0_49 = arith.constant 0 : index
    %c0_50 = arith.constant 0 : index
    %58 = vector.load %arg2[%c0_47, %c0_48, %57, %c0_49, %c0_50] : memref<1x4x9x9x3xbf16, #tpu.memory_space<vmem>>, vector<1x1x8x8x3xbf16>
    %59 = vector.shape_cast %58 : vector<1x1x8x8x3xbf16> to vector<8x8x3xbf16>
    %60 = vector.shape_cast %59 : vector<8x8x3xbf16> to vector<64x3xbf16>
    %c6 = arith.constant 6 : index
    %c0_51 = arith.constant 0 : index
    %c0_52 = arith.constant 0 : index
    %61 = vector.load %arg3[%c6, %c0_51, %c0_52] : memref<9x3x8xbf16, #tpu.memory_space<vmem>>, vector<1x3x8xbf16>
    %62 = vector.shape_cast %61 : vector<1x3x8xbf16> to vector<3x8xbf16>
    %cst_53 = arith.constant dense<0.000000e+00> : vector<64x8xf32>
    %63 = tpu.matmul %60, %62, %cst_53 {dimension_numbers = #tpu.dot_dimension_numbers<[1], [0], [0], [1], [0, 0, 1, 1], [], []>} : vector<64x3xbf16>, vector<3x8xbf16>, vector<64x8xf32> -> vector<64x8xf32>
    %64 = arith.addf %55, %63 : vector<64x8xf32>
    %c1_i32_54 = arith.constant 1 : i32
    %65 = arith.addi %0, %c1_i32_54 : i32
    %c0_55 = arith.constant 0 : index
    %c1_56 = arith.constant 1 : index
    %66 = arith.index_cast %65 : i32 to index
    %c0_57 = arith.constant 0 : index
    %c0_58 = arith.constant 0 : index
    %67 = vector.load %arg2[%c0_55, %c1_56, %66, %c0_57, %c0_58] : memref<1x4x9x9x3xbf16, #tpu.memory_space<vmem>>, vector<1x1x8x8x3xbf16>
    %68 = vector.shape_cast %67 : vector<1x1x8x8x3xbf16> to vector<8x8x3xbf16>
    %69 = vector.shape_cast %68 : vector<8x8x3xbf16> to vector<64x3xbf16>
    %c7 = arith.constant 7 : index
    %c0_59 = arith.constant 0 : index
    %c0_60 = arith.constant 0 : index
    %70 = vector.load %arg3[%c7, %c0_59, %c0_60] : memref<9x3x8xbf16, #tpu.memory_space<vmem>>, vector<1x3x8xbf16>
    %71 = vector.shape_cast %70 : vector<1x3x8xbf16> to vector<3x8xbf16>
    %cst_61 = arith.constant dense<0.000000e+00> : vector<64x8xf32>
    %72 = tpu.matmul %69, %71, %cst_61 {dimension_numbers = #tpu.dot_dimension_numbers<[1], [0], [0], [1], [0, 0, 1, 1], [], []>} : vector<64x3xbf16>, vector<3x8xbf16>, vector<64x8xf32> -> vector<64x8xf32>
    %73 = arith.addf %64, %72 : vector<64x8xf32>
    %c1_i32_62 = arith.constant 1 : i32
    %74 = arith.addi %0, %c1_i32_62 : i32
    %c0_63 = arith.constant 0 : index
    %c0_64 = arith.constant 0 : index
    %75 = arith.index_cast %74 : i32 to index
    %c1_65 = arith.constant 1 : index
    %c0_66 = arith.constant 0 : index
    %76 = vector.load %arg2[%c0_63, %c0_64, %75, %c1_65, %c0_66] : memref<1x4x9x9x3xbf16, #tpu.memory_space<vmem>>, vector<1x1x8x8x3xbf16>
    %77 = vector.shape_cast %76 : vector<1x1x8x8x3xbf16> to vector<8x8x3xbf16>
    %78 = vector.shape_cast %77 : vector<8x8x3xbf16> to vector<64x3xbf16>
    %c8 = arith.constant 8 : index
    %c0_67 = arith.constant 0 : index
    %c0_68 = arith.constant 0 : index
    %79 = vector.load %arg3[%c8, %c0_67, %c0_68] : memref<9x3x8xbf16, #tpu.memory_space<vmem>>, vector<1x3x8xbf16>
    %80 = vector.shape_cast %79 : vector<1x3x8xbf16> to vector<3x8xbf16>
    %cst_69 = arith.constant dense<0.000000e+00> : vector<64x8xf32>
    %81 = tpu.matmul %78, %80, %cst_69 {dimension_numbers = #tpu.dot_dimension_numbers<[1], [0], [0], [1], [0, 0, 1, 1], [], []>} : vector<64x3xbf16>, vector<3x8xbf16>, vector<64x8xf32> -> vector<64x8xf32>
    %82 = arith.addf %73, %81 : vector<64x8xf32>
    %c0_70 = arith.constant 0 : index
    %c0_71 = arith.constant 0 : index
    %83 = vector.load %arg4[%c0_70, %c0_71] : memref<1x8xf32, #tpu.memory_space<vmem>>, vector<1x8xf32>
    %84 = vector.broadcast %83 : vector<1x8xf32> to vector<64x8xf32>
    %85 = arith.addf %82, %84 : vector<64x8xf32>
    %cst_72 = arith.constant 0.000000e+00 : f32
    %86 = vector.broadcast %cst_72 : f32 to vector<64x8xf32>
    %87 = arith.maximumf %85, %86 : vector<64x8xf32>
    %88 = vector.shape_cast %87 : vector<64x8xf32> to vector<1x8x8x8xf32>
    %c0_73 = arith.constant 0 : index
    %c0_74 = arith.constant 0 : index
    %c0_75 = arith.constant 0 : index
    %c0_76 = arith.constant 0 : index
    %89 = vector.load %arg5[%c0_73, %c0_74, %c0_75, %c0_76] : memref<1x8x8x8xf32, #tpu.memory_space<vmem>>, vector<1x8x8x8xf32>
    tpu.vector_store %arg5[%c0_73, %c0_74, %c0_75, %c0_76], %88 {strides = array<i32>} : memref<1x8x8x8xf32, #tpu.memory_space<vmem>>, vector<1x8x8x8xf32>,
    return
  }
  func.func @transform_0(%arg0: i32, %arg1: i32) -> (i32, i32, i32, i32, i32) {
    %c0_i32 = arith.constant 0 : i32
    %c0_i32_0 = arith.constant 0 : i32
    %c0_i32_1 = arith.constant 0 : i32
    %c0_i32_2 = arith.constant 0 : i32
    %c0_i32_3 = arith.constant 0 : i32
    return %arg0, %c0_i32, %c0_i32_0, %c0_i32_1, %c0_i32_2 : i32, i32, i32, i32, i32
  }
  func.func @transform_1(%arg0: i32, %arg1: i32) -> (i32, i32, i32) {
    %c0_i32 = arith.constant 0 : i32
    %c0_i32_0 = arith.constant 0 : i32
    %c0_i32_1 = arith.constant 0 : i32
    %c0_i32_2 = arith.constant 0 : i32
    return %c0_i32, %c0_i32_0, %c0_i32_1 : i32, i32, i32
  }
  func.func @transform_2(%arg0: i32, %arg1: i32) -> (i32, i32) {
    %c0_i32 = arith.constant 0 : i32
    %c0_i32_0 = arith.constant 0 : i32
    %c0_i32_1 = arith.constant 0 : i32
    return %c0_i32, %c0_i32_0 : i32, i32
  }
  func.func @transform_3(%arg0: i32, %arg1: i32) -> (i32, i32, i32, i32) {
    %c0_i32 = arith.constant 0 : i32
    %c0_i32_0 = arith.constant 0 : i32
    %c0_i32_1 = arith.constant 0 : i32
    return %arg0, %arg1, %c0_i32, %c0_i32_0 : i32, i32, i32, i32
  }
}

module attributes {stable_mosaic.version = 11 : i64} {
  func.func @_conv_relu_kernel(%arg0: i32, %arg1: i32, %arg2: memref<1x4x5x9x8xbf16, #tpu.memory_space<vmem>>, %arg3: memref<9x8x16xbf16, #tpu.memory_space<vmem>>, %arg4: memref<1x16xf32, #tpu.memory_space<vmem>>, %arg5: memref<1x4x8x16xf32, #tpu.memory_space<vmem>>) attributes {dimension_semantics = [#tpu.dimension_semantics<parallel>, #tpu.dimension_semantics<parallel>], iteration_bounds = array<i64: 2, 1>, scalar_prefetch = 0 : i64, scratch_operands = 0 : i64, tpu.core_type = #tpu.core_type<tc>, window_params = [{transform_indices = @transform_0, window_bounds = array<i64: 1, 4, 5, 9, 8>}, {pipeline_mode = #tpu.pipeline_mode<synchronous>, transform_indices = @transform_1, window_bounds = array<i64: 9, 8, 16>}, {pipeline_mode = #tpu.pipeline_mode<synchronous>, transform_indices = @transform_2, window_bounds = array<i64: 1, 16>}, {transform_indices = @transform_3, window_bounds = array<i64: 1, 4, 8, 16>}]} {
    %c4_i32 = arith.constant 4 : i32
    %0 = arith.muli %arg1, %c4_i32 : i32
    %cst = arith.constant 0.000000e+00 : f32
    %1 = vector.broadcast %cst : f32 to vector<32x16xf32>
    %c0_i32 = arith.constant 0 : i32
    %2 = arith.addi %0, %c0_i32 : i32
    %c0 = arith.constant 0 : index
    %c0_0 = arith.constant 0 : index
    %3 = arith.index_cast %2 : i32 to index
    %c0_1 = arith.constant 0 : index
    %c0_2 = arith.constant 0 : index
    %4 = vector.load %arg2[%c0, %c0_0, %3, %c0_1, %c0_2] : memref<1x4x5x9x8xbf16, #tpu.memory_space<vmem>>, vector<1x1x4x8x8xbf16>
    %5 = vector.shape_cast %4 : vector<1x1x4x8x8xbf16> to vector<4x8x8xbf16>
    %6 = vector.shape_cast %5 : vector<4x8x8xbf16> to vector<32x8xbf16>
    %c0_3 = arith.constant 0 : index
    %c0_4 = arith.constant 0 : index
    %c0_5 = arith.constant 0 : index
    %7 = vector.load %arg3[%c0_3, %c0_4, %c0_5] : memref<9x8x16xbf16, #tpu.memory_space<vmem>>, vector<1x8x16xbf16>
    %8 = vector.shape_cast %7 : vector<1x8x16xbf16> to vector<8x16xbf16>
    %cst_6 = arith.constant dense<0.000000e+00> : vector<32x16xf32>
    %9 = tpu.matmul %6, %8, %cst_6 {dimension_numbers = #tpu.dot_dimension_numbers<[1], [0], [0], [1], [0, 0, 1, 1], [], []>} : vector<32x8xbf16>, vector<8x16xbf16>, vector<32x16xf32> -> vector<32x16xf32>
    %10 = arith.addf %1, %9 : vector<32x16xf32>
    %c0_i32_7 = arith.constant 0 : i32
    %11 = arith.addi %0, %c0_i32_7 : i32
    %c0_8 = arith.constant 0 : index
    %c1 = arith.constant 1 : index
    %12 = arith.index_cast %11 : i32 to index
    %c0_9 = arith.constant 0 : index
    %c0_10 = arith.constant 0 : index
    %13 = vector.load %arg2[%c0_8, %c1, %12, %c0_9, %c0_10] : memref<1x4x5x9x8xbf16, #tpu.memory_space<vmem>>, vector<1x1x4x8x8xbf16>
    %14 = vector.shape_cast %13 : vector<1x1x4x8x8xbf16> to vector<4x8x8xbf16>
    %15 = vector.shape_cast %14 : vector<4x8x8xbf16> to vector<32x8xbf16>
    %c1_11 = arith.constant 1 : index
    %c0_12 = arith.constant 0 : index
    %c0_13 = arith.constant 0 : index
    %16 = vector.load %arg3[%c1_11, %c0_12, %c0_13] : memref<9x8x16xbf16, #tpu.memory_space<vmem>>, vector<1x8x16xbf16>
    %17 = vector.shape_cast %16 : vector<1x8x16xbf16> to vector<8x16xbf16>
    %cst_14 = arith.constant dense<0.000000e+00> : vector<32x16xf32>
    %18 = tpu.matmul %15, %17, %cst_14 {dimension_numbers = #tpu.dot_dimension_numbers<[1], [0], [0], [1], [0, 0, 1, 1], [], []>} : vector<32x8xbf16>, vector<8x16xbf16>, vector<32x16xf32> -> vector<32x16xf32>
    %19 = arith.addf %10, %18 : vector<32x16xf32>
    %c0_i32_15 = arith.constant 0 : i32
    %20 = arith.addi %0, %c0_i32_15 : i32
    %c0_16 = arith.constant 0 : index
    %c0_17 = arith.constant 0 : index
    %21 = arith.index_cast %20 : i32 to index
    %c1_18 = arith.constant 1 : index
    %c0_19 = arith.constant 0 : index
    %22 = vector.load %arg2[%c0_16, %c0_17, %21, %c1_18, %c0_19] : memref<1x4x5x9x8xbf16, #tpu.memory_space<vmem>>, vector<1x1x4x8x8xbf16>
    %23 = vector.shape_cast %22 : vector<1x1x4x8x8xbf16> to vector<4x8x8xbf16>
    %24 = vector.shape_cast %23 : vector<4x8x8xbf16> to vector<32x8xbf16>
    %c2 = arith.constant 2 : index
    %c0_20 = arith.constant 0 : index
    %c0_21 = arith.constant 0 : index
    %25 = vector.load %arg3[%c2, %c0_20, %c0_21] : memref<9x8x16xbf16, #tpu.memory_space<vmem>>, vector<1x8x16xbf16>
    %26 = vector.shape_cast %25 : vector<1x8x16xbf16> to vector<8x16xbf16>
    %cst_22 = arith.constant dense<0.000000e+00> : vector<32x16xf32>
    %27 = tpu.matmul %24, %26, %cst_22 {dimension_numbers = #tpu.dot_dimension_numbers<[1], [0], [0], [1], [0, 0, 1, 1], [], []>} : vector<32x8xbf16>, vector<8x16xbf16>, vector<32x16xf32> -> vector<32x16xf32>
    %28 = arith.addf %19, %27 : vector<32x16xf32>
    %c0_i32_23 = arith.constant 0 : i32
    %29 = arith.addi %0, %c0_i32_23 : i32
    %c0_24 = arith.constant 0 : index
    %c2_25 = arith.constant 2 : index
    %30 = arith.index_cast %29 : i32 to index
    %c0_26 = arith.constant 0 : index
    %c0_27 = arith.constant 0 : index
    %31 = vector.load %arg2[%c0_24, %c2_25, %30, %c0_26, %c0_27] : memref<1x4x5x9x8xbf16, #tpu.memory_space<vmem>>, vector<1x1x4x8x8xbf16>
    %32 = vector.shape_cast %31 : vector<1x1x4x8x8xbf16> to vector<4x8x8xbf16>
    %33 = vector.shape_cast %32 : vector<4x8x8xbf16> to vector<32x8xbf16>
    %c3 = arith.constant 3 : index
    %c0_28 = arith.constant 0 : index
    %c0_29 = arith.constant 0 : index
    %34 = vector.load %arg3[%c3, %c0_28, %c0_29] : memref<9x8x16xbf16, #tpu.memory_space<vmem>>, vector<1x8x16xbf16>
    %35 = vector.shape_cast %34 : vector<1x8x16xbf16> to vector<8x16xbf16>
    %cst_30 = arith.constant dense<0.000000e+00> : vector<32x16xf32>
    %36 = tpu.matmul %33, %35, %cst_30 {dimension_numbers = #tpu.dot_dimension_numbers<[1], [0], [0], [1], [0, 0, 1, 1], [], []>} : vector<32x8xbf16>, vector<8x16xbf16>, vector<32x16xf32> -> vector<32x16xf32>
    %37 = arith.addf %28, %36 : vector<32x16xf32>
    %c0_i32_31 = arith.constant 0 : i32
    %38 = arith.addi %0, %c0_i32_31 : i32
    %c0_32 = arith.constant 0 : index
    %c3_33 = arith.constant 3 : index
    %39 = arith.index_cast %38 : i32 to index
    %c0_34 = arith.constant 0 : index
    %c0_35 = arith.constant 0 : index
    %40 = vector.load %arg2[%c0_32, %c3_33, %39, %c0_34, %c0_35] : memref<1x4x5x9x8xbf16, #tpu.memory_space<vmem>>, vector<1x1x4x8x8xbf16>
    %41 = vector.shape_cast %40 : vector<1x1x4x8x8xbf16> to vector<4x8x8xbf16>
    %42 = vector.shape_cast %41 : vector<4x8x8xbf16> to vector<32x8xbf16>
    %c4 = arith.constant 4 : index
    %c0_36 = arith.constant 0 : index
    %c0_37 = arith.constant 0 : index
    %43 = vector.load %arg3[%c4, %c0_36, %c0_37] : memref<9x8x16xbf16, #tpu.memory_space<vmem>>, vector<1x8x16xbf16>
    %44 = vector.shape_cast %43 : vector<1x8x16xbf16> to vector<8x16xbf16>
    %cst_38 = arith.constant dense<0.000000e+00> : vector<32x16xf32>
    %45 = tpu.matmul %42, %44, %cst_38 {dimension_numbers = #tpu.dot_dimension_numbers<[1], [0], [0], [1], [0, 0, 1, 1], [], []>} : vector<32x8xbf16>, vector<8x16xbf16>, vector<32x16xf32> -> vector<32x16xf32>
    %46 = arith.addf %37, %45 : vector<32x16xf32>
    %c0_i32_39 = arith.constant 0 : i32
    %47 = arith.addi %0, %c0_i32_39 : i32
    %c0_40 = arith.constant 0 : index
    %c2_41 = arith.constant 2 : index
    %48 = arith.index_cast %47 : i32 to index
    %c1_42 = arith.constant 1 : index
    %c0_43 = arith.constant 0 : index
    %49 = vector.load %arg2[%c0_40, %c2_41, %48, %c1_42, %c0_43] : memref<1x4x5x9x8xbf16, #tpu.memory_space<vmem>>, vector<1x1x4x8x8xbf16>
    %50 = vector.shape_cast %49 : vector<1x1x4x8x8xbf16> to vector<4x8x8xbf16>
    %51 = vector.shape_cast %50 : vector<4x8x8xbf16> to vector<32x8xbf16>
    %c5 = arith.constant 5 : index
    %c0_44 = arith.constant 0 : index
    %c0_45 = arith.constant 0 : index
    %52 = vector.load %arg3[%c5, %c0_44, %c0_45] : memref<9x8x16xbf16, #tpu.memory_space<vmem>>, vector<1x8x16xbf16>
    %53 = vector.shape_cast %52 : vector<1x8x16xbf16> to vector<8x16xbf16>
    %cst_46 = arith.constant dense<0.000000e+00> : vector<32x16xf32>
    %54 = tpu.matmul %51, %53, %cst_46 {dimension_numbers = #tpu.dot_dimension_numbers<[1], [0], [0], [1], [0, 0, 1, 1], [], []>} : vector<32x8xbf16>, vector<8x16xbf16>, vector<32x16xf32> -> vector<32x16xf32>
    %55 = arith.addf %46, %54 : vector<32x16xf32>
    %c1_i32 = arith.constant 1 : i32
    %56 = arith.addi %0, %c1_i32 : i32
    %c0_47 = arith.constant 0 : index
    %c0_48 = arith.constant 0 : index
    %57 = arith.index_cast %56 : i32 to index
    %c0_49 = arith.constant 0 : index
    %c0_50 = arith.constant 0 : index
    %58 = vector.load %arg2[%c0_47, %c0_48, %57, %c0_49, %c0_50] : memref<1x4x5x9x8xbf16, #tpu.memory_space<vmem>>, vector<1x1x4x8x8xbf16>
    %59 = vector.shape_cast %58 : vector<1x1x4x8x8xbf16> to vector<4x8x8xbf16>
    %60 = vector.shape_cast %59 : vector<4x8x8xbf16> to vector<32x8xbf16>
    %c6 = arith.constant 6 : index
    %c0_51 = arith.constant 0 : index
    %c0_52 = arith.constant 0 : index
    %61 = vector.load %arg3[%c6, %c0_51, %c0_52] : memref<9x8x16xbf16, #tpu.memory_space<vmem>>, vector<1x8x16xbf16>
    %62 = vector.shape_cast %61 : vector<1x8x16xbf16> to vector<8x16xbf16>
    %cst_53 = arith.constant dense<0.000000e+00> : vector<32x16xf32>
    %63 = tpu.matmul %60, %62, %cst_53 {dimension_numbers = #tpu.dot_dimension_numbers<[1], [0], [0], [1], [0, 0, 1, 1], [], []>} : vector<32x8xbf16>, vector<8x16xbf16>, vector<32x16xf32> -> vector<32x16xf32>
    %64 = arith.addf %55, %63 : vector<32x16xf32>
    %c1_i32_54 = arith.constant 1 : i32
    %65 = arith.addi %0, %c1_i32_54 : i32
    %c0_55 = arith.constant 0 : index
    %c1_56 = arith.constant 1 : index
    %66 = arith.index_cast %65 : i32 to index
    %c0_57 = arith.constant 0 : index
    %c0_58 = arith.constant 0 : index
    %67 = vector.load %arg2[%c0_55, %c1_56, %66, %c0_57, %c0_58] : memref<1x4x5x9x8xbf16, #tpu.memory_space<vmem>>, vector<1x1x4x8x8xbf16>
    %68 = vector.shape_cast %67 : vector<1x1x4x8x8xbf16> to vector<4x8x8xbf16>
    %69 = vector.shape_cast %68 : vector<4x8x8xbf16> to vector<32x8xbf16>
    %c7 = arith.constant 7 : index
    %c0_59 = arith.constant 0 : index
    %c0_60 = arith.constant 0 : index
    %70 = vector.load %arg3[%c7, %c0_59, %c0_60] : memref<9x8x16xbf16, #tpu.memory_space<vmem>>, vector<1x8x16xbf16>
    %71 = vector.shape_cast %70 : vector<1x8x16xbf16> to vector<8x16xbf16>
    %cst_61 = arith.constant dense<0.000000e+00> : vector<32x16xf32>
    %72 = tpu.matmul %69, %71, %cst_61 {dimension_numbers = #tpu.dot_dimension_numbers<[1], [0], [0], [1], [0, 0, 1, 1], [], []>} : vector<32x8xbf16>, vector<8x16xbf16>, vector<32x16xf32> -> vector<32x16xf32>
    %73 = arith.addf %64, %72 : vector<32x16xf32>
    %c1_i32_62 = arith.constant 1 : i32
    %74 = arith.addi %0, %c1_i32_62 : i32
    %c0_63 = arith.constant 0 : index
    %c0_64 = arith.constant 0 : index
    %75 = arith.index_cast %74 : i32 to index
    %c1_65 = arith.constant 1 : index
    %c0_66 = arith.constant 0 : index
    %76 = vector.load %arg2[%c0_63, %c0_64, %75, %c1_65, %c0_66] : memref<1x4x5x9x8xbf16, #tpu.memory_space<vmem>>, vector<1x1x4x8x8xbf16>
    %77 = vector.shape_cast %76 : vector<1x1x4x8x8xbf16> to vector<4x8x8xbf16>
    %78 = vector.shape_cast %77 : vector<4x8x8xbf16> to vector<32x8xbf16>
    %c8 = arith.constant 8 : index
    %c0_67 = arith.constant 0 : index
    %c0_68 = arith.constant 0 : index
    %79 = vector.load %arg3[%c8, %c0_67, %c0_68] : memref<9x8x16xbf16, #tpu.memory_space<vmem>>, vector<1x8x16xbf16>
    %80 = vector.shape_cast %79 : vector<1x8x16xbf16> to vector<8x16xbf16>
    %cst_69 = arith.constant dense<0.000000e+00> : vector<32x16xf32>
    %81 = tpu.matmul %78, %80, %cst_69 {dimension_numbers = #tpu.dot_dimension_numbers<[1], [0], [0], [1], [0, 0, 1, 1], [], []>} : vector<32x8xbf16>, vector<8x16xbf16>, vector<32x16xf32> -> vector<32x16xf32>
    %82 = arith.addf %73, %81 : vector<32x16xf32>
    %c0_70 = arith.constant 0 : index
    %c0_71 = arith.constant 0 : index
    %83 = vector.load %arg4[%c0_70, %c0_71] : memref<1x16xf32, #tpu.memory_space<vmem>>, vector<1x16xf32>
    %84 = vector.broadcast %83 : vector<1x16xf32> to vector<32x16xf32>
    %85 = arith.addf %82, %84 : vector<32x16xf32>
    %cst_72 = arith.constant 0.000000e+00 : f32
    %86 = vector.broadcast %cst_72 : f32 to vector<32x16xf32>
    %87 = arith.maximumf %85, %86 : vector<32x16xf32>
    %88 = vector.shape_cast %87 : vector<32x16xf32> to vector<1x4x8x16xf32>
    %c0_73 = arith.constant 0 : index
    %c0_74 = arith.constant 0 : index
    %c0_75 = arith.constant 0 : index
    %c0_76 = arith.constant 0 : index
    %89 = vector.load %arg5[%c0_73, %c0_74, %c0_75, %c0_76] : memref<1x4x8x16xf32, #tpu.memory_space<vmem>>, vector<1x4x8x16xf32>
    tpu.vector_store %arg5[%c0_73, %c0_74, %c0_75, %c0_76], %88 {strides = array<i32>} : memref<1x4x8x16xf32, #tpu.memory_space<vmem>>, vector<1x4x8x16xf32>,
    return
  }
  func.func @transform_0(%arg0: i32, %arg1: i32) -> (i32, i32, i32, i32, i32) {
    %c0_i32 = arith.constant 0 : i32
    %c0_i32_0 = arith.constant 0 : i32
    %c0_i32_1 = arith.constant 0 : i32
    %c0_i32_2 = arith.constant 0 : i32
    %c0_i32_3 = arith.constant 0 : i32
    return %arg0, %c0_i32, %c0_i32_0, %c0_i32_1, %c0_i32_2 : i32, i32, i32, i32, i32
  }
  func.func @transform_1(%arg0: i32, %arg1: i32) -> (i32, i32, i32) {
    %c0_i32 = arith.constant 0 : i32
    %c0_i32_0 = arith.constant 0 : i32
    %c0_i32_1 = arith.constant 0 : i32
    %c0_i32_2 = arith.constant 0 : i32
    return %c0_i32, %c0_i32_0, %c0_i32_1 : i32, i32, i32
  }
  func.func @transform_2(%arg0: i32, %arg1: i32) -> (i32, i32) {
    %c0_i32 = arith.constant 0 : i32
    %c0_i32_0 = arith.constant 0 : i32
    %c0_i32_1 = arith.constant 0 : i32
    return %c0_i32, %c0_i32_0 : i32, i32
  }
  func.func @transform_3(%arg0: i32, %arg1: i32) -> (i32, i32, i32, i32) {
    %c0_i32 = arith.constant 0 : i32
    %c0_i32_0 = arith.constant 0 : i32
    %c0_i32_1 = arith.constant 0 : i32
    return %arg0, %arg1, %c0_i32, %c0_i32_0 : i32, i32, i32, i32
  }
}

module attributes {stable_mosaic.version = 11 : i64} {
  func.func @_conv_relu_kernel(%arg0: i32, %arg1: i32, %arg2: memref<1x4x3x9x16xbf16, #tpu.memory_space<vmem>>, %arg3: memref<9x16x32xbf16, #tpu.memory_space<vmem>>, %arg4: memref<1x32xf32, #tpu.memory_space<vmem>>, %arg5: memref<1x2x8x32xf32, #tpu.memory_space<vmem>>) attributes {dimension_semantics = [#tpu.dimension_semantics<parallel>, #tpu.dimension_semantics<parallel>], iteration_bounds = array<i64: 2, 1>, scalar_prefetch = 0 : i64, scratch_operands = 0 : i64, tpu.core_type = #tpu.core_type<tc>, window_params = [{transform_indices = @transform_0, window_bounds = array<i64: 1, 4, 3, 9, 16>}, {pipeline_mode = #tpu.pipeline_mode<synchronous>, transform_indices = @transform_1, window_bounds = array<i64: 9, 16, 32>}, {pipeline_mode = #tpu.pipeline_mode<synchronous>, transform_indices = @transform_2, window_bounds = array<i64: 1, 32>}, {transform_indices = @transform_3, window_bounds = array<i64: 1, 2, 8, 32>}]} {
    %c2_i32 = arith.constant 2 : i32
    %0 = arith.muli %arg1, %c2_i32 : i32
    %cst = arith.constant 0.000000e+00 : f32
    %1 = vector.broadcast %cst : f32 to vector<16x32xf32>
    %c0_i32 = arith.constant 0 : i32
    %2 = arith.addi %0, %c0_i32 : i32
    %c0 = arith.constant 0 : index
    %c0_0 = arith.constant 0 : index
    %3 = arith.index_cast %2 : i32 to index
    %c0_1 = arith.constant 0 : index
    %c0_2 = arith.constant 0 : index
    %4 = vector.load %arg2[%c0, %c0_0, %3, %c0_1, %c0_2] : memref<1x4x3x9x16xbf16, #tpu.memory_space<vmem>>, vector<1x1x2x8x16xbf16>
    %5 = vector.shape_cast %4 : vector<1x1x2x8x16xbf16> to vector<2x8x16xbf16>
    %6 = vector.shape_cast %5 : vector<2x8x16xbf16> to vector<16x16xbf16>
    %c0_3 = arith.constant 0 : index
    %c0_4 = arith.constant 0 : index
    %c0_5 = arith.constant 0 : index
    %7 = vector.load %arg3[%c0_3, %c0_4, %c0_5] : memref<9x16x32xbf16, #tpu.memory_space<vmem>>, vector<1x16x32xbf16>
    %8 = vector.shape_cast %7 : vector<1x16x32xbf16> to vector<16x32xbf16>
    %cst_6 = arith.constant dense<0.000000e+00> : vector<16x32xf32>
    %9 = tpu.matmul %6, %8, %cst_6 {dimension_numbers = #tpu.dot_dimension_numbers<[1], [0], [0], [1], [0, 0, 1, 1], [], []>} : vector<16x16xbf16>, vector<16x32xbf16>, vector<16x32xf32> -> vector<16x32xf32>
    %10 = arith.addf %1, %9 : vector<16x32xf32>
    %c0_i32_7 = arith.constant 0 : i32
    %11 = arith.addi %0, %c0_i32_7 : i32
    %c0_8 = arith.constant 0 : index
    %c1 = arith.constant 1 : index
    %12 = arith.index_cast %11 : i32 to index
    %c0_9 = arith.constant 0 : index
    %c0_10 = arith.constant 0 : index
    %13 = vector.load %arg2[%c0_8, %c1, %12, %c0_9, %c0_10] : memref<1x4x3x9x16xbf16, #tpu.memory_space<vmem>>, vector<1x1x2x8x16xbf16>
    %14 = vector.shape_cast %13 : vector<1x1x2x8x16xbf16> to vector<2x8x16xbf16>
    %15 = vector.shape_cast %14 : vector<2x8x16xbf16> to vector<16x16xbf16>
    %c1_11 = arith.constant 1 : index
    %c0_12 = arith.constant 0 : index
    %c0_13 = arith.constant 0 : index
    %16 = vector.load %arg3[%c1_11, %c0_12, %c0_13] : memref<9x16x32xbf16, #tpu.memory_space<vmem>>, vector<1x16x32xbf16>
    %17 = vector.shape_cast %16 : vector<1x16x32xbf16> to vector<16x32xbf16>
    %cst_14 = arith.constant dense<0.000000e+00> : vector<16x32xf32>
    %18 = tpu.matmul %15, %17, %cst_14 {dimension_numbers = #tpu.dot_dimension_numbers<[1], [0], [0], [1], [0, 0, 1, 1], [], []>} : vector<16x16xbf16>, vector<16x32xbf16>, vector<16x32xf32> -> vector<16x32xf32>
    %19 = arith.addf %10, %18 : vector<16x32xf32>
    %c0_i32_15 = arith.constant 0 : i32
    %20 = arith.addi %0, %c0_i32_15 : i32
    %c0_16 = arith.constant 0 : index
    %c0_17 = arith.constant 0 : index
    %21 = arith.index_cast %20 : i32 to index
    %c1_18 = arith.constant 1 : index
    %c0_19 = arith.constant 0 : index
    %22 = vector.load %arg2[%c0_16, %c0_17, %21, %c1_18, %c0_19] : memref<1x4x3x9x16xbf16, #tpu.memory_space<vmem>>, vector<1x1x2x8x16xbf16>
    %23 = vector.shape_cast %22 : vector<1x1x2x8x16xbf16> to vector<2x8x16xbf16>
    %24 = vector.shape_cast %23 : vector<2x8x16xbf16> to vector<16x16xbf16>
    %c2 = arith.constant 2 : index
    %c0_20 = arith.constant 0 : index
    %c0_21 = arith.constant 0 : index
    %25 = vector.load %arg3[%c2, %c0_20, %c0_21] : memref<9x16x32xbf16, #tpu.memory_space<vmem>>, vector<1x16x32xbf16>
    %26 = vector.shape_cast %25 : vector<1x16x32xbf16> to vector<16x32xbf16>
    %cst_22 = arith.constant dense<0.000000e+00> : vector<16x32xf32>
    %27 = tpu.matmul %24, %26, %cst_22 {dimension_numbers = #tpu.dot_dimension_numbers<[1], [0], [0], [1], [0, 0, 1, 1], [], []>} : vector<16x16xbf16>, vector<16x32xbf16>, vector<16x32xf32> -> vector<16x32xf32>
    %28 = arith.addf %19, %27 : vector<16x32xf32>
    %c0_i32_23 = arith.constant 0 : i32
    %29 = arith.addi %0, %c0_i32_23 : i32
    %c0_24 = arith.constant 0 : index
    %c2_25 = arith.constant 2 : index
    %30 = arith.index_cast %29 : i32 to index
    %c0_26 = arith.constant 0 : index
    %c0_27 = arith.constant 0 : index
    %31 = vector.load %arg2[%c0_24, %c2_25, %30, %c0_26, %c0_27] : memref<1x4x3x9x16xbf16, #tpu.memory_space<vmem>>, vector<1x1x2x8x16xbf16>
    %32 = vector.shape_cast %31 : vector<1x1x2x8x16xbf16> to vector<2x8x16xbf16>
    %33 = vector.shape_cast %32 : vector<2x8x16xbf16> to vector<16x16xbf16>
    %c3 = arith.constant 3 : index
    %c0_28 = arith.constant 0 : index
    %c0_29 = arith.constant 0 : index
    %34 = vector.load %arg3[%c3, %c0_28, %c0_29] : memref<9x16x32xbf16, #tpu.memory_space<vmem>>, vector<1x16x32xbf16>
    %35 = vector.shape_cast %34 : vector<1x16x32xbf16> to vector<16x32xbf16>
    %cst_30 = arith.constant dense<0.000000e+00> : vector<16x32xf32>
    %36 = tpu.matmul %33, %35, %cst_30 {dimension_numbers = #tpu.dot_dimension_numbers<[1], [0], [0], [1], [0, 0, 1, 1], [], []>} : vector<16x16xbf16>, vector<16x32xbf16>, vector<16x32xf32> -> vector<16x32xf32>
    %37 = arith.addf %28, %36 : vector<16x32xf32>
    %c0_i32_31 = arith.constant 0 : i32
    %38 = arith.addi %0, %c0_i32_31 : i32
    %c0_32 = arith.constant 0 : index
    %c3_33 = arith.constant 3 : index
    %39 = arith.index_cast %38 : i32 to index
    %c0_34 = arith.constant 0 : index
    %c0_35 = arith.constant 0 : index
    %40 = vector.load %arg2[%c0_32, %c3_33, %39, %c0_34, %c0_35] : memref<1x4x3x9x16xbf16, #tpu.memory_space<vmem>>, vector<1x1x2x8x16xbf16>
    %41 = vector.shape_cast %40 : vector<1x1x2x8x16xbf16> to vector<2x8x16xbf16>
    %42 = vector.shape_cast %41 : vector<2x8x16xbf16> to vector<16x16xbf16>
    %c4 = arith.constant 4 : index
    %c0_36 = arith.constant 0 : index
    %c0_37 = arith.constant 0 : index
    %43 = vector.load %arg3[%c4, %c0_36, %c0_37] : memref<9x16x32xbf16, #tpu.memory_space<vmem>>, vector<1x16x32xbf16>
    %44 = vector.shape_cast %43 : vector<1x16x32xbf16> to vector<16x32xbf16>
    %cst_38 = arith.constant dense<0.000000e+00> : vector<16x32xf32>
    %45 = tpu.matmul %42, %44, %cst_38 {dimension_numbers = #tpu.dot_dimension_numbers<[1], [0], [0], [1], [0, 0, 1, 1], [], []>} : vector<16x16xbf16>, vector<16x32xbf16>, vector<16x32xf32> -> vector<16x32xf32>
    %46 = arith.addf %37, %45 : vector<16x32xf32>
    %c0_i32_39 = arith.constant 0 : i32
    %47 = arith.addi %0, %c0_i32_39 : i32
    %c0_40 = arith.constant 0 : index
    %c2_41 = arith.constant 2 : index
    %48 = arith.index_cast %47 : i32 to index
    %c1_42 = arith.constant 1 : index
    %c0_43 = arith.constant 0 : index
    %49 = vector.load %arg2[%c0_40, %c2_41, %48, %c1_42, %c0_43] : memref<1x4x3x9x16xbf16, #tpu.memory_space<vmem>>, vector<1x1x2x8x16xbf16>
    %50 = vector.shape_cast %49 : vector<1x1x2x8x16xbf16> to vector<2x8x16xbf16>
    %51 = vector.shape_cast %50 : vector<2x8x16xbf16> to vector<16x16xbf16>
    %c5 = arith.constant 5 : index
    %c0_44 = arith.constant 0 : index
    %c0_45 = arith.constant 0 : index
    %52 = vector.load %arg3[%c5, %c0_44, %c0_45] : memref<9x16x32xbf16, #tpu.memory_space<vmem>>, vector<1x16x32xbf16>
    %53 = vector.shape_cast %52 : vector<1x16x32xbf16> to vector<16x32xbf16>
    %cst_46 = arith.constant dense<0.000000e+00> : vector<16x32xf32>
    %54 = tpu.matmul %51, %53, %cst_46 {dimension_numbers = #tpu.dot_dimension_numbers<[1], [0], [0], [1], [0, 0, 1, 1], [], []>} : vector<16x16xbf16>, vector<16x32xbf16>, vector<16x32xf32> -> vector<16x32xf32>
    %55 = arith.addf %46, %54 : vector<16x32xf32>
    %c1_i32 = arith.constant 1 : i32
    %56 = arith.addi %0, %c1_i32 : i32
    %c0_47 = arith.constant 0 : index
    %c0_48 = arith.constant 0 : index
    %57 = arith.index_cast %56 : i32 to index
    %c0_49 = arith.constant 0 : index
    %c0_50 = arith.constant 0 : index
    %58 = vector.load %arg2[%c0_47, %c0_48, %57, %c0_49, %c0_50] : memref<1x4x3x9x16xbf16, #tpu.memory_space<vmem>>, vector<1x1x2x8x16xbf16>
    %59 = vector.shape_cast %58 : vector<1x1x2x8x16xbf16> to vector<2x8x16xbf16>
    %60 = vector.shape_cast %59 : vector<2x8x16xbf16> to vector<16x16xbf16>
    %c6 = arith.constant 6 : index
    %c0_51 = arith.constant 0 : index
    %c0_52 = arith.constant 0 : index
    %61 = vector.load %arg3[%c6, %c0_51, %c0_52] : memref<9x16x32xbf16, #tpu.memory_space<vmem>>, vector<1x16x32xbf16>
    %62 = vector.shape_cast %61 : vector<1x16x32xbf16> to vector<16x32xbf16>
    %cst_53 = arith.constant dense<0.000000e+00> : vector<16x32xf32>
    %63 = tpu.matmul %60, %62, %cst_53 {dimension_numbers = #tpu.dot_dimension_numbers<[1], [0], [0], [1], [0, 0, 1, 1], [], []>} : vector<16x16xbf16>, vector<16x32xbf16>, vector<16x32xf32> -> vector<16x32xf32>
    %64 = arith.addf %55, %63 : vector<16x32xf32>
    %c1_i32_54 = arith.constant 1 : i32
    %65 = arith.addi %0, %c1_i32_54 : i32
    %c0_55 = arith.constant 0 : index
    %c1_56 = arith.constant 1 : index
    %66 = arith.index_cast %65 : i32 to index
    %c0_57 = arith.constant 0 : index
    %c0_58 = arith.constant 0 : index
    %67 = vector.load %arg2[%c0_55, %c1_56, %66, %c0_57, %c0_58] : memref<1x4x3x9x16xbf16, #tpu.memory_space<vmem>>, vector<1x1x2x8x16xbf16>
    %68 = vector.shape_cast %67 : vector<1x1x2x8x16xbf16> to vector<2x8x16xbf16>
    %69 = vector.shape_cast %68 : vector<2x8x16xbf16> to vector<16x16xbf16>
    %c7 = arith.constant 7 : index
    %c0_59 = arith.constant 0 : index
    %c0_60 = arith.constant 0 : index
    %70 = vector.load %arg3[%c7, %c0_59, %c0_60] : memref<9x16x32xbf16, #tpu.memory_space<vmem>>, vector<1x16x32xbf16>
    %71 = vector.shape_cast %70 : vector<1x16x32xbf16> to vector<16x32xbf16>
    %cst_61 = arith.constant dense<0.000000e+00> : vector<16x32xf32>
    %72 = tpu.matmul %69, %71, %cst_61 {dimension_numbers = #tpu.dot_dimension_numbers<[1], [0], [0], [1], [0, 0, 1, 1], [], []>} : vector<16x16xbf16>, vector<16x32xbf16>, vector<16x32xf32> -> vector<16x32xf32>
    %73 = arith.addf %64, %72 : vector<16x32xf32>
    %c1_i32_62 = arith.constant 1 : i32
    %74 = arith.addi %0, %c1_i32_62 : i32
    %c0_63 = arith.constant 0 : index
    %c0_64 = arith.constant 0 : index
    %75 = arith.index_cast %74 : i32 to index
    %c1_65 = arith.constant 1 : index
    %c0_66 = arith.constant 0 : index
    %76 = vector.load %arg2[%c0_63, %c0_64, %75, %c1_65, %c0_66] : memref<1x4x3x9x16xbf16, #tpu.memory_space<vmem>>, vector<1x1x2x8x16xbf16>
    %77 = vector.shape_cast %76 : vector<1x1x2x8x16xbf16> to vector<2x8x16xbf16>
    %78 = vector.shape_cast %77 : vector<2x8x16xbf16> to vector<16x16xbf16>
    %c8 = arith.constant 8 : index
    %c0_67 = arith.constant 0 : index
    %c0_68 = arith.constant 0 : index
    %79 = vector.load %arg3[%c8, %c0_67, %c0_68] : memref<9x16x32xbf16, #tpu.memory_space<vmem>>, vector<1x16x32xbf16>
    %80 = vector.shape_cast %79 : vector<1x16x32xbf16> to vector<16x32xbf16>
    %cst_69 = arith.constant dense<0.000000e+00> : vector<16x32xf32>
    %81 = tpu.matmul %78, %80, %cst_69 {dimension_numbers = #tpu.dot_dimension_numbers<[1], [0], [0], [1], [0, 0, 1, 1], [], []>} : vector<16x16xbf16>, vector<16x32xbf16>, vector<16x32xf32> -> vector<16x32xf32>
    %82 = arith.addf %73, %81 : vector<16x32xf32>
    %c0_70 = arith.constant 0 : index
    %c0_71 = arith.constant 0 : index
    %83 = vector.load %arg4[%c0_70, %c0_71] : memref<1x32xf32, #tpu.memory_space<vmem>>, vector<1x32xf32>
    %84 = vector.broadcast %83 : vector<1x32xf32> to vector<16x32xf32>
    %85 = arith.addf %82, %84 : vector<16x32xf32>
    %cst_72 = arith.constant 0.000000e+00 : f32
    %86 = vector.broadcast %cst_72 : f32 to vector<16x32xf32>
    %87 = arith.maximumf %85, %86 : vector<16x32xf32>
    %88 = vector.shape_cast %87 : vector<16x32xf32> to vector<1x2x8x32xf32>
    %c0_73 = arith.constant 0 : index
    %c0_74 = arith.constant 0 : index
    %c0_75 = arith.constant 0 : index
    %c0_76 = arith.constant 0 : index
    %89 = vector.load %arg5[%c0_73, %c0_74, %c0_75, %c0_76] : memref<1x2x8x32xf32, #tpu.memory_space<vmem>>, vector<1x2x8x32xf32>
    tpu.vector_store %arg5[%c0_73, %c0_74, %c0_75, %c0_76], %88 {strides = array<i32>} : memref<1x2x8x32xf32, #tpu.memory_space<vmem>>, vector<1x2x8x32xf32>,
    return
  }
  func.func @transform_0(%arg0: i32, %arg1: i32) -> (i32, i32, i32, i32, i32) {
    %c0_i32 = arith.constant 0 : i32
    %c0_i32_0 = arith.constant 0 : i32
    %c0_i32_1 = arith.constant 0 : i32
    %c0_i32_2 = arith.constant 0 : i32
    %c0_i32_3 = arith.constant 0 : i32
    return %arg0, %c0_i32, %c0_i32_0, %c0_i32_1, %c0_i32_2 : i32, i32, i32, i32, i32
  }
  func.func @transform_1(%arg0: i32, %arg1: i32) -> (i32, i32, i32) {
    %c0_i32 = arith.constant 0 : i32
    %c0_i32_0 = arith.constant 0 : i32
    %c0_i32_1 = arith.constant 0 : i32
    %c0_i32_2 = arith.constant 0 : i32
    return %c0_i32, %c0_i32_0, %c0_i32_1 : i32, i32, i32
  }
  func.func @transform_2(%arg0: i32, %arg1: i32) -> (i32, i32) {
    %c0_i32 = arith.constant 0 : i32
    %c0_i32_0 = arith.constant 0 : i32
    %c0_i32_1 = arith.constant 0 : i32
    return %c0_i32, %c0_i32_0 : i32, i32
  }
  func.func @transform_3(%arg0: i32, %arg1: i32) -> (i32, i32, i32, i32) {
    %c0_i32 = arith.constant 0 : i32
    %c0_i32_0 = arith.constant 0 : i32
    %c0_i32_1 = arith.constant 0 : i32
    return %arg0, %arg1, %c0_i32, %c0_i32_0 : i32, i32, i32, i32
  }
}

module attributes {stable_mosaic.version = 11 : i64} {
  func.func @_detector_kernel(%arg0: i32, %arg1: i32, %arg2: memref<1x1x10x10x56xbf16, #tpu.memory_space<vmem>>, %arg3: memref<9x56x128xbf16, #tpu.memory_space<vmem>>, %arg4: memref<1x128xf32, #tpu.memory_space<vmem>>, %arg5: memref<128x128xbf16, #tpu.memory_space<vmem>>, %arg6: memref<1x128xf32, #tpu.memory_space<vmem>>, %arg7: memref<1x8x8x128xf32, #tpu.memory_space<vmem>>) attributes {dimension_semantics = [#tpu.dimension_semantics<parallel>, #tpu.dimension_semantics<parallel>], iteration_bounds = array<i64: 2, 1>, scalar_prefetch = 0 : i64, scratch_operands = 0 : i64, tpu.core_type = #tpu.core_type<tc>, window_params = [{transform_indices = @transform_0, window_bounds = array<i64: 1, 1, 10, 10, 56>}, {pipeline_mode = #tpu.pipeline_mode<synchronous>, transform_indices = @transform_1, window_bounds = array<i64: 9, 56, 128>}, {pipeline_mode = #tpu.pipeline_mode<synchronous>, transform_indices = @transform_2, window_bounds = array<i64: 1, 128>}, {pipeline_mode = #tpu.pipeline_mode<synchronous>, transform_indices = @transform_3, window_bounds = array<i64: 128, 128>}, {pipeline_mode = #tpu.pipeline_mode<synchronous>, transform_indices = @transform_4, window_bounds = array<i64: 1, 128>}, {transform_indices = @transform_5, window_bounds = array<i64: 1, 8, 8, 128>}]} {
    %c8_i32 = arith.constant 8 : i32
    %0 = arith.muli %arg1, %c8_i32 : i32
    %cst = arith.constant 0.000000e+00 : f32
    %1 = vector.broadcast %cst : f32 to vector<64x128xf32>
    %c0_i32 = arith.constant 0 : i32
    %2 = arith.addi %0, %c0_i32 : i32
    %c0 = arith.constant 0 : index
    %c0_0 = arith.constant 0 : index
    %3 = arith.index_cast %2 : i32 to index
    %c0_1 = arith.constant 0 : index
    %c0_2 = arith.constant 0 : index
    %4 = vector.load %arg2[%c0, %c0_0, %3, %c0_1, %c0_2] : memref<1x1x10x10x56xbf16, #tpu.memory_space<vmem>>, vector<1x1x8x8x56xbf16>
    %5 = vector.shape_cast %4 : vector<1x1x8x8x56xbf16> to vector<8x8x56xbf16>
    %6 = vector.shape_cast %5 : vector<8x8x56xbf16> to vector<64x56xbf16>
    %c0_3 = arith.constant 0 : index
    %c0_4 = arith.constant 0 : index
    %c0_5 = arith.constant 0 : index
    %7 = vector.load %arg3[%c0_3, %c0_4, %c0_5] : memref<9x56x128xbf16, #tpu.memory_space<vmem>>, vector<1x56x128xbf16>
    %8 = vector.shape_cast %7 : vector<1x56x128xbf16> to vector<56x128xbf16>
    %cst_6 = arith.constant dense<0.000000e+00> : vector<64x128xf32>
    %9 = tpu.matmul %6, %8, %cst_6 {dimension_numbers = #tpu.dot_dimension_numbers<[1], [0], [0], [1], [0, 0, 1, 1], [], []>} : vector<64x56xbf16>, vector<56x128xbf16>, vector<64x128xf32> -> vector<64x128xf32>
    %10 = arith.addf %1, %9 : vector<64x128xf32>
    %c0_i32_7 = arith.constant 0 : i32
    %11 = arith.addi %0, %c0_i32_7 : i32
    %c0_8 = arith.constant 0 : index
    %c0_9 = arith.constant 0 : index
    %12 = arith.index_cast %11 : i32 to index
    %c1 = arith.constant 1 : index
    %c0_10 = arith.constant 0 : index
    %13 = vector.load %arg2[%c0_8, %c0_9, %12, %c1, %c0_10] : memref<1x1x10x10x56xbf16, #tpu.memory_space<vmem>>, vector<1x1x8x8x56xbf16>
    %14 = vector.shape_cast %13 : vector<1x1x8x8x56xbf16> to vector<8x8x56xbf16>
    %15 = vector.shape_cast %14 : vector<8x8x56xbf16> to vector<64x56xbf16>
    %c1_11 = arith.constant 1 : index
    %c0_12 = arith.constant 0 : index
    %c0_13 = arith.constant 0 : index
    %16 = vector.load %arg3[%c1_11, %c0_12, %c0_13] : memref<9x56x128xbf16, #tpu.memory_space<vmem>>, vector<1x56x128xbf16>
    %17 = vector.shape_cast %16 : vector<1x56x128xbf16> to vector<56x128xbf16>
    %cst_14 = arith.constant dense<0.000000e+00> : vector<64x128xf32>
    %18 = tpu.matmul %15, %17, %cst_14 {dimension_numbers = #tpu.dot_dimension_numbers<[1], [0], [0], [1], [0, 0, 1, 1], [], []>} : vector<64x56xbf16>, vector<56x128xbf16>, vector<64x128xf32> -> vector<64x128xf32>
    %19 = arith.addf %10, %18 : vector<64x128xf32>
    %c0_i32_15 = arith.constant 0 : i32
    %20 = arith.addi %0, %c0_i32_15 : i32
    %c0_16 = arith.constant 0 : index
    %c0_17 = arith.constant 0 : index
    %21 = arith.index_cast %20 : i32 to index
    %c2 = arith.constant 2 : index
    %c0_18 = arith.constant 0 : index
    %22 = vector.load %arg2[%c0_16, %c0_17, %21, %c2, %c0_18] : memref<1x1x10x10x56xbf16, #tpu.memory_space<vmem>>, vector<1x1x8x8x56xbf16>
    %23 = vector.shape_cast %22 : vector<1x1x8x8x56xbf16> to vector<8x8x56xbf16>
    %24 = vector.shape_cast %23 : vector<8x8x56xbf16> to vector<64x56xbf16>
    %c2_19 = arith.constant 2 : index
    %c0_20 = arith.constant 0 : index
    %c0_21 = arith.constant 0 : index
    %25 = vector.load %arg3[%c2_19, %c0_20, %c0_21] : memref<9x56x128xbf16, #tpu.memory_space<vmem>>, vector<1x56x128xbf16>
    %26 = vector.shape_cast %25 : vector<1x56x128xbf16> to vector<56x128xbf16>
    %cst_22 = arith.constant dense<0.000000e+00> : vector<64x128xf32>
    %27 = tpu.matmul %24, %26, %cst_22 {dimension_numbers = #tpu.dot_dimension_numbers<[1], [0], [0], [1], [0, 0, 1, 1], [], []>} : vector<64x56xbf16>, vector<56x128xbf16>, vector<64x128xf32> -> vector<64x128xf32>
    %28 = arith.addf %19, %27 : vector<64x128xf32>
    %c1_i32 = arith.constant 1 : i32
    %29 = arith.addi %0, %c1_i32 : i32
    %c0_23 = arith.constant 0 : index
    %c0_24 = arith.constant 0 : index
    %30 = arith.index_cast %29 : i32 to index
    %c0_25 = arith.constant 0 : index
    %c0_26 = arith.constant 0 : index
    %31 = vector.load %arg2[%c0_23, %c0_24, %30, %c0_25, %c0_26] : memref<1x1x10x10x56xbf16, #tpu.memory_space<vmem>>, vector<1x1x8x8x56xbf16>
    %32 = vector.shape_cast %31 : vector<1x1x8x8x56xbf16> to vector<8x8x56xbf16>
    %33 = vector.shape_cast %32 : vector<8x8x56xbf16> to vector<64x56xbf16>
    %c3 = arith.constant 3 : index
    %c0_27 = arith.constant 0 : index
    %c0_28 = arith.constant 0 : index
    %34 = vector.load %arg3[%c3, %c0_27, %c0_28] : memref<9x56x128xbf16, #tpu.memory_space<vmem>>, vector<1x56x128xbf16>
    %35 = vector.shape_cast %34 : vector<1x56x128xbf16> to vector<56x128xbf16>
    %cst_29 = arith.constant dense<0.000000e+00> : vector<64x128xf32>
    %36 = tpu.matmul %33, %35, %cst_29 {dimension_numbers = #tpu.dot_dimension_numbers<[1], [0], [0], [1], [0, 0, 1, 1], [], []>} : vector<64x56xbf16>, vector<56x128xbf16>, vector<64x128xf32> -> vector<64x128xf32>
    %37 = arith.addf %28, %36 : vector<64x128xf32>
    %c1_i32_30 = arith.constant 1 : i32
    %38 = arith.addi %0, %c1_i32_30 : i32
    %c0_31 = arith.constant 0 : index
    %c0_32 = arith.constant 0 : index
    %39 = arith.index_cast %38 : i32 to index
    %c1_33 = arith.constant 1 : index
    %c0_34 = arith.constant 0 : index
    %40 = vector.load %arg2[%c0_31, %c0_32, %39, %c1_33, %c0_34] : memref<1x1x10x10x56xbf16, #tpu.memory_space<vmem>>, vector<1x1x8x8x56xbf16>
    %41 = vector.shape_cast %40 : vector<1x1x8x8x56xbf16> to vector<8x8x56xbf16>
    %42 = vector.shape_cast %41 : vector<8x8x56xbf16> to vector<64x56xbf16>
    %c4 = arith.constant 4 : index
    %c0_35 = arith.constant 0 : index
    %c0_36 = arith.constant 0 : index
    %43 = vector.load %arg3[%c4, %c0_35, %c0_36] : memref<9x56x128xbf16, #tpu.memory_space<vmem>>, vector<1x56x128xbf16>
    %44 = vector.shape_cast %43 : vector<1x56x128xbf16> to vector<56x128xbf16>
    %cst_37 = arith.constant dense<0.000000e+00> : vector<64x128xf32>
    %45 = tpu.matmul %42, %44, %cst_37 {dimension_numbers = #tpu.dot_dimension_numbers<[1], [0], [0], [1], [0, 0, 1, 1], [], []>} : vector<64x56xbf16>, vector<56x128xbf16>, vector<64x128xf32> -> vector<64x128xf32>
    %46 = arith.addf %37, %45 : vector<64x128xf32>
    %c1_i32_38 = arith.constant 1 : i32
    %47 = arith.addi %0, %c1_i32_38 : i32
    %c0_39 = arith.constant 0 : index
    %c0_40 = arith.constant 0 : index
    %48 = arith.index_cast %47 : i32 to index
    %c2_41 = arith.constant 2 : index
    %c0_42 = arith.constant 0 : index
    %49 = vector.load %arg2[%c0_39, %c0_40, %48, %c2_41, %c0_42] : memref<1x1x10x10x56xbf16, #tpu.memory_space<vmem>>, vector<1x1x8x8x56xbf16>
    %50 = vector.shape_cast %49 : vector<1x1x8x8x56xbf16> to vector<8x8x56xbf16>
    %51 = vector.shape_cast %50 : vector<8x8x56xbf16> to vector<64x56xbf16>
    %c5 = arith.constant 5 : index
    %c0_43 = arith.constant 0 : index
    %c0_44 = arith.constant 0 : index
    %52 = vector.load %arg3[%c5, %c0_43, %c0_44] : memref<9x56x128xbf16, #tpu.memory_space<vmem>>, vector<1x56x128xbf16>
    %53 = vector.shape_cast %52 : vector<1x56x128xbf16> to vector<56x128xbf16>
    %cst_45 = arith.constant dense<0.000000e+00> : vector<64x128xf32>
    %54 = tpu.matmul %51, %53, %cst_45 {dimension_numbers = #tpu.dot_dimension_numbers<[1], [0], [0], [1], [0, 0, 1, 1], [], []>} : vector<64x56xbf16>, vector<56x128xbf16>, vector<64x128xf32> -> vector<64x128xf32>
    %55 = arith.addf %46, %54 : vector<64x128xf32>
    %c2_i32 = arith.constant 2 : i32
    %56 = arith.addi %0, %c2_i32 : i32
    %c0_46 = arith.constant 0 : index
    %c0_47 = arith.constant 0 : index
    %57 = arith.index_cast %56 : i32 to index
    %c0_48 = arith.constant 0 : index
    %c0_49 = arith.constant 0 : index
    %58 = vector.load %arg2[%c0_46, %c0_47, %57, %c0_48, %c0_49] : memref<1x1x10x10x56xbf16, #tpu.memory_space<vmem>>, vector<1x1x8x8x56xbf16>
    %59 = vector.shape_cast %58 : vector<1x1x8x8x56xbf16> to vector<8x8x56xbf16>
    %60 = vector.shape_cast %59 : vector<8x8x56xbf16> to vector<64x56xbf16>
    %c6 = arith.constant 6 : index
    %c0_50 = arith.constant 0 : index
    %c0_51 = arith.constant 0 : index
    %61 = vector.load %arg3[%c6, %c0_50, %c0_51] : memref<9x56x128xbf16, #tpu.memory_space<vmem>>, vector<1x56x128xbf16>
    %62 = vector.shape_cast %61 : vector<1x56x128xbf16> to vector<56x128xbf16>
    %cst_52 = arith.constant dense<0.000000e+00> : vector<64x128xf32>
    %63 = tpu.matmul %60, %62, %cst_52 {dimension_numbers = #tpu.dot_dimension_numbers<[1], [0], [0], [1], [0, 0, 1, 1], [], []>} : vector<64x56xbf16>, vector<56x128xbf16>, vector<64x128xf32> -> vector<64x128xf32>
    %64 = arith.addf %55, %63 : vector<64x128xf32>
    %c2_i32_53 = arith.constant 2 : i32
    %65 = arith.addi %0, %c2_i32_53 : i32
    %c0_54 = arith.constant 0 : index
    %c0_55 = arith.constant 0 : index
    %66 = arith.index_cast %65 : i32 to index
    %c1_56 = arith.constant 1 : index
    %c0_57 = arith.constant 0 : index
    %67 = vector.load %arg2[%c0_54, %c0_55, %66, %c1_56, %c0_57] : memref<1x1x10x10x56xbf16, #tpu.memory_space<vmem>>, vector<1x1x8x8x56xbf16>
    %68 = vector.shape_cast %67 : vector<1x1x8x8x56xbf16> to vector<8x8x56xbf16>
    %69 = vector.shape_cast %68 : vector<8x8x56xbf16> to vector<64x56xbf16>
    %c7 = arith.constant 7 : index
    %c0_58 = arith.constant 0 : index
    %c0_59 = arith.constant 0 : index
    %70 = vector.load %arg3[%c7, %c0_58, %c0_59] : memref<9x56x128xbf16, #tpu.memory_space<vmem>>, vector<1x56x128xbf16>
    %71 = vector.shape_cast %70 : vector<1x56x128xbf16> to vector<56x128xbf16>
    %cst_60 = arith.constant dense<0.000000e+00> : vector<64x128xf32>
    %72 = tpu.matmul %69, %71, %cst_60 {dimension_numbers = #tpu.dot_dimension_numbers<[1], [0], [0], [1], [0, 0, 1, 1], [], []>} : vector<64x56xbf16>, vector<56x128xbf16>, vector<64x128xf32> -> vector<64x128xf32>
    %73 = arith.addf %64, %72 : vector<64x128xf32>
    %c2_i32_61 = arith.constant 2 : i32
    %74 = arith.addi %0, %c2_i32_61 : i32
    %c0_62 = arith.constant 0 : index
    %c0_63 = arith.constant 0 : index
    %75 = arith.index_cast %74 : i32 to index
    %c2_64 = arith.constant 2 : index
    %c0_65 = arith.constant 0 : index
    %76 = vector.load %arg2[%c0_62, %c0_63, %75, %c2_64, %c0_65] : memref<1x1x10x10x56xbf16, #tpu.memory_space<vmem>>, vector<1x1x8x8x56xbf16>
    %77 = vector.shape_cast %76 : vector<1x1x8x8x56xbf16> to vector<8x8x56xbf16>
    %78 = vector.shape_cast %77 : vector<8x8x56xbf16> to vector<64x56xbf16>
    %c8 = arith.constant 8 : index
    %c0_66 = arith.constant 0 : index
    %c0_67 = arith.constant 0 : index
    %79 = vector.load %arg3[%c8, %c0_66, %c0_67] : memref<9x56x128xbf16, #tpu.memory_space<vmem>>, vector<1x56x128xbf16>
    %80 = vector.shape_cast %79 : vector<1x56x128xbf16> to vector<56x128xbf16>
    %cst_68 = arith.constant dense<0.000000e+00> : vector<64x128xf32>
    %81 = tpu.matmul %78, %80, %cst_68 {dimension_numbers = #tpu.dot_dimension_numbers<[1], [0], [0], [1], [0, 0, 1, 1], [], []>} : vector<64x56xbf16>, vector<56x128xbf16>, vector<64x128xf32> -> vector<64x128xf32>
    %82 = arith.addf %73, %81 : vector<64x128xf32>
    %c0_69 = arith.constant 0 : index
    %c0_70 = arith.constant 0 : index
    %83 = vector.load %arg4[%c0_69, %c0_70] : memref<1x128xf32, #tpu.memory_space<vmem>>, vector<1x128xf32>
    %84 = vector.broadcast %83 : vector<1x128xf32> to vector<64x128xf32>
    %85 = arith.addf %82, %84 : vector<64x128xf32>
    %cst_71 = arith.constant 0.000000e+00 : f32
    %86 = vector.broadcast %cst_71 : f32 to vector<64x128xf32>
    %87 = arith.maximumf %85, %86 : vector<64x128xf32>
    %88 = arith.truncf %87 : vector<64x128xf32> to vector<64x128xbf16>
    %c0_72 = arith.constant 0 : index
    %c0_73 = arith.constant 0 : index
    %89 = vector.load %arg5[%c0_72, %c0_73] : memref<128x128xbf16, #tpu.memory_space<vmem>>, vector<128x128xbf16>
    %cst_74 = arith.constant dense<0.000000e+00> : vector<64x128xf32>
    %90 = tpu.matmul %88, %89, %cst_74 {dimension_numbers = #tpu.dot_dimension_numbers<[1], [0], [0], [1], [0, 0, 1, 1], [], []>} : vector<64x128xbf16>, vector<128x128xbf16>, vector<64x128xf32> -> vector<64x128xf32>
    %c0_75 = arith.constant 0 : index
    %c0_76 = arith.constant 0 : index
    %91 = vector.load %arg6[%c0_75, %c0_76] : memref<1x128xf32, #tpu.memory_space<vmem>>, vector<1x128xf32>
    %92 = vector.broadcast %91 : vector<1x128xf32> to vector<64x128xf32>
    %93 = arith.addf %90, %92 : vector<64x128xf32>
    %cst_77 = arith.constant 0.000000e+00 : f32
    %94 = vector.broadcast %cst_77 : f32 to vector<64x128xf32>
    %95 = arith.subf %94, %93 : vector<64x128xf32>
    %96 = math.exp %95 : vector<64x128xf32>
    %cst_78 = arith.constant 1.000000e+00 : f32
    %97 = vector.broadcast %cst_78 : f32 to vector<64x128xf32>
    %98 = arith.addf %97, %96 : vector<64x128xf32>
    %cst_79 = arith.constant 1.000000e+00 : f32
    %99 = vector.broadcast %cst_79 : f32 to vector<64x128xf32>
    %100 = arith.divf %99, %98 : vector<64x128xf32>
    %101 = tpu.iota {dimensions = array<i32: 1>} : vector<64x128xi32>
    %c8_i32_80 = arith.constant 8 : i32
    %102 = vector.broadcast %c8_i32_80 : i32 to vector<64x128xi32>
    %103 = arith.cmpi slt, %101, %102 : vector<64x128xi32>
    %104 = arith.select %103, %87, %100 : vector<64x128xi1>, vector<64x128xf32>
    %105 = vector.shape_cast %104 : vector<64x128xf32> to vector<1x8x8x128xf32>
    %c0_81 = arith.constant 0 : index
    %c0_82 = arith.constant 0 : index
    %c0_83 = arith.constant 0 : index
    %c0_84 = arith.constant 0 : index
    %106 = vector.load %arg7[%c0_81, %c0_82, %c0_83, %c0_84] : memref<1x8x8x128xf32, #tpu.memory_space<vmem>>, vector<1x8x8x128xf32>
    tpu.vector_store %arg7[%c0_81, %c0_82, %c0_83, %c0_84], %105 {strides = array<i32>} : memref<1x8x8x128xf32, #tpu.memory_space<vmem>>, vector<1x8x8x128xf32>,
    return
  }
  func.func @transform_0(%arg0: i32, %arg1: i32) -> (i32, i32, i32, i32, i32) {
    %c0_i32 = arith.constant 0 : i32
    %c0_i32_0 = arith.constant 0 : i32
    %c0_i32_1 = arith.constant 0 : i32
    %c0_i32_2 = arith.constant 0 : i32
    %c0_i32_3 = arith.constant 0 : i32
    return %arg0, %c0_i32, %c0_i32_0, %c0_i32_1, %c0_i32_2 : i32, i32, i32, i32, i32
  }
  func.func @transform_1(%arg0: i32, %arg1: i32) -> (i32, i32, i32) {
    %c0_i32 = arith.constant 0 : i32
    %c0_i32_0 = arith.constant 0 : i32
    %c0_i32_1 = arith.constant 0 : i32
    %c0_i32_2 = arith.constant 0 : i32
    return %c0_i32, %c0_i32_0, %c0_i32_1 : i32, i32, i32
  }
  func.func @transform_2(%arg0: i32, %arg1: i32) -> (i32, i32) {
    %c0_i32 = arith.constant 0 : i32
    %c0_i32_0 = arith.constant 0 : i32
    %c0_i32_1 = arith.constant 0 : i32
    return %c0_i32, %c0_i32_0 : i32, i32
  }
  func.func @transform_3(%arg0: i32, %arg1: i32) -> (i32, i32) {
    %c0_i32 = arith.constant 0 : i32
    %c0_i32_0 = arith.constant 0 : i32
    %c0_i32_1 = arith.constant 0 : i32
    return %c0_i32, %c0_i32_0 : i32, i32
  }
  func.func @transform_4(%arg0: i32, %arg1: i32) -> (i32, i32) {
    %c0_i32 = arith.constant 0 : i32
    %c0_i32_0 = arith.constant 0 : i32
    %c0_i32_1 = arith.constant 0 : i32
    return %c0_i32, %c0_i32_0 : i32, i32
  }
  func.func @transform_5(%arg0: i32, %arg1: i32) -> (i32, i32, i32, i32) {
    %c0_i32 = arith.constant 0 : i32
    %c0_i32_0 = arith.constant 0 : i32
    %c0_i32_1 = arith.constant 0 : i32
    return %arg0, %arg1, %c0_i32, %c0_i32_0 : i32, i32, i32, i32
  }
}

</mosaic_0001>

<llo_original>
// kernel: a_call__.5
$region0: #{a_call__.5}
  #allocation0 [shape = 'u32[]', space=smem, size = 0x4, offset = 0x4, fixed_abs, tag = 'smem constant byte address 0x4 - core index']
  #allocation1 [shape = 'u32[144,128]{1,0:T(1,128)}', space=vmem, size = 0x12000, scoped, tag = 'internal scratch']
  %s0 = inlined_call_operand.vmem [shape: bf16[2,4,5,9,8], index: 0, kind: input, shape index: {}]
  %s1 = inlined_call_operand.vmem [shape: bf16[9,8,16], index: 1, kind: input, shape index: {}]
  %s2 = inlined_call_operand.vmem [shape: f32[1,16], index: 2, kind: input, shape index: {}]
  %s3 = inlined_call_operand.vmem [shape: f32[2,4,8,16], index: 3, kind: output, shape index: {}]
  %s4 = sld [smem:[#allocation0]]
  $region45: #{a_call__.5} parent=0
    _
  %s6 = ssub.s32 1, %s4
  %s7 = scalar_select 0, %s6, %s4
  loop: start=0, step=1, limit=4
  $region2: #{a_call__.5} parent=0 // loop_pre_header
    _
  $region3: #{a_call__.5} parent=0 // loop_header
    %s9 = sphi 0, %s13
    %p10 = scmp.ge.s32.totalorder %s9, 4
    %s16 = sphi 0, %s28
    %s17 = sphi 0, %s24
    %s18 = sphi 0, %s16
    %s19 = sphi 0, %s17
    %s20 = sphi 0, %s18
    %s21 = sphi 0, %s19
    %s31 = sphi 0, %s33
    %s34 = sphi 0, %s31
    %s35 = sphi 0, %s34
    %s51 = sphi 0, %s35
    %s55 = sphi 0, %s55
    %s57 = sphi 0, %s55
    %s58 = sphi 0, %s57
    %s72 = sphi 0, %s58
    %s76 = sphi 0, %s76
    %s78 = sphi 0, %s76
    %s79 = sphi 0, %s78
    %s93 = sphi 0, %s79
    %s101 = sphi 0, %s103
    %s104 = sphi 0, %s101
    %s105 = sphi 0, %s104
    %s121 = sphi 0, %s105
  $region4: #{a_call__.5} parent=0 // loop_header_branch
    %12 = sbr.rel (%p10) target = $region8
  $region5: #{a_call__.5} parent=0 // loop_body
    %s14 = ssub.s32 %s9, 1
    %s15 = ssub.s32 %s9, 2
    %s22 = sadd.s32 1, %s17
    %p23 = scmp.ge.s32.totalorder %s22, 1
    %s24 = scalar_select %p23, 0, %s22
    %s25 = sadd.s32 1, %s16
    %s26 = scalar_select %p23, %s25, %s16
    %p27 = scmp.ge.s32.totalorder %s26, 2
    %s28 = scalar_select %p27, 0, %s26
    %s29 = ssub.s32 %s16, %s28
    %p30 = scmp.eq.s32.totalorder %s29, 0
    %s32 = sadd.s32 %s31, 1
    %s33 = scalar_select %p30, %s31, %s32
    %p36 = pneg %p30
    %p37 = scmp.eq.s32.totalorder %s9, 1
    %p38 = por %p36, %p37
    %p39 = scmp.ne.s32.totalorder %s31, %s34
    %p40 = scmp.eq.s32.totalorder %s9, 0
    %p41 = por %p39, %p40
    %p42 = scmp.ne.s32.totalorder %s31, %s34
    %p43 = scmp.eq.s32.totalorder %s14, 1
    %p44 = por %p42, %p43
    %p45 = scmp.ne.s32.totalorder %s34, %s35
    %p46 = scmp.eq.s32.totalorder %s14, 0
    %p47 = por %p45, %p46
    %p48 = scmp.ne.s32.totalorder %s34, %s35
    %p49 = scmp.eq.s32.totalorder %s15, 1
    %p50 = por %p48, %p49
    %p52 = scmp.ne.s32.totalorder %s35, %s51
    %p53 = scmp.eq.s32.totalorder %s15, 0
    %p54 = por %p52, %p53
    %s56 = sadd.s32 %s55, 1
    %p59 = scmp.eq.s32.totalorder %s9, 1
    %p60 = scmp.ne.s32.totalorder %s55, %s57
    %p61 = scmp.eq.s32.totalorder %s9, 0
    %p62 = por %p60, %p61
    %p63 = scmp.ne.s32.totalorder %s55, %s57
    %p64 = scmp.eq.s32.totalorder %s14, 1
    %p65 = por %p63, %p64
    %p66 = scmp.ne.s32.totalorder %s57, %s58
    %p67 = scmp.eq.s32.totalorder %s14, 0
    %p68 = por %p66, %p67
    %p69 = scmp.ne.s32.totalorder %s57, %s58
    %p70 = scmp.eq.s32.totalorder %s15, 1
    %p71 = por %p69, %p70
    %p73 = scmp.ne.s32.totalorder %s58, %s72
    %p74 = scmp.eq.s32.totalorder %s15, 0
    %p75 = por %p73, %p74
    %s77 = sadd.s32 %s76, 1
    %p80 = scmp.eq.s32.totalorder %s9, 1
    %p81 = scmp.ne.s32.totalorder %s76, %s78
    %p82 = scmp.eq.s32.totalorder %s9, 0
    %p83 = por %p81, %p82
    %p84 = scmp.ne.s32.totalorder %s76, %s78
    %p85 = scmp.eq.s32.totalorder %s14, 1
    %p86 = por %p84, %p85
    %p87 = scmp.ne.s32.totalorder %s78, %s79
    %p88 = scmp.eq.s32.totalorder %s14, 0
    %p89 = por %p87, %p88
    %p90 = scmp.ne.s32.totalorder %s78, %s79
    %p91 = scmp.eq.s32.totalorder %s15, 1
    %p92 = por %p90, %p91
    %p94 = scmp.ne.s32.totalorder %s79, %s93
    %p95 = scmp.eq.s32.totalorder %s15, 0
    %p96 = por %p94, %p95
    %s97 = ssub.s32 %s16, %s28
    %s98 = ssub.s32 %s17, %s24
    %s99 = sor.u32 %s97, %s98
    %p100 = scmp.eq.s32.totalorder %s99, 0
    %s102 = sadd.s32 %s101, 1
    %s103 = scalar_select %p100, %s101, %s102
    %p106 = pneg %p100
    %p107 = scmp.eq.s32.totalorder %s9, 1
    %p108 = por %p106, %p107
    %p109 = scmp.ne.s32.totalorder %s101, %s104
    %p110 = scmp.eq.s32.totalorder %s9, 0
    %p111 = por %p109, %p110
    %p112 = scmp.ne.s32.totalorder %s101, %s104
    %p113 = scmp.eq.s32.totalorder %s14, 1
    %p114 = por %p112, %p113
    %p115 = scmp.ne.s32.totalorder %s104, %s105
    %p116 = scmp.eq.s32.totalorder %s14, 0
    %p117 = por %p115, %p116
    %p118 = scmp.ne.s32.totalorder %s104, %s105
    %p119 = scmp.eq.s32.totalorder %s15, 1
    %p120 = por %p118, %p119
    %p122 = scmp.ne.s32.totalorder %s105, %s121
    %p123 = scmp.eq.s32.totalorder %s15, 0
    %p124 = por %p122, %p123
    %p125 = scmp.le.s32.totalorder 1, %s9
    %p126 = scmp.lt.s32.totalorder %s9, 3
    %p127 = pnand %p125, %p126
    %p128 = pneg %p127
    // Predicated region
    $region9: #{a_call__.5} parent=5 // pred_check
      _
    $region10: #{a_call__.5} parent=5 // pred_check_branch
      %130 = sbr.rel (%p127) target = $region12
    $region11: #{a_call__.5} parent=5 // pred_region
      %s131 = ssub.s32 %s9, 1
      // Predicated region
      $region13: #{a_call__.5} parent=11 // pred_check
        %p132 = pneg %p68
      $region14: #{a_call__.5} parent=11 // pred_check_branch
        %134 = sbr.rel (%p132) target = $region16
      $region15: #{a_call__.5} parent=11 // pred_region
        _
      $region16: #{a_call__.5} parent=11 // pred_fallthru
        _
      // Predicated region
      $region17: #{a_call__.5} parent=11 // pred_check
        %p135 = pneg %p89
      $region18: #{a_call__.5} parent=11 // pred_check_branch
        %137 = sbr.rel (%p135) target = $region20
      $region19: #{a_call__.5} parent=11 // pred_region
        _
      $region20: #{a_call__.5} parent=11 // pred_fallthru
        _
    $region12: #{a_call__.5} parent=5 // pred_fallthru
      _
    %p138 = scmp.lt.s32.totalorder %s9, 2
    // Predicated region
    $region21: #{a_call__.5} parent=5 // pred_check
      %p139 = pneg %p138
    $region22: #{a_call__.5} parent=5 // pred_check_branch
      %141 = sbr.rel (%p139) target = $region24
    $region23: #{a_call__.5} parent=5 // pred_region
      // Predicated region
      $region25: #{a_call__.5} parent=23 // pred_check
        %p142 = pneg %p41
      $region26: #{a_call__.5} parent=23 // pred_check_branch
        %144 = sbr.rel (%p142) target = $region28
      $region27: #{a_call__.5} parent=23 // pred_region
        %p145 = scmp.lt.s32.totalorder %s16, 1
        %s146 = scalar_select %p145, %s16, 1
        %s147 = smul.addr %s146, 40
        %s148 = smul.addr %s147, 4
        %s149 = scalar_lea.vmem %s0, %s148
      $region28: #{a_call__.5} parent=23 // pred_fallthru
        _
    $region24: #{a_call__.5} parent=5 // pred_fallthru
      _
    %p150 = scmp.le.s32.totalorder 1, %s9
    %p151 = scmp.lt.s32.totalorder %s9, 3
    %p152 = pnand %p150, %p151
    %p153 = pneg %p152
    // Predicated region
    $region29: #{a_call__.5} parent=5 // pred_check
      _
    $region30: #{a_call__.5} parent=5 // pred_check_branch
      %155 = sbr.rel (%p152) target = $region32
    $region31: #{a_call__.5} parent=5 // pred_region
      %s156 = ssub.s32 %s9, 1
      %p157 = scmp.lt.s32.totalorder %s18, 1
      %s158 = scalar_select %p157, %s18, 1
      %s159 = smul.addr %s158, 40
      %s160 = smul.addr %s159, 4
      %s161 = scalar_lea.vmem %s0, %s160
      %p162 = pneg %p47
      %p163 = pneg %p44
      %p164 = pneg %p68
      %p165 = pneg %p65
      %p166 = pneg %p89
      %p167 = pneg %p86
      %p168 = pneg %p117
      %p169 = pneg %p114
      %s170 = smul.u32 4, %s19
      %p171 = scmp.lt.s32.totalorder %s18, 1
      %s172 = scalar_select %p171, %s18, 1
      %p173 = scmp.lt.s32.totalorder %s170, 3
      %s174 = scalar_select %p173, %s170, 3
      %s175 = smul.addr %s172, 4
      %s176 = sadd.s32 %s174, %s175
      %s177 = smul.addr %s176, 8
      %s178 = scalar_lea.vmem %s3, %s177
      %p179 = scmp.lt.s32.totalorder %s18, 1
      %s180 = scalar_select %p179, %s18, 1
      %s181 = smul.addr %s180, 40
      %s182 = smul.addr %s181, 4
      %s183 = scalar_lea.vmem %s0, %s182
      %s184 = smul.u32 4, %s19
      %p185 = scmp.lt.s32.totalorder %s18, 1
      %s186 = scalar_select %p185, %s18, 1
      %p187 = scmp.lt.s32.totalorder %s184, 3
      %s188 = scalar_select %p187, %s184, 3
      %s189 = smul.addr %s186, 4
      %s190 = sadd.s32 %s188, %s189
      %s191 = smul.addr %s190, 8
      %s192 = scalar_lea.vmem %s3, %s191
      %s193 = smul.u32 4, %s19
      %s195 = smul.u32 %s19, 4
      %s196 = smul.u32 %s195, 2
      %s197 = smul.addr %s196, 4
      %s198 = scalar_lea.vmem %s183, %s197
      %v199 = vld [vmem:[%s198] sm:$0xf]
      %v200 = vld [vmem:[%s198 + $0x8] sm:$0xf]
      %v201 = vld [vmem:[%s198 + $0x10] sm:$0xf]
      %v202 = vld [vmem:[%s198 + $0x18] sm:$0xf]
      %v203 = vld [vmem:[%s1] sm:$0xf]
      %s204 = sadd.s32 %s196, 10
      %s205 = smul.addr %s204, 4
      %s206 = scalar_lea.vmem %s183, %s205
      %v207 = vld [vmem:[%s206] sm:$0xf]
      %v208 = vld [vmem:[%s206 + $0x8] sm:$0xf]
      %v209 = vld [vmem:[%s206 + $0x10] sm:$0xf]
      %v210 = vld [vmem:[%s206 + $0x18] sm:$0xf]
      %s211 = scalar_lea.vmem %s1, 4
      %v212 = vld [vmem:[%s211] sm:$0xf]
      %v217 = vunpack.c.l.b16 %v207
      %v218 = vunpack.c.l.b16 %v208
      %v219 = vunpack.c.l.b16 %v209
      %v220 = vunpack.c.l.b16 %v210
      %v221 = vpack.c.b16 %v218, %v217
      %v222 = vpack.c.b16 %v220, %v219
      %vm223 = vcmask 64512
      %v225 = vsel %vm223, %v221, 0
      %v228 = vsel %vm223, %v222, 0
      %vm230 = vcmask 1043456
      %v232 = vsel %vm230, %v212, 0
      %234 = vmatprep.subr.bf16.mxu0 0
      %235 = vmatpush1.bf16.msra.mxu0 0
      %236 = vmatprep.subr.bf16.mxu0 0
      %237 = vmatpush1.bf16.msra.mxu0 0
      %238 = vmatprep.subr.bf16.mxu0 0
      %239 = vmatpush1.bf16.msra.mxu0 0
      %240 = vmatprep.subr.bf16.mxu0 0
      %241 = vmatpush1.bf16.msra.mxu0 0
      %242 = vmatprep.subr.bf16.mxu0 0
      %243 = vmatpush1.bf16.msra.mxu0 0
      %244 = vmatprep.subr.bf16.mxu0 0
      %245 = vmatpush1.bf16.msra.mxu0 0
      %246 = vmatprep.subr.bf16.mxu0 0
      %247 = vmatpush1.bf16.msra.mxu0 0
      %248 = vmatprep.subr.bf16.mxu0 0
      %249 = vmatpush1.bf16.msra.mxu0 %v232
      %250 = vmatprep.subr.bf16.mxu0 0
      %251 = vmatpush2.bf16.msra.mxu0 0
      %252 = vmatprep.subr.bf16.mxu0 0
      %253 = vmatpush2.bf16.msra.mxu0 0
      %254 = vmatprep.subr.bf16.mxu0 0
      %255 = vmatpush2.bf16.msra.mxu0 0
      %256 = vmatprep.subr.bf16.mxu0 0
      %257 = vmatpush2.bf16.msra.mxu0 0
      %258 = vmatprep.subr.bf16.mxu0 0
      %259 = vmatpush2.bf16.msra.mxu0 0
      %260 = vmatprep.subr.bf16.mxu0 0
      %261 = vmatpush2.bf16.msra.mxu0 0
      %262 = vmatprep.subr.bf16.mxu0 0
      %263 = vmatpush2.bf16.msra.mxu0 0
      %264 = vmatprep.subr.bf16.mxu0 0
      %265 = vmatpush2.bf16.msra.mxu0 0
      %266 = vmatprep.mubr.bf16.mxu0 0
      %267 = vmatmul.mubr.bf16.gmra.mxu0 %v225
      %v268 = vpop.f32.mrf.mxu0
      %v269 = vadd.f32 0.0, %v268
      %v270 = vpop.f32.mrf.mxu0
      %v271 = vpop.f32.mrf.mxu0
      %v272 = vadd.f32 0.0, %v271
      %v273 = vpop.f32.mrf.mxu0
      %274 = vmatprep.mubr.bf16.mxu0 0
      %275 = vmatmul.mubr.bf16.gmra.mxu0 %v228
      %v276 = vpop.f32.mrf.mxu0
      %v277 = vadd.f32 0.0, %v276
      %v278 = vpop.f32.mrf.mxu0
      %v279 = vpop.f32.mrf.mxu0
      %v280 = vadd.f32 0.0, %v279
      %v281 = vpop.f32.mrf.mxu0
      %282 = vdwg.mxu0
      %v287 = vunpack.c.l.b16 %v199
      %v288 = vunpack.c.l.b16 %v200
      %v289 = vunpack.c.l.b16 %v201
      %v290 = vunpack.c.l.b16 %v202
      %v291 = vpack.c.b16 %v288, %v287
      %v292 = vpack.c.b16 %v290, %v289
      %v294 = vsel %vm223, %v291, 0
      %v297 = vsel %vm223, %v292, 0
      %v300 = vsel %vm230, %v203, 0
      %302 = vmatprep.subr.bf16.mxu0 0
      %303 = vmatpush1.bf16.msra.mxu0 0
      %304 = vmatprep.subr.bf16.mxu0 0
      %305 = vmatpush1.bf16.msra.mxu0 0
      %306 = vmatprep.subr.bf16.mxu0 0
      %307 = vmatpush1.bf16.msra.mxu0 0
      %308 = vmatprep.subr.bf16.mxu0 0
      %309 = vmatpush1.bf16.msra.mxu0 0
      %310 = vmatprep.subr.bf16.mxu0 0
      %311 = vmatpush1.bf16.msra.mxu0 0
      %312 = vmatprep.subr.bf16.mxu0 0
      %313 = vmatpush1.bf16.msra.mxu0 0
      %314 = vmatprep.subr.bf16.mxu0 0
      %315 = vmatpush1.bf16.msra.mxu0 0
      %316 = vmatprep.subr.bf16.mxu0 0
      %317 = vmatpush1.bf16.msra.mxu0 %v300
      %318 = vmatprep.subr.bf16.mxu0 0
      %319 = vmatpush2.bf16.msra.mxu0 0
      %320 = vmatprep.subr.bf16.mxu0 0
      %321 = vmatpush2.bf16.msra.mxu0 0
      %322 = vmatprep.subr.bf16.mxu0 0
      %323 = vmatpush2.bf16.msra.mxu0 0
      %324 = vmatprep.subr.bf16.mxu0 0
      %325 = vmatpush2.bf16.msra.mxu0 0
      %326 = vmatprep.subr.bf16.mxu0 0
      %327 = vmatpush2.bf16.msra.mxu0 0
      %328 = vmatprep.subr.bf16.mxu0 0
      %329 = vmatpush2.bf16.msra.mxu0 0
      %330 = vmatprep.subr.bf16.mxu0 0
      %331 = vmatpush2.bf16.msra.mxu0 0
      %332 = vmatprep.subr.bf16.mxu0 0
      %333 = vmatpush2.bf16.msra.mxu0 0
      %334 = vmatprep.mubr.bf16.mxu0 0
      %335 = vmatmul.mubr.bf16.gmra.mxu0 %v294
      %v336 = vpop.f32.mrf.mxu0
      %v337 = vadd.f32 %v269, %v336
      %v338 = vpop.f32.mrf.mxu0
      %v339 = vpop.f32.mrf.mxu0
      %v340 = vadd.f32 %v272, %v339
      %v341 = vpop.f32.mrf.mxu0
      %342 = vmatprep.mubr.bf16.mxu0 0
      %343 = vmatmul.mubr.bf16.gmra.mxu0 %v297
      %v344 = vpop.f32.mrf.mxu0
      %v345 = vadd.f32 %v277, %v344
      %v346 = vpop.f32.mrf.mxu0
      %v347 = vpop.f32.mrf.mxu0
      %v348 = vadd.f32 %v280, %v347
      %v349 = vpop.f32.mrf.mxu0
      %350 = vdwg.mxu0
      %v351 = vld [vmem:[%s198] sm:$0xf]
      %v352 = vld [vmem:[%s198 + $0x4] sm:$0x1]
      %v353 = vld [vmem:[%s198 + $0x8] sm:$0xf]
      %v354 = vld [vmem:[%s198 + $0xc] sm:$0x1]
      %v355 = vld [vmem:[%s198 + $0x10] sm:$0xf]
      %v356 = vld [vmem:[%s198 + $0x14] sm:$0x1]
      %v357 = vld [vmem:[%s198 + $0x18] sm:$0xf]
      %v358 = vld [vmem:[%s198 + $0x1c] sm:$0x1]
      %vm359 = vsmask.f32 3328
      %vm360 = vsmask.f32 7440
      %vm361 = vmor %vm359, %vm360
      %v363 = vshrl.u32 %v351, 16
      %v365 = vrot.slane %v363, 4
      %v366 = vshll.u32 %v351, 16
      %v368 = vrot.slane %v366, 5
      %v369 = vor.u32 %v365, %v368
      %v370 = vrot.slane %v369, 4
      %v372 = vshll.u32 %v352, 16
      %v374 = vrot.slane %v372, 5
      %v375 = vsel %vm361, %v370, %v374
      %v377 = vshrl.u32 %v353, 16
      %v379 = vrot.slane %v377, 4
      %v380 = vshll.u32 %v353, 16
      %v382 = vrot.slane %v380, 5
      %v383 = vor.u32 %v379, %v382
      %v384 = vrot.slane %v383, 4
      %v386 = vshll.u32 %v354, 16
      %v388 = vrot.slane %v386, 5
      %v389 = vsel %vm361, %v384, %v388
      %v391 = vshrl.u32 %v355, 16
      %v393 = vrot.slane %v391, 4
      %v394 = vshll.u32 %v355, 16
      %v396 = vrot.slane %v394, 5
      %v397 = vor.u32 %v393, %v396
      %v398 = vrot.slane %v397, 4
      %v400 = vshll.u32 %v356, 16
      %v402 = vrot.slane %v400, 5
      %v403 = vsel %vm361, %v398, %v402
      %v405 = vshrl.u32 %v357, 16
      %v407 = vrot.slane %v405, 4
      %v408 = vshll.u32 %v357, 16
      %v410 = vrot.slane %v408, 5
      %v411 = vor.u32 %v407, %v410
      %v412 = vrot.slane %v411, 4
      %v414 = vshll.u32 %v358, 16
      %v416 = vrot.slane %v414, 5
      %v417 = vsel %vm361, %v412, %v416
      %s418 = scalar_lea.vmem %s1, 8
      %v419 = vld [vmem:[%s418] sm:$0xf]
      %v420 = vunpack.c.l.b16 %v375
      %v421 = vunpack.c.l.b16 %v389
      %v422 = vunpack.c.l.b16 %v403
      %v423 = vunpack.c.l.b16 %v417
      %v424 = vpack.c.b16 %v421, %v420
      %v425 = vpack.c.b16 %v423, %v422
      %v427 = vsel %vm223, %v424, 0
      %v430 = vsel %vm223, %v425, 0
      %v433 = vsel %vm230, %v419, 0
      %435 = vmatprep.subr.bf16.mxu0 0
      %436 = vmatpush1.bf16.msra.mxu0 0
      %437 = vmatprep.subr.bf16.mxu0 0
      %438 = vmatpush1.bf16.msra.mxu0 0
      %439 = vmatprep.subr.bf16.mxu0 0
      %440 = vmatpush1.bf16.msra.mxu0 0
      %441 = vmatprep.subr.bf16.mxu0 0
      %442 = vmatpush1.bf16.msra.mxu0 0
      %443 = vmatprep.subr.bf16.mxu0 0
      %444 = vmatpush1.bf16.msra.mxu0 0
      %445 = vmatprep.subr.bf16.mxu0 0
      %446 = vmatpush1.bf16.msra.mxu0 0
      %447 = vmatprep.subr.bf16.mxu0 0
      %448 = vmatpush1.bf16.msra.mxu0 0
      %449 = vmatprep.subr.bf16.mxu0 0
      %450 = vmatpush1.bf16.msra.mxu0 %v433
      %451 = vmatprep.subr.bf16.mxu0 0
      %452 = vmatpush2.bf16.msra.mxu0 0
      %453 = vmatprep.subr.bf16.mxu0 0
      %454 = vmatpush2.bf16.msra.mxu0 0
      %455 = vmatprep.subr.bf16.mxu0 0
      %456 = vmatpush2.bf16.msra.mxu0 0
      %457 = vmatprep.subr.bf16.mxu0 0
      %458 = vmatpush2.bf16.msra.mxu0 0
      %459 = vmatprep.subr.bf16.mxu0 0
      %460 = vmatpush2.bf16.msra.mxu0 0
      %461 = vmatprep.subr.bf16.mxu0 0
      %462 = vmatpush2.bf16.msra.mxu0 0
      %463 = vmatprep.subr.bf16.mxu0 0
      %464 = vmatpush2.bf16.msra.mxu0 0
      %465 = vmatprep.subr.bf16.mxu0 0
      %466 = vmatpush2.bf16.msra.mxu0 0
      %467 = vmatprep.mubr.bf16.mxu0 0
      %468 = vmatmul.mubr.bf16.gmra.mxu0 %v427
      %v469 = vpop.f32.mrf.mxu0
      %v470 = vadd.f32 0.0, %v469
      %v471 = vpop.f32.mrf.mxu0
      %v472 = vpop.f32.mrf.mxu0
      %v473 = vadd.f32 0.0, %v472
      %v474 = vpop.f32.mrf.mxu0
      %475 = vmatprep.mubr.bf16.mxu0 0
      %476 = vmatmul.mubr.bf16.gmra.mxu0 %v430
      %v477 = vpop.f32.mrf.mxu0
      %v478 = vadd.f32 0.0, %v477
      %v479 = vpop.f32.mrf.mxu0
      %v480 = vpop.f32.mrf.mxu0
      %v481 = vadd.f32 0.0, %v480
      %v482 = vpop.f32.mrf.mxu0
      %483 = vdwg.mxu0
      %v484 = vadd.f32 %v337, %v470
      %v485 = vadd.f32 %v340, %v473
      %v486 = vadd.f32 %v345, %v478
      %v487 = vadd.f32 %v348, %v481
      %s488 = sadd.s32 %s196, 20
      %s489 = smul.addr %s488, 4
      %s490 = scalar_lea.vmem %s183, %s489
      %v491 = vld [vmem:[%s490] sm:$0xf]
      %v492 = vld [vmem:[%s490 + $0x8] sm:$0xf]
      %v493 = vld [vmem:[%s490 + $0x10] sm:$0xf]
      %v494 = vld [vmem:[%s490 + $0x18] sm:$0xf]
      %s495 = scalar_lea.vmem %s1, 12
      %v496 = vld [vmem:[%s495] sm:$0xf]
      %v501 = vunpack.c.l.b16 %v491
      %v502 = vunpack.c.l.b16 %v492
      %v503 = vunpack.c.l.b16 %v493
      %v504 = vunpack.c.l.b16 %v494
      %v505 = vpack.c.b16 %v502, %v501
      %v506 = vpack.c.b16 %v504, %v503
      %v508 = vsel %vm223, %v505, 0
      %v511 = vsel %vm223, %v506, 0
      %v514 = vsel %vm230, %v496, 0
      %516 = vmatprep.subr.bf16.mxu0 0
      %517 = vmatpush1.bf16.msra.mxu0 0
      %518 = vmatprep.subr.bf16.mxu0 0
      %519 = vmatpush1.bf16.msra.mxu0 0
      %520 = vmatprep.subr.bf16.mxu0 0
      %521 = vmatpush1.bf16.msra.mxu0 0
      %522 = vmatprep.subr.bf16.mxu0 0
      %523 = vmatpush1.bf16.msra.mxu0 0
      %524 = vmatprep.subr.bf16.mxu0 0
      %525 = vmatpush1.bf16.msra.mxu0 0
      %526 = vmatprep.subr.bf16.mxu0 0
      %527 = vmatpush1.bf16.msra.mxu0 0
      %528 = vmatprep.subr.bf16.mxu0 0
      %529 = vmatpush1.bf16.msra.mxu0 0
      %530 = vmatprep.subr.bf16.mxu0 0
      %531 = vmatpush1.bf16.msra.mxu0 %v514
      %532 = vmatprep.subr.bf16.mxu0 0
      %533 = vmatpush2.bf16.msra.mxu0 0
      %534 = vmatprep.subr.bf16.mxu0 0
      %535 = vmatpush2.bf16.msra.mxu0 0
      %536 = vmatprep.subr.bf16.mxu0 0
      %537 = vmatpush2.bf16.msra.mxu0 0
      %538 = vmatprep.subr.bf16.mxu0 0
      %539 = vmatpush2.bf16.msra.mxu0 0
      %540 = vmatprep.subr.bf16.mxu0 0
      %541 = vmatpush2.bf16.msra.mxu0 0
      %542 = vmatprep.subr.bf16.mxu0 0
      %543 = vmatpush2.bf16.msra.mxu0 0
      %544 = vmatprep.subr.bf16.mxu0 0
      %545 = vmatpush2.bf16.msra.mxu0 0
      %546 = vmatprep.subr.bf16.mxu0 0
      %547 = vmatpush2.bf16.msra.mxu0 0
      %548 = vmatprep.mubr.bf16.mxu0 0
      %549 = vmatmul.mubr.bf16.gmra.mxu0 %v508
      %v550 = vpop.f32.mrf.mxu0
      %v551 = vadd.f32 0.0, %v550
      %v552 = vpop.f32.mrf.mxu0
      %v553 = vpop.f32.mrf.mxu0
      %v554 = vadd.f32 0.0, %v553
      %v555 = vpop.f32.mrf.mxu0
      %556 = vmatprep.mubr.bf16.mxu0 0
      %557 = vmatmul.mubr.bf16.gmra.mxu0 %v511
      %v558 = vpop.f32.mrf.mxu0
      %v559 = vadd.f32 0.0, %v558
      %v560 = vpop.f32.mrf.mxu0
      %v561 = vpop.f32.mrf.mxu0
      %v562 = vadd.f32 0.0, %v561
      %v563 = vpop.f32.mrf.mxu0
      %564 = vdwg.mxu0
      %v565 = vadd.f32 %v484, %v551
      %v566 = vadd.f32 %v485, %v554
      %v567 = vadd.f32 %v486, %v559
      %v568 = vadd.f32 %v487, %v562
      %s569 = sadd.s32 %s196, 30
      %s570 = smul.addr %s569, 4
      %s571 = scalar_lea.vmem %s183, %s570
      %v572 = vld [vmem:[%s571] sm:$0xf]
      %v573 = vld [vmem:[%s571 + $0x8] sm:$0xf]
      %v574 = vld [vmem:[%s571 + $0x10] sm:$0xf]
      %v575 = vld [vmem:[%s571 + $0x18] sm:$0xf]
      %s576 = scalar_lea.vmem %s1, 16
      %v577 = vld [vmem:[%s576] sm:$0xf]
      %v582 = vunpack.c.l.b16 %v572
      %v583 = vunpack.c.l.b16 %v573
      %v584 = vunpack.c.l.b16 %v574
      %v585 = vunpack.c.l.b16 %v575
      %v586 = vpack.c.b16 %v583, %v582
      %v587 = vpack.c.b16 %v585, %v584
      %v589 = vsel %vm223, %v586, 0
      %v592 = vsel %vm223, %v587, 0
      %v595 = vsel %vm230, %v577, 0
      %597 = vmatprep.subr.bf16.mxu0 0
      %598 = vmatpush1.bf16.msra.mxu0 0
      %599 = vmatprep.subr.bf16.mxu0 0
      %600 = vmatpush1.bf16.msra.mxu0 0
      %601 = vmatprep.subr.bf16.mxu0 0
      %602 = vmatpush1.bf16.msra.mxu0 0
      %603 = vmatprep.subr.bf16.mxu0 0
      %604 = vmatpush1.bf16.msra.mxu0 0
      %605 = vmatprep.subr.bf16.mxu0 0
      %606 = vmatpush1.bf16.msra.mxu0 0
      %607 = vmatprep.subr.bf16.mxu0 0
      %608 = vmatpush1.bf16.msra.mxu0 0
      %609 = vmatprep.subr.bf16.mxu0 0
      %610 = vmatpush1.bf16.msra.mxu0 0
      %611 = vmatprep.subr.bf16.mxu0 0
      %612 = vmatpush1.bf16.msra.mxu0 %v595
      %613 = vmatprep.subr.bf16.mxu0 0
      %614 = vmatpush2.bf16.msra.mxu0 0
      %615 = vmatprep.subr.bf16.mxu0 0
      %616 = vmatpush2.bf16.msra.mxu0 0
      %617 = vmatprep.subr.bf16.mxu0 0
      %618 = vmatpush2.bf16.msra.mxu0 0
      %619 = vmatprep.subr.bf16.mxu0 0
      %620 = vmatpush2.bf16.msra.mxu0 0
      %621 = vmatprep.subr.bf16.mxu0 0
      %622 = vmatpush2.bf16.msra.mxu0 0
      %623 = vmatprep.subr.bf16.mxu0 0
      %624 = vmatpush2.bf16.msra.mxu0 0
      %625 = vmatprep.subr.bf16.mxu0 0
      %626 = vmatpush2.bf16.msra.mxu0 0
      %627 = vmatprep.subr.bf16.mxu0 0
      %628 = vmatpush2.bf16.msra.mxu0 0
      %629 = vmatprep.mubr.bf16.mxu0 0
      %630 = vmatmul.mubr.bf16.gmra.mxu0 %v589
      %v631 = vpop.f32.mrf.mxu0
      %v632 = vadd.f32 0.0, %v631
      %v633 = vpop.f32.mrf.mxu0
      %v634 = vpop.f32.mrf.mxu0
      %v635 = vadd.f32 0.0, %v634
      %v636 = vpop.f32.mrf.mxu0
      %637 = vmatprep.mubr.bf16.mxu0 0
      %638 = vmatmul.mubr.bf16.gmra.mxu0 %v592
      %v639 = vpop.f32.mrf.mxu0
      %v640 = vadd.f32 0.0, %v639
      %v641 = vpop.f32.mrf.mxu0
      %v642 = vpop.f32.mrf.mxu0
      %v643 = vadd.f32 0.0, %v642
      %v644 = vpop.f32.mrf.mxu0
      %645 = vdwg.mxu0
      %v646 = vadd.f32 %v565, %v632
      %v647 = vadd.f32 %v566, %v635
      %v648 = vadd.f32 %v567, %v640
      %v649 = vadd.f32 %v568, %v643
      %v650 = vld [vmem:[%s490] sm:$0xf]
      %v651 = vld [vmem:[%s490 + $0x4] sm:$0x1]
      %v652 = vld [vmem:[%s490 + $0x8] sm:$0xf]
      %v653 = vld [vmem:[%s490 + $0xc] sm:$0x1]
      %v654 = vld [vmem:[%s490 + $0x10] sm:$0xf]
      %v655 = vld [vmem:[%s490 + $0x14] sm:$0x1]
      %v656 = vld [vmem:[%s490 + $0x18] sm:$0xf]
      %v657 = vld [vmem:[%s490 + $0x1c] sm:$0x1]
      %v659 = vshrl.u32 %v650, 16
      %v661 = vrot.slane %v659, 4
      %v662 = vshll.u32 %v650, 16
      %v664 = vrot.slane %v662, 5
      %v665 = vor.u32 %v661, %v664
      %v666 = vrot.slane %v665, 4
      %v668 = vshll.u32 %v651, 16
      %v670 = vrot.slane %v668, 5
      %v671 = vsel %vm361, %v666, %v670
      %v673 = vshrl.u32 %v652, 16
      %v675 = vrot.slane %v673, 4
      %v676 = vshll.u32 %v652, 16
      %v678 = vrot.slane %v676, 5
      %v679 = vor.u32 %v675, %v678
      %v680 = vrot.slane %v679, 4
      %v682 = vshll.u32 %v653, 16
      %v684 = vrot.slane %v682, 5
      %v685 = vsel %vm361, %v680, %v684
      %v687 = vshrl.u32 %v654, 16
      %v689 = vrot.slane %v687, 4
      %v690 = vshll.u32 %v654, 16
      %v692 = vrot.slane %v690, 5
      %v693 = vor.u32 %v689, %v692
      %v694 = vrot.slane %v693, 4
      %v696 = vshll.u32 %v655, 16
      %v698 = vrot.slane %v696, 5
      %v699 = vsel %vm361, %v694, %v698
      %v701 = vshrl.u32 %v656, 16
      %v703 = vrot.slane %v701, 4
      %v704 = vshll.u32 %v656, 16
      %v706 = vrot.slane %v704, 5
      %v707 = vor.u32 %v703, %v706
      %v708 = vrot.slane %v707, 4
      %v710 = vshll.u32 %v657, 16
      %v712 = vrot.slane %v710, 5
      %v713 = vsel %vm361, %v708, %v712
      %s714 = scalar_lea.vmem %s1, 20
      %v715 = vld [vmem:[%s714] sm:$0xf]
      %v716 = vunpack.c.l.b16 %v671
      %v717 = vunpack.c.l.b16 %v685
      %v718 = vunpack.c.l.b16 %v699
      %v719 = vunpack.c.l.b16 %v713
      %v720 = vpack.c.b16 %v717, %v716
      %v721 = vpack.c.b16 %v719, %v718
      %v723 = vsel %vm223, %v720, 0
      %v726 = vsel %vm223, %v721, 0
      %v729 = vsel %vm230, %v715, 0
      %731 = vmatprep.subr.bf16.mxu0 0
      %732 = vmatpush1.bf16.msra.mxu0 0
      %733 = vmatprep.subr.bf16.mxu0 0
      %734 = vmatpush1.bf16.msra.mxu0 0
      %735 = vmatprep.subr.bf16.mxu0 0
      %736 = vmatpush1.bf16.msra.mxu0 0
      %737 = vmatprep.subr.bf16.mxu0 0
      %738 = vmatpush1.bf16.msra.mxu0 0
      %739 = vmatprep.subr.bf16.mxu0 0
      %740 = vmatpush1.bf16.msra.mxu0 0
      %741 = vmatprep.subr.bf16.mxu0 0
      %742 = vmatpush1.bf16.msra.mxu0 0
      %743 = vmatprep.subr.bf16.mxu0 0
      %744 = vmatpush1.bf16.msra.mxu0 0
      %745 = vmatprep.subr.bf16.mxu0 0
      %746 = vmatpush1.bf16.msra.mxu0 %v729
      %747 = vmatprep.subr.bf16.mxu0 0
      %748 = vmatpush2.bf16.msra.mxu0 0
      %749 = vmatprep.subr.bf16.mxu0 0
      %750 = vmatpush2.bf16.msra.mxu0 0
      %751 = vmatprep.subr.bf16.mxu0 0
      %752 = vmatpush2.bf16.msra.mxu0 0
      %753 = vmatprep.subr.bf16.mxu0 0
      %754 = vmatpush2.bf16.msra.mxu0 0
      %755 = vmatprep.subr.bf16.mxu0 0
      %756 = vmatpush2.bf16.msra.mxu0 0
      %757 = vmatprep.subr.bf16.mxu0 0
      %758 = vmatpush2.bf16.msra.mxu0 0
      %759 = vmatprep.subr.bf16.mxu0 0
      %760 = vmatpush2.bf16.msra.mxu0 0
      %761 = vmatprep.subr.bf16.mxu0 0
      %762 = vmatpush2.bf16.msra.mxu0 0
      %763 = vmatprep.mubr.bf16.mxu0 0
      %764 = vmatmul.mubr.bf16.gmra.mxu0 %v723
      %v765 = vpop.f32.mrf.mxu0
      %v766 = vadd.f32 0.0, %v765
      %v767 = vpop.f32.mrf.mxu0
      %v768 = vpop.f32.mrf.mxu0
      %v769 = vadd.f32 0.0, %v768
      %v770 = vpop.f32.mrf.mxu0
      %771 = vmatprep.mubr.bf16.mxu0 0
      %772 = vmatmul.mubr.bf16.gmra.mxu0 %v726
      %v773 = vpop.f32.mrf.mxu0
      %v774 = vadd.f32 0.0, %v773
      %v775 = vpop.f32.mrf.mxu0
      %v776 = vpop.f32.mrf.mxu0
      %v777 = vadd.f32 0.0, %v776
      %v778 = vpop.f32.mrf.mxu0
      %779 = vdwg.mxu0
      %v780 = vadd.f32 %v646, %v766
      %v781 = vadd.f32 %v647, %v769
      %v782 = vadd.f32 %v648, %v774
      %v783 = vadd.f32 %v649, %v777
      %s784 = sadd.s32 %s195, 1
      %s785 = smul.u32 %s784, 2
      %s786 = smul.addr %s785, 4
      %s787 = scalar_lea.vmem %s183, %s786
      %v788 = vld [vmem:[%s787] sm:$0xf]
      %v789 = vld [vmem:[%s787 + $0x8] sm:$0xf]
      %v790 = vld [vmem:[%s787 + $0x10] sm:$0xf]
      %v791 = vld [vmem:[%s787 + $0x18] sm:$0xf]
      %s792 = scalar_lea.vmem %s1, 24
      %v793 = vld [vmem:[%s792] sm:$0xf]
      %v798 = vunpack.c.l.b16 %v788
      %v799 = vunpack.c.l.b16 %v789
      %v800 = vunpack.c.l.b16 %v790
      %v801 = vunpack.c.l.b16 %v791
      %v802 = vpack.c.b16 %v799, %v798
      %v803 = vpack.c.b16 %v801, %v800
      %v805 = vsel %vm223, %v802, 0
      %v808 = vsel %vm223, %v803, 0
      %v811 = vsel %vm230, %v793, 0
      %813 = vmatprep.subr.bf16.mxu0 0
      %814 = vmatpush1.bf16.msra.mxu0 0
      %815 = vmatprep.subr.bf16.mxu0 0
      %816 = vmatpush1.bf16.msra.mxu0 0
      %817 = vmatprep.subr.bf16.mxu0 0
      %818 = vmatpush1.bf16.msra.mxu0 0
      %819 = vmatprep.subr.bf16.mxu0 0
      %820 = vmatpush1.bf16.msra.mxu0 0
      %821 = vmatprep.subr.bf16.mxu0 0
      %822 = vmatpush1.bf16.msra.mxu0 0
      %823 = vmatprep.subr.bf16.mxu0 0
      %824 = vmatpush1.bf16.msra.mxu0 0
      %825 = vmatprep.subr.bf16.mxu0 0
      %826 = vmatpush1.bf16.msra.mxu0 0
      %827 = vmatprep.subr.bf16.mxu0 0
      %828 = vmatpush1.bf16.msra.mxu0 %v811
      %829 = vmatprep.subr.bf16.mxu0 0
      %830 = vmatpush2.bf16.msra.mxu0 0
      %831 = vmatprep.subr.bf16.mxu0 0
      %832 = vmatpush2.bf16.msra.mxu0 0
      %833 = vmatprep.subr.bf16.mxu0 0
      %834 = vmatpush2.bf16.msra.mxu0 0
      %835 = vmatprep.subr.bf16.mxu0 0
      %836 = vmatpush2.bf16.msra.mxu0 0
      %837 = vmatprep.subr.bf16.mxu0 0
      %838 = vmatpush2.bf16.msra.mxu0 0
      %839 = vmatprep.subr.bf16.mxu0 0
      %840 = vmatpush2.bf16.msra.mxu0 0
      %841 = vmatprep.subr.bf16.mxu0 0
      %842 = vmatpush2.bf16.msra.mxu0 0
      %843 = vmatprep.subr.bf16.mxu0 0
      %844 = vmatpush2.bf16.msra.mxu0 0
      %845 = vmatprep.mubr.bf16.mxu0 0
      %846 = vmatmul.mubr.bf16.gmra.mxu0 %v805
      %v847 = vpop.f32.mrf.mxu0
      %v848 = vadd.f32 0.0, %v847
      %v849 = vpop.f32.mrf.mxu0
      %v850 = vpop.f32.mrf.mxu0
      %v851 = vadd.f32 0.0, %v850
      %v852 = vpop.f32.mrf.mxu0
      %853 = vmatprep.mubr.bf16.mxu0 0
      %854 = vmatmul.mubr.bf16.gmra.mxu0 %v808
      %v855 = vpop.f32.mrf.mxu0
      %v856 = vadd.f32 0.0, %v855
      %v857 = vpop.f32.mrf.mxu0
      %v858 = vpop.f32.mrf.mxu0
      %v859 = vadd.f32 0.0, %v858
      %v860 = vpop.f32.mrf.mxu0
      %861 = vdwg.mxu0
      %v862 = vadd.f32 %v780, %v848
      %v863 = vadd.f32 %v781, %v851
      %v864 = vadd.f32 %v782, %v856
      %v865 = vadd.f32 %v783, %v859
      %s866 = sadd.s32 %s785, 10
      %s867 = smul.addr %s866, 4
      %s868 = scalar_lea.vmem %s183, %s867
      %v869 = vld [vmem:[%s868] sm:$0xf]
      %v870 = vld [vmem:[%s868 + $0x8] sm:$0xf]
      %v871 = vld [vmem:[%s868 + $0x10] sm:$0xf]
      %v872 = vld [vmem:[%s868 + $0x18] sm:$0xf]
      %s873 = scalar_lea.vmem %s1, 28
      %v874 = vld [vmem:[%s873] sm:$0xf]
      %v879 = vunpack.c.l.b16 %v869
      %v880 = vunpack.c.l.b16 %v870
      %v881 = vunpack.c.l.b16 %v871
      %v882 = vunpack.c.l.b16 %v872
      %v883 = vpack.c.b16 %v880, %v879
      %v884 = vpack.c.b16 %v882, %v881
      %v886 = vsel %vm223, %v883, 0
      %v889 = vsel %vm223, %v884, 0
      %v892 = vsel %vm230, %v874, 0
      %894 = vmatprep.subr.bf16.mxu0 0
      %895 = vmatpush1.bf16.msra.mxu0 0
      %896 = vmatprep.subr.bf16.mxu0 0
      %897 = vmatpush1.bf16.msra.mxu0 0
      %898 = vmatprep.subr.bf16.mxu0 0
      %899 = vmatpush1.bf16.msra.mxu0 0
      %900 = vmatprep.subr.bf16.mxu0 0
      %901 = vmatpush1.bf16.msra.mxu0 0
      %902 = vmatprep.subr.bf16.mxu0 0
      %903 = vmatpush1.bf16.msra.mxu0 0
      %904 = vmatprep.subr.bf16.mxu0 0
      %905 = vmatpush1.bf16.msra.mxu0 0
      %906 = vmatprep.subr.bf16.mxu0 0
      %907 = vmatpush1.bf16.msra.mxu0 0
      %908 = vmatprep.subr.bf16.mxu0 0
      %909 = vmatpush1.bf16.msra.mxu0 %v892
      %910 = vmatprep.subr.bf16.mxu0 0
      %911 = vmatpush2.bf16.msra.mxu0 0
      %912 = vmatprep.subr.bf16.mxu0 0
      %913 = vmatpush2.bf16.msra.mxu0 0
      %914 = vmatprep.subr.bf16.mxu0 0
      %915 = vmatpush2.bf16.msra.mxu0 0
      %916 = vmatprep.subr.bf16.mxu0 0
      %917 = vmatpush2.bf16.msra.mxu0 0
      %918 = vmatprep.subr.bf16.mxu0 0
      %919 = vmatpush2.bf16.msra.mxu0 0
      %920 = vmatprep.subr.bf16.mxu0 0
      %921 = vmatpush2.bf16.msra.mxu0 0
      %922 = vmatprep.subr.bf16.mxu0 0
      %923 = vmatpush2.bf16.msra.mxu0 0
      %924 = vmatprep.subr.bf16.mxu0 0
      %925 = vmatpush2.bf16.msra.mxu0 0
      %926 = vmatprep.mubr.bf16.mxu0 0
      %927 = vmatmul.mubr.bf16.gmra.mxu0 %v886
      %v928 = vpop.f32.mrf.mxu0
      %v929 = vadd.f32 0.0, %v928
      %v930 = vpop.f32.mrf.mxu0
      %v931 = vpop.f32.mrf.mxu0
      %v932 = vadd.f32 0.0, %v931
      %v933 = vpop.f32.mrf.mxu0
      %934 = vmatprep.mubr.bf16.mxu0 0
      %935 = vmatmul.mubr.bf16.gmra.mxu0 %v889
      %v936 = vpop.f32.mrf.mxu0
      %v937 = vadd.f32 0.0, %v936
      %v938 = vpop.f32.mrf.mxu0
      %v939 = vpop.f32.mrf.mxu0
      %v940 = vadd.f32 0.0, %v939
      %v941 = vpop.f32.mrf.mxu0
      %942 = vdwg.mxu0
      %v943 = vadd.f32 %v862, %v929
      %v944 = vadd.f32 %v863, %v932
      %v945 = vadd.f32 %v864, %v937
      %v946 = vadd.f32 %v865, %v940
      %v947 = vld [vmem:[%s787] sm:$0xf]
      %v948 = vld [vmem:[%s787 + $0x4] sm:$0x1]
      %v949 = vld [vmem:[%s787 + $0x8] sm:$0xf]
      %v950 = vld [vmem:[%s787 + $0xc] sm:$0x1]
      %v951 = vld [vmem:[%s787 + $0x10] sm:$0xf]
      %v952 = vld [vmem:[%s787 + $0x14] sm:$0x1]
      %v953 = vld [vmem:[%s787 + $0x18] sm:$0xf]
      %v954 = vld [vmem:[%s787 + $0x1c] sm:$0x1]
      %v956 = vshrl.u32 %v947, 16
      %v958 = vrot.slane %v956, 4
      %v959 = vshll.u32 %v947, 16
      %v961 = vrot.slane %v959, 5
      %v962 = vor.u32 %v958, %v961
      %v963 = vrot.slane %v962, 4
      %v965 = vshll.u32 %v948, 16
      %v967 = vrot.slane %v965, 5
      %v968 = vsel %vm361, %v963, %v967
      %v970 = vshrl.u32 %v949, 16
      %v972 = vrot.slane %v970, 4
      %v973 = vshll.u32 %v949, 16
      %v975 = vrot.slane %v973, 5
      %v976 = vor.u32 %v972, %v975
      %v977 = vrot.slane %v976, 4
      %v979 = vshll.u32 %v950, 16
      %v981 = vrot.slane %v979, 5
      %v982 = vsel %vm361, %v977, %v981
      %v984 = vshrl.u32 %v951, 16
      %v986 = vrot.slane %v984, 4
      %v987 = vshll.u32 %v951, 16
      %v989 = vrot.slane %v987, 5
      %v990 = vor.u32 %v986, %v989
      %v991 = vrot.slane %v990, 4
      %v993 = vshll.u32 %v952, 16
      %v995 = vrot.slane %v993, 5
      %v996 = vsel %vm361, %v991, %v995
      %v998 = vshrl.u32 %v953, 16
      %v1000 = vrot.slane %v998, 4
      %v1001 = vshll.u32 %v953, 16
      %v1003 = vrot.slane %v1001, 5
      %v1004 = vor.u32 %v1000, %v1003
      %v1005 = vrot.slane %v1004, 4
      %v1007 = vshll.u32 %v954, 16
      %v1009 = vrot.slane %v1007, 5
      %v1010 = vsel %vm361, %v1005, %v1009
      %s1011 = scalar_lea.vmem %s1, 32
      %v1012 = vld [vmem:[%s1011] sm:$0xf]
      %v1013 = vunpack.c.l.b16 %v968
      %v1014 = vunpack.c.l.b16 %v982
      %v1015 = vunpack.c.l.b16 %v996
      %v1016 = vunpack.c.l.b16 %v1010
      %v1017 = vpack.c.b16 %v1014, %v1013
      %v1018 = vpack.c.b16 %v1016, %v1015
      %v1020 = vsel %vm223, %v1017, 0
      %v1023 = vsel %vm223, %v1018, 0
      %v1026 = vsel %vm230, %v1012, 0
      %1028 = vmatprep.subr.bf16.mxu0 0
      %1029 = vmatpush1.bf16.msra.mxu0 0
      %1030 = vmatprep.subr.bf16.mxu0 0
      %1031 = vmatpush1.bf16.msra.mxu0 0
      %1032 = vmatprep.subr.bf16.mxu0 0
      %1033 = vmatpush1.bf16.msra.mxu0 0
      %1034 = vmatprep.subr.bf16.mxu0 0
      %1035 = vmatpush1.bf16.msra.mxu0 0
      %1036 = vmatprep.subr.bf16.mxu0 0
      %1037 = vmatpush1.bf16.msra.mxu0 0
      %1038 = vmatprep.subr.bf16.mxu0 0
      %1039 = vmatpush1.bf16.msra.mxu0 0
      %1040 = vmatprep.subr.bf16.mxu0 0
      %1041 = vmatpush1.bf16.msra.mxu0 0
      %1042 = vmatprep.subr.bf16.mxu0 0
      %1043 = vmatpush1.bf16.msra.mxu0 %v1026
      %1044 = vmatprep.subr.bf16.mxu0 0
      %1045 = vmatpush2.bf16.msra.mxu0 0
      %1046 = vmatprep.subr.bf16.mxu0 0
      %1047 = vmatpush2.bf16.msra.mxu0 0
      %1048 = vmatprep.subr.bf16.mxu0 0
      %1049 = vmatpush2.bf16.msra.mxu0 0
      %1050 = vmatprep.subr.bf16.mxu0 0
      %1051 = vmatpush2.bf16.msra.mxu0 0
      %1052 = vmatprep.subr.bf16.mxu0 0
      %1053 = vmatpush2.bf16.msra.mxu0 0
      %1054 = vmatprep.subr.bf16.mxu0 0
      %1055 = vmatpush2.bf16.msra.mxu0 0
      %1056 = vmatprep.subr.bf16.mxu0 0
      %1057 = vmatpush2.bf16.msra.mxu0 0
      %1058 = vmatprep.subr.bf16.mxu0 0
      %1059 = vmatpush2.bf16.msra.mxu0 0
      %1060 = vmatprep.mubr.bf16.mxu0 0
      %1061 = vmatmul.mubr.bf16.gmra.mxu0 %v1020
      %v1062 = vpop.f32.mrf.mxu0
      %v1063 = vadd.f32 0.0, %v1062
      %v1064 = vpop.f32.mrf.mxu0
      %v1065 = vpop.f32.mrf.mxu0
      %v1066 = vadd.f32 0.0, %v1065
      %v1067 = vpop.f32.mrf.mxu0
      %1068 = vmatprep.mubr.bf16.mxu0 0
      %1069 = vmatmul.mubr.bf16.gmra.mxu0 %v1023
      %v1070 = vpop.f32.mrf.mxu0
      %v1071 = vadd.f32 0.0, %v1070
      %v1072 = vpop.f32.mrf.mxu0
      %v1073 = vpop.f32.mrf.mxu0
      %v1074 = vadd.f32 0.0, %v1073
      %v1075 = vpop.f32.mrf.mxu0
      %1076 = vdwg.mxu0
      %v1077 = vadd.f32 %v943, %v1063
      %v1078 = vadd.f32 %v944, %v1066
      %v1079 = vadd.f32 %v945, %v1071
      %v1080 = vadd.f32 %v946, %v1074
      %v1081 = vld [vmem:[%s2] sm:$0x1]
      %v1083 = vlaneseq
      %v1084 = vshrl.u32 %v1083, 7
      %v1085 = vsub.s32 0, %v1084
      %v1086 = vrot.slane %v1081, %v1085
      %v1088 = vadd.f32 %v1077, %v1086
      %v1089 = vadd.f32 %v1078, %v1086
      %v1090 = vadd.f32 %v1079, %v1086
      %v1091 = vadd.f32 %v1080, %v1086
      %v1092 = vmax.f32 %v1088, 0.0
      %v1093 = vmax.f32 %v1089, 0.0
      %v1094 = vmax.f32 %v1090, 0.0
      %v1095 = vmax.f32 %v1091, 0.0
      %vm1096 = vcmask 130048
      %1097 = vst.msk [vmem:[%s192] sm:$0xff] %vm1096, %v1092
      %1098 = vst.msk [vmem:[%s192 + $0x8] sm:$0xff] %vm1096, %v1093
      %1099 = vst.msk [vmem:[%s192 + $0x10] sm:$0xff] %vm1096, %v1094
      %1100 = vst.msk [vmem:[%s192 + $0x18] sm:$0xff] %vm1096, %v1095
      %s1101 = smul.u32 4, %s19
      %p1102 = scmp.lt.s32.totalorder %s18, 1
      %s1103 = scalar_select %p1102, %s18, 1
      %p1104 = scmp.lt.s32.totalorder %s1101, 3
      %s1105 = scalar_select %p1104, %s1101, 3
      %s1106 = smul.addr %s1103, 4
      %s1107 = sadd.s32 %s1105, %s1106
      %s1108 = smul.addr %s1107, 8
      %s1109 = scalar_lea.vmem %s3, %s1108
      // Predicated region
      $region33: #{a_call__.5} parent=31 // pred_check
        %p1110 = pneg %p114
      $region34: #{a_call__.5} parent=31 // pred_check_branch
        %1112 = sbr.rel (%p1110) target = $region36
      $region35: #{a_call__.5} parent=31 // pred_region
        %s1113 = smul.u32 4, %s19
      $region36: #{a_call__.5} parent=31 // pred_fallthru
        _
    $region32: #{a_call__.5} parent=5 // pred_fallthru
      _
    %p1114 = scmp.le.s32.totalorder 2, %s9
    // Predicated region
    $region37: #{a_call__.5} parent=5 // pred_check
      %p1115 = pneg %p1114
    $region38: #{a_call__.5} parent=5 // pred_check_branch
      %1117 = sbr.rel (%p1115) target = $region40
    $region39: #{a_call__.5} parent=5 // pred_region
      %s1118 = ssub.s32 %s9, 2
      // Predicated region
      $region41: #{a_call__.5} parent=39 // pred_check
        %p1119 = pneg %p120
      $region42: #{a_call__.5} parent=39 // pred_check_branch
        %1121 = sbr.rel (%p1119) target = $region44
      $region43: #{a_call__.5} parent=39 // pred_region
        %s1122 = smul.u32 4, %s21
        %p1123 = scmp.lt.s32.totalorder %s20, 1
        %s1124 = scalar_select %p1123, %s20, 1
        %p1125 = scmp.lt.s32.totalorder %s1122, 3
        %s1126 = scalar_select %p1125, %s1122, 3
        %s1127 = smul.addr %s1124, 4
        %s1128 = sadd.s32 %s1126, %s1127
        %s1129 = smul.addr %s1128, 8
        %s1130 = scalar_lea.vmem %s3, %s1129
      $region44: #{a_call__.5} parent=39 // pred_fallthru
        _
    $region40: #{a_call__.5} parent=5 // pred_fallthru
      _
  $region6: #{a_call__.5} parent=0 // loop_footer
    %s13 = sadd.s32 1, %s9
  $region7: #{a_call__.5} parent=0 // loop_footer_branch
    %8 = sbr.rel target = $region3
  $region8: #{a_call__.5} parent=0 // loop_exit
    _

// kernel: a_call__.4
$region0: #{a_call__.4}
  #allocation0 [shape = 'u32[]', space=smem, size = 0x4, offset = 0x4, fixed_abs, tag = 'smem constant byte address 0x4 - core index']
  #allocation1 [shape = 'u32[144,128]{1,0:T(1,128)}', space=vmem, size = 0x12000, scoped, tag = 'internal scratch']
  %s0 = inlined_call_operand.vmem [shape: bf16[2,4,9,9,3], index: 0, kind: input, shape index: {}]
  %s1 = inlined_call_operand.vmem [shape: bf16[9,3,8], index: 1, kind: input, shape index: {}]
  %s2 = inlined_call_operand.vmem [shape: f32[1,8], index: 2, kind: input, shape index: {}]
  %s3 = inlined_call_operand.vmem [shape: f32[2,8,8,8], index: 3, kind: output, shape index: {}]
  %s4 = sld [smem:[#allocation0]]
  $region45: #{a_call__.4} parent=0
    _
  %s6 = ssub.s32 1, %s4
  %s7 = scalar_select 0, %s6, %s4
  loop: start=0, step=1, limit=4
  $region2: #{a_call__.4} parent=0 // loop_pre_header
    _
  $region3: #{a_call__.4} parent=0 // loop_header
    %s9 = sphi 0, %s13
    %p10 = scmp.ge.s32.totalorder %s9, 4
    %s16 = sphi 0, %s28
    %s17 = sphi 0, %s24
    %s18 = sphi 0, %s16
    %s19 = sphi 0, %s17
    %s20 = sphi 0, %s18
    %s21 = sphi 0, %s19
    %s31 = sphi 0, %s33
    %s34 = sphi 0, %s31
    %s35 = sphi 0, %s34
    %s51 = sphi 0, %s35
    %s55 = sphi 0, %s55
    %s57 = sphi 0, %s55
    %s58 = sphi 0, %s57
    %s72 = sphi 0, %s58
    %s76 = sphi 0, %s76
    %s78 = sphi 0, %s76
    %s79 = sphi 0, %s78
    %s93 = sphi 0, %s79
    %s101 = sphi 0, %s103
    %s104 = sphi 0, %s101
    %s105 = sphi 0, %s104
    %s121 = sphi 0, %s105
  $region4: #{a_call__.4} parent=0 // loop_header_branch
    %12 = sbr.rel (%p10) target = $region8
  $region5: #{a_call__.4} parent=0 // loop_body
    %s14 = ssub.s32 %s9, 1
    %s15 = ssub.s32 %s9, 2
    %s22 = sadd.s32 1, %s17
    %p23 = scmp.ge.s32.totalorder %s22, 1
    %s24 = scalar_select %p23, 0, %s22
    %s25 = sadd.s32 1, %s16
    %s26 = scalar_select %p23, %s25, %s16
    %p27 = scmp.ge.s32.totalorder %s26, 2
    %s28 = scalar_select %p27, 0, %s26
    %s29 = ssub.s32 %s16, %s28
    %p30 = scmp.eq.s32.totalorder %s29, 0
    %s32 = sadd.s32 %s31, 1
    %s33 = scalar_select %p30, %s31, %s32
    %p36 = pneg %p30
    %p37 = scmp.eq.s32.totalorder %s9, 1
    %p38 = por %p36, %p37
    %p39 = scmp.ne.s32.totalorder %s31, %s34
    %p40 = scmp.eq.s32.totalorder %s9, 0
    %p41 = por %p39, %p40
    %p42 = scmp.ne.s32.totalorder %s31, %s34
    %p43 = scmp.eq.s32.totalorder %s14, 1
    %p44 = por %p42, %p43
    %p45 = scmp.ne.s32.totalorder %s34, %s35
    %p46 = scmp.eq.s32.totalorder %s14, 0
    %p47 = por %p45, %p46
    %p48 = scmp.ne.s32.totalorder %s34, %s35
    %p49 = scmp.eq.s32.totalorder %s15, 1
    %p50 = por %p48, %p49
    %p52 = scmp.ne.s32.totalorder %s35, %s51
    %p53 = scmp.eq.s32.totalorder %s15, 0
    %p54 = por %p52, %p53
    %s56 = sadd.s32 %s55, 1
    %p59 = scmp.eq.s32.totalorder %s9, 1
    %p60 = scmp.ne.s32.totalorder %s55, %s57
    %p61 = scmp.eq.s32.totalorder %s9, 0
    %p62 = por %p60, %p61
    %p63 = scmp.ne.s32.totalorder %s55, %s57
    %p64 = scmp.eq.s32.totalorder %s14, 1
    %p65 = por %p63, %p64
    %p66 = scmp.ne.s32.totalorder %s57, %s58
    %p67 = scmp.eq.s32.totalorder %s14, 0
    %p68 = por %p66, %p67
    %p69 = scmp.ne.s32.totalorder %s57, %s58
    %p70 = scmp.eq.s32.totalorder %s15, 1
    %p71 = por %p69, %p70
    %p73 = scmp.ne.s32.totalorder %s58, %s72
    %p74 = scmp.eq.s32.totalorder %s15, 0
    %p75 = por %p73, %p74
    %s77 = sadd.s32 %s76, 1
    %p80 = scmp.eq.s32.totalorder %s9, 1
    %p81 = scmp.ne.s32.totalorder %s76, %s78
    %p82 = scmp.eq.s32.totalorder %s9, 0
    %p83 = por %p81, %p82
    %p84 = scmp.ne.s32.totalorder %s76, %s78
    %p85 = scmp.eq.s32.totalorder %s14, 1
    %p86 = por %p84, %p85
    %p87 = scmp.ne.s32.totalorder %s78, %s79
    %p88 = scmp.eq.s32.totalorder %s14, 0
    %p89 = por %p87, %p88
    %p90 = scmp.ne.s32.totalorder %s78, %s79
    %p91 = scmp.eq.s32.totalorder %s15, 1
    %p92 = por %p90, %p91
    %p94 = scmp.ne.s32.totalorder %s79, %s93
    %p95 = scmp.eq.s32.totalorder %s15, 0
    %p96 = por %p94, %p95
    %s97 = ssub.s32 %s16, %s28
    %s98 = ssub.s32 %s17, %s24
    %s99 = sor.u32 %s97, %s98
    %p100 = scmp.eq.s32.totalorder %s99, 0
    %s102 = sadd.s32 %s101, 1
    %s103 = scalar_select %p100, %s101, %s102
    %p106 = pneg %p100
    %p107 = scmp.eq.s32.totalorder %s9, 1
    %p108 = por %p106, %p107
    %p109 = scmp.ne.s32.totalorder %s101, %s104
    %p110 = scmp.eq.s32.totalorder %s9, 0
    %p111 = por %p109, %p110
    %p112 = scmp.ne.s32.totalorder %s101, %s104
    %p113 = scmp.eq.s32.totalorder %s14, 1
    %p114 = por %p112, %p113
    %p115 = scmp.ne.s32.totalorder %s104, %s105
    %p116 = scmp.eq.s32.totalorder %s14, 0
    %p117 = por %p115, %p116
    %p118 = scmp.ne.s32.totalorder %s104, %s105
    %p119 = scmp.eq.s32.totalorder %s15, 1
    %p120 = por %p118, %p119
    %p122 = scmp.ne.s32.totalorder %s105, %s121
    %p123 = scmp.eq.s32.totalorder %s15, 0
    %p124 = por %p122, %p123
    %p125 = scmp.le.s32.totalorder 1, %s9
    %p126 = scmp.lt.s32.totalorder %s9, 3
    %p127 = pnand %p125, %p126
    %p128 = pneg %p127
    // Predicated region
    $region9: #{a_call__.4} parent=5 // pred_check
      _
    $region10: #{a_call__.4} parent=5 // pred_check_branch
      %130 = sbr.rel (%p127) target = $region12
    $region11: #{a_call__.4} parent=5 // pred_region
      %s131 = ssub.s32 %s9, 1
      // Predicated region
      $region13: #{a_call__.4} parent=11 // pred_check
        %p132 = pneg %p68
      $region14: #{a_call__.4} parent=11 // pred_check_branch
        %134 = sbr.rel (%p132) target = $region16
      $region15: #{a_call__.4} parent=11 // pred_region
        _
      $region16: #{a_call__.4} parent=11 // pred_fallthru
        _
      // Predicated region
      $region17: #{a_call__.4} parent=11 // pred_check
        %p135 = pneg %p89
      $region18: #{a_call__.4} parent=11 // pred_check_branch
        %137 = sbr.rel (%p135) target = $region20
      $region19: #{a_call__.4} parent=11 // pred_region
        _
      $region20: #{a_call__.4} parent=11 // pred_fallthru
        _
    $region12: #{a_call__.4} parent=5 // pred_fallthru
      _
    %p138 = scmp.lt.s32.totalorder %s9, 2
    // Predicated region
    $region21: #{a_call__.4} parent=5 // pred_check
      %p139 = pneg %p138
    $region22: #{a_call__.4} parent=5 // pred_check_branch
      %141 = sbr.rel (%p139) target = $region24
    $region23: #{a_call__.4} parent=5 // pred_region
      // Predicated region
      $region25: #{a_call__.4} parent=23 // pred_check
        %p142 = pneg %p41
      $region26: #{a_call__.4} parent=23 // pred_check_branch
        %144 = sbr.rel (%p142) target = $region28
      $region27: #{a_call__.4} parent=23 // pred_region
        %p145 = scmp.lt.s32.totalorder %s16, 1
        %s146 = scalar_select %p145, %s16, 1
        %s147 = smul.addr %s146, 72
        %s148 = smul.addr %s147, 4
        %s149 = scalar_lea.vmem %s0, %s148
      $region28: #{a_call__.4} parent=23 // pred_fallthru
        _
    $region24: #{a_call__.4} parent=5 // pred_fallthru
      _
    %p150 = scmp.le.s32.totalorder 1, %s9
    %p151 = scmp.lt.s32.totalorder %s9, 3
    %p152 = pnand %p150, %p151
    %p153 = pneg %p152
    // Predicated region
    $region29: #{a_call__.4} parent=5 // pred_check
      _
    $region30: #{a_call__.4} parent=5 // pred_check_branch
      %155 = sbr.rel (%p152) target = $region32
    $region31: #{a_call__.4} parent=5 // pred_region
      %s156 = ssub.s32 %s9, 1
      %p157 = scmp.lt.s32.totalorder %s18, 1
      %s158 = scalar_select %p157, %s18, 1
      %s159 = smul.addr %s158, 72
      %s160 = smul.addr %s159, 4
      %s161 = scalar_lea.vmem %s0, %s160
      %p162 = pneg %p47
      %p163 = pneg %p44
      %p164 = pneg %p68
      %p165 = pneg %p65
      %p166 = pneg %p89
      %p167 = pneg %p86
      %p168 = pneg %p117
      %p169 = pneg %p114
      %s170 = smul.u32 8, %s19
      %p171 = scmp.lt.s32.totalorder %s18, 1
      %s172 = scalar_select %p171, %s18, 1
      %p173 = scmp.lt.s32.totalorder %s170, 7
      %s174 = scalar_select %p173, %s170, 7
      %s175 = smul.addr %s172, 8
      %s176 = sadd.s32 %s174, %s175
      %s177 = smul.addr %s176, 8
      %s178 = scalar_lea.vmem %s3, %s177
      %p179 = scmp.lt.s32.totalorder %s18, 1
      %s180 = scalar_select %p179, %s18, 1
      %s181 = smul.addr %s180, 72
      %s182 = smul.addr %s181, 4
      %s183 = scalar_lea.vmem %s0, %s182
      %s184 = smul.u32 8, %s19
      %p185 = scmp.lt.s32.totalorder %s18, 1
      %s186 = scalar_select %p185, %s18, 1
      %p187 = scmp.lt.s32.totalorder %s184, 7
      %s188 = scalar_select %p187, %s184, 7
      %s189 = smul.addr %s186, 8
      %s190 = sadd.s32 %s188, %s189
      %s191 = smul.addr %s190, 8
      %s192 = scalar_lea.vmem %s3, %s191
      %s193 = smul.u32 8, %s19
      %s195 = smul.u32 %s19, 8
      %s196 = smul.u32 %s195, 2
      %s197 = smul.addr %s196, 4
      %s198 = scalar_lea.vmem %s183, %s197
      %v199 = vld [vmem:[%s198] sm:$0xf]
      %v200 = vld [vmem:[%s198 + $0x8] sm:$0xf]
      %v201 = vld [vmem:[%s198 + $0x10] sm:$0xf]
      %v202 = vld [vmem:[%s198 + $0x18] sm:$0xf]
      %v203 = vld [vmem:[%s198 + $0x20] sm:$0xf]
      %v204 = vld [vmem:[%s198 + $0x28] sm:$0xf]
      %v205 = vld [vmem:[%s198 + $0x30] sm:$0xf]
      %v206 = vld [vmem:[%s198 + $0x38] sm:$0xf]
      %v207 = vld [vmem:[%s1] sm:$0x3]
      %s208 = sadd.s32 %s196, 18
      %s209 = smul.addr %s208, 4
      %s210 = scalar_lea.vmem %s183, %s209
      %v211 = vld [vmem:[%s210] sm:$0xf]
      %v212 = vld [vmem:[%s210 + $0x8] sm:$0xf]
      %v213 = vld [vmem:[%s210 + $0x10] sm:$0xf]
      %v214 = vld [vmem:[%s210 + $0x18] sm:$0xf]
      %v215 = vld [vmem:[%s210 + $0x20] sm:$0xf]
      %v216 = vld [vmem:[%s210 + $0x28] sm:$0xf]
      %v217 = vld [vmem:[%s210 + $0x30] sm:$0xf]
      %v218 = vld [vmem:[%s210 + $0x38] sm:$0xf]
      %s219 = scalar_lea.vmem %s1, 2
      %v220 = vld [vmem:[%s219] sm:$0x3]
      %v229 = vunpack.c.l.b16 %v211
      %v230 = vunpack.c.l.b16 %v212
      %v231 = vunpack.c.l.b16 %v213
      %v232 = vunpack.c.l.b16 %v214
      %v233 = vunpack.c.l.b16 %v215
      %v234 = vunpack.c.l.b16 %v216
      %v235 = vunpack.c.l.b16 %v217
      %v236 = vunpack.c.l.b16 %v218
      %v237 = vpack.c.b16 %v230, %v229
      %v238 = vpack.c.b16 %v232, %v231
      %v239 = vpack.c.b16 %v234, %v233
      %v240 = vpack.c.b16 %v236, %v235
      %vm241 = vcmask 23552
      %v243 = vsel %vm241, %v237, 0
      %v246 = vsel %vm241, %v238, 0
      %v249 = vsel %vm241, %v239, 0
      %v252 = vsel %vm241, %v240, 0
      %vm254 = vcmask 1040384
      %vm255 = vcmask 1041408
      %v256 = vsel %vm254, 4294967295, 65535
      %v257 = vsel %vm255, %v256, 0
      %v259 = vand.u32 %v220, %v257
      %261 = vmatprep.subr.bf16.mxu0 0
      %262 = vmatpush1.bf16.msra.mxu0 0
      %263 = vmatprep.subr.bf16.mxu0 0
      %264 = vmatpush1.bf16.msra.mxu0 0
      %265 = vmatprep.subr.bf16.mxu0 0
      %266 = vmatpush1.bf16.msra.mxu0 0
      %267 = vmatprep.subr.bf16.mxu0 0
      %268 = vmatpush1.bf16.msra.mxu0 0
      %269 = vmatprep.subr.bf16.mxu0 0
      %270 = vmatpush1.bf16.msra.mxu0 0
      %271 = vmatprep.subr.bf16.mxu0 0
      %272 = vmatpush1.bf16.msra.mxu0 0
      %273 = vmatprep.subr.bf16.mxu0 0
      %274 = vmatpush1.bf16.msra.mxu0 0
      %275 = vmatprep.subr.bf16.mxu0 0
      %276 = vmatpush1.bf16.msra.mxu0 %v259
      %277 = vmatprep.subr.bf16.mxu0 0
      %278 = vmatpush2.bf16.msra.mxu0 0
      %279 = vmatprep.subr.bf16.mxu0 0
      %280 = vmatpush2.bf16.msra.mxu0 0
      %281 = vmatprep.subr.bf16.mxu0 0
      %282 = vmatpush2.bf16.msra.mxu0 0
      %283 = vmatprep.subr.bf16.mxu0 0
      %284 = vmatpush2.bf16.msra.mxu0 0
      %285 = vmatprep.subr.bf16.mxu0 0
      %286 = vmatpush2.bf16.msra.mxu0 0
      %287 = vmatprep.subr.bf16.mxu0 0
      %288 = vmatpush2.bf16.msra.mxu0 0
      %289 = vmatprep.subr.bf16.mxu0 0
      %290 = vmatpush2.bf16.msra.mxu0 0
      %291 = vmatprep.subr.bf16.mxu0 0
      %292 = vmatpush2.bf16.msra.mxu0 0
      %293 = vmatprep.mubr.bf16.mxu0 0
      %294 = vmatmul.mubr.bf16.gmra.mxu0 %v243
      %v295 = vpop.f32.mrf.mxu0
      %v296 = vadd.f32 0.0, %v295
      %v297 = vpop.f32.mrf.mxu0
      %v298 = vpop.f32.mrf.mxu0
      %v299 = vadd.f32 0.0, %v298
      %v300 = vpop.f32.mrf.mxu0
      %301 = vmatprep.mubr.bf16.mxu0 0
      %302 = vmatmul.mubr.bf16.gmra.mxu0 %v246
      %v303 = vpop.f32.mrf.mxu0
      %v304 = vadd.f32 0.0, %v303
      %v305 = vpop.f32.mrf.mxu0
      %v306 = vpop.f32.mrf.mxu0
      %v307 = vadd.f32 0.0, %v306
      %v308 = vpop.f32.mrf.mxu0
      %309 = vmatprep.mubr.bf16.mxu0 0
      %310 = vmatmul.mubr.bf16.gmra.mxu0 %v249
      %v311 = vpop.f32.mrf.mxu0
      %v312 = vadd.f32 0.0, %v311
      %v313 = vpop.f32.mrf.mxu0
      %v314 = vpop.f32.mrf.mxu0
      %v315 = vadd.f32 0.0, %v314
      %v316 = vpop.f32.mrf.mxu0
      %317 = vmatprep.mubr.bf16.mxu0 0
      %318 = vmatmul.mubr.bf16.gmra.mxu0 %v252
      %v319 = vpop.f32.mrf.mxu0
      %v320 = vadd.f32 0.0, %v319
      %v321 = vpop.f32.mrf.mxu0
      %v322 = vpop.f32.mrf.mxu0
      %v323 = vadd.f32 0.0, %v322
      %v324 = vpop.f32.mrf.mxu0
      %325 = vdwg.mxu0
      %v334 = vunpack.c.l.b16 %v199
      %v335 = vunpack.c.l.b16 %v200
      %v336 = vunpack.c.l.b16 %v201
      %v337 = vunpack.c.l.b16 %v202
      %v338 = vunpack.c.l.b16 %v203
      %v339 = vunpack.c.l.b16 %v204
      %v340 = vunpack.c.l.b16 %v205
      %v341 = vunpack.c.l.b16 %v206
      %v342 = vpack.c.b16 %v335, %v334
      %v343 = vpack.c.b16 %v337, %v336
      %v344 = vpack.c.b16 %v339, %v338
      %v345 = vpack.c.b16 %v341, %v340
      %v347 = vsel %vm241, %v342, 0
      %v350 = vsel %vm241, %v343, 0
      %v353 = vsel %vm241, %v344, 0
      %v356 = vsel %vm241, %v345, 0
      %v359 = vand.u32 %v207, %v257
      %361 = vmatprep.subr.bf16.mxu0 0
      %362 = vmatpush1.bf16.msra.mxu0 0
      %363 = vmatprep.subr.bf16.mxu0 0
      %364 = vmatpush1.bf16.msra.mxu0 0
      %365 = vmatprep.subr.bf16.mxu0 0
      %366 = vmatpush1.bf16.msra.mxu0 0
      %367 = vmatprep.subr.bf16.mxu0 0
      %368 = vmatpush1.bf16.msra.mxu0 0
      %369 = vmatprep.subr.bf16.mxu0 0
      %370 = vmatpush1.bf16.msra.mxu0 0
      %371 = vmatprep.subr.bf16.mxu0 0
      %372 = vmatpush1.bf16.msra.mxu0 0
      %373 = vmatprep.subr.bf16.mxu0 0
      %374 = vmatpush1.bf16.msra.mxu0 0
      %375 = vmatprep.subr.bf16.mxu0 0
      %376 = vmatpush1.bf16.msra.mxu0 %v359
      %377 = vmatprep.subr.bf16.mxu0 0
      %378 = vmatpush2.bf16.msra.mxu0 0
      %379 = vmatprep.subr.bf16.mxu0 0
      %380 = vmatpush2.bf16.msra.mxu0 0
      %381 = vmatprep.subr.bf16.mxu0 0
      %382 = vmatpush2.bf16.msra.mxu0 0
      %383 = vmatprep.subr.bf16.mxu0 0
      %384 = vmatpush2.bf16.msra.mxu0 0
      %385 = vmatprep.subr.bf16.mxu0 0
      %386 = vmatpush2.bf16.msra.mxu0 0
      %387 = vmatprep.subr.bf16.mxu0 0
      %388 = vmatpush2.bf16.msra.mxu0 0
      %389 = vmatprep.subr.bf16.mxu0 0
      %390 = vmatpush2.bf16.msra.mxu0 0
      %391 = vmatprep.subr.bf16.mxu0 0
      %392 = vmatpush2.bf16.msra.mxu0 0
      %393 = vmatprep.mubr.bf16.mxu0 0
      %394 = vmatmul.mubr.bf16.gmra.mxu0 %v347
      %v395 = vpop.f32.mrf.mxu0
      %v396 = vadd.f32 %v296, %v395
      %v397 = vpop.f32.mrf.mxu0
      %v398 = vpop.f32.mrf.mxu0
      %v399 = vadd.f32 %v299, %v398
      %v400 = vpop.f32.mrf.mxu0
      %401 = vmatprep.mubr.bf16.mxu0 0
      %402 = vmatmul.mubr.bf16.gmra.mxu0 %v350
      %v403 = vpop.f32.mrf.mxu0
      %v404 = vadd.f32 %v304, %v403
      %v405 = vpop.f32.mrf.mxu0
      %v406 = vpop.f32.mrf.mxu0
      %v407 = vadd.f32 %v307, %v406
      %v408 = vpop.f32.mrf.mxu0
      %409 = vmatprep.mubr.bf16.mxu0 0
      %410 = vmatmul.mubr.bf16.gmra.mxu0 %v353
      %v411 = vpop.f32.mrf.mxu0
      %v412 = vadd.f32 %v312, %v411
      %v413 = vpop.f32.mrf.mxu0
      %v414 = vpop.f32.mrf.mxu0
      %v415 = vadd.f32 %v315, %v414
      %v416 = vpop.f32.mrf.mxu0
      %417 = vmatprep.mubr.bf16.mxu0 0
      %418 = vmatmul.mubr.bf16.gmra.mxu0 %v356
      %v419 = vpop.f32.mrf.mxu0
      %v420 = vadd.f32 %v320, %v419
      %v421 = vpop.f32.mrf.mxu0
      %v422 = vpop.f32.mrf.mxu0
      %v423 = vadd.f32 %v323, %v422
      %v424 = vpop.f32.mrf.mxu0
      %425 = vdwg.mxu0
      %v426 = vld [vmem:[%s198] sm:$0xf]
      %v427 = vld [vmem:[%s198 + $0x4] sm:$0x1]
      %v428 = vld [vmem:[%s198 + $0x8] sm:$0xf]
      %v429 = vld [vmem:[%s198 + $0xc] sm:$0x1]
      %v430 = vld [vmem:[%s198 + $0x10] sm:$0xf]
      %v431 = vld [vmem:[%s198 + $0x14] sm:$0x1]
      %v432 = vld [vmem:[%s198 + $0x18] sm:$0xf]
      %v433 = vld [vmem:[%s198 + $0x1c] sm:$0x1]
      %v434 = vld [vmem:[%s198 + $0x20] sm:$0xf]
      %v435 = vld [vmem:[%s198 + $0x24] sm:$0x1]
      %v436 = vld [vmem:[%s198 + $0x28] sm:$0xf]
      %v437 = vld [vmem:[%s198 + $0x2c] sm:$0x1]
      %v438 = vld [vmem:[%s198 + $0x30] sm:$0xf]
      %v439 = vld [vmem:[%s198 + $0x34] sm:$0x1]
      %v440 = vld [vmem:[%s198 + $0x38] sm:$0xf]
      %v441 = vld [vmem:[%s198 + $0x3c] sm:$0x1]
      %vm442 = vsmask.f32 3328
      %vm443 = vsmask.f32 7440
      %vm444 = vmor %vm442, %vm443
      %v446 = vshrl.u32 %v426, 16
      %v448 = vrot.slane %v446, 4
      %v449 = vshll.u32 %v426, 16
      %v451 = vrot.slane %v449, 5
      %v452 = vor.u32 %v448, %v451
      %v453 = vrot.slane %v452, 4
      %v455 = vshll.u32 %v427, 16
      %v457 = vrot.slane %v455, 5
      %v458 = vsel %vm444, %v453, %v457
      %v460 = vshrl.u32 %v428, 16
      %v462 = vrot.slane %v460, 4
      %v463 = vshll.u32 %v428, 16
      %v465 = vrot.slane %v463, 5
      %v466 = vor.u32 %v462, %v465
      %v467 = vrot.slane %v466, 4
      %v469 = vshll.u32 %v429, 16
      %v471 = vrot.slane %v469, 5
      %v472 = vsel %vm444, %v467, %v471
      %v474 = vshrl.u32 %v430, 16
      %v476 = vrot.slane %v474, 4
      %v477 = vshll.u32 %v430, 16
      %v479 = vrot.slane %v477, 5
      %v480 = vor.u32 %v476, %v479
      %v481 = vrot.slane %v480, 4
      %v483 = vshll.u32 %v431, 16
      %v485 = vrot.slane %v483, 5
      %v486 = vsel %vm444, %v481, %v485
      %v488 = vshrl.u32 %v432, 16
      %v490 = vrot.slane %v488, 4
      %v491 = vshll.u32 %v432, 16
      %v493 = vrot.slane %v491, 5
      %v494 = vor.u32 %v490, %v493
      %v495 = vrot.slane %v494, 4
      %v497 = vshll.u32 %v433, 16
      %v499 = vrot.slane %v497, 5
      %v500 = vsel %vm444, %v495, %v499
      %v502 = vshrl.u32 %v434, 16
      %v504 = vrot.slane %v502, 4
      %v505 = vshll.u32 %v434, 16
      %v507 = vrot.slane %v505, 5
      %v508 = vor.u32 %v504, %v507
      %v509 = vrot.slane %v508, 4
      %v511 = vshll.u32 %v435, 16
      %v513 = vrot.slane %v511, 5
      %v514 = vsel %vm444, %v509, %v513
      %v516 = vshrl.u32 %v436, 16
      %v518 = vrot.slane %v516, 4
      %v519 = vshll.u32 %v436, 16
      %v521 = vrot.slane %v519, 5
      %v522 = vor.u32 %v518, %v521
      %v523 = vrot.slane %v522, 4
      %v525 = vshll.u32 %v437, 16
      %v527 = vrot.slane %v525, 5
      %v528 = vsel %vm444, %v523, %v527
      %v530 = vshrl.u32 %v438, 16
      %v532 = vrot.slane %v530, 4
      %v533 = vshll.u32 %v438, 16
      %v535 = vrot.slane %v533, 5
      %v536 = vor.u32 %v532, %v535
      %v537 = vrot.slane %v536, 4
      %v539 = vshll.u32 %v439, 16
      %v541 = vrot.slane %v539, 5
      %v542 = vsel %vm444, %v537, %v541
      %v544 = vshrl.u32 %v440, 16
      %v546 = vrot.slane %v544, 4
      %v547 = vshll.u32 %v440, 16
      %v549 = vrot.slane %v547, 5
      %v550 = vor.u32 %v546, %v549
      %v551 = vrot.slane %v550, 4
      %v553 = vshll.u32 %v441, 16
      %v555 = vrot.slane %v553, 5
      %v556 = vsel %vm444, %v551, %v555
      %s557 = scalar_lea.vmem %s1, 4
      %v558 = vld [vmem:[%s557] sm:$0x3]
      %v559 = vunpack.c.l.b16 %v458
      %v560 = vunpack.c.l.b16 %v472
      %v561 = vunpack.c.l.b16 %v486
      %v562 = vunpack.c.l.b16 %v500
      %v563 = vunpack.c.l.b16 %v514
      %v564 = vunpack.c.l.b16 %v528
      %v565 = vunpack.c.l.b16 %v542
      %v566 = vunpack.c.l.b16 %v556
      %v567 = vpack.c.b16 %v560, %v559
      %v568 = vpack.c.b16 %v562, %v561
      %v569 = vpack.c.b16 %v564, %v563
      %v570 = vpack.c.b16 %v566, %v565
      %v572 = vsel %vm241, %v567, 0
      %v575 = vsel %vm241, %v568, 0
      %v578 = vsel %vm241, %v569, 0
      %v581 = vsel %vm241, %v570, 0
      %v584 = vand.u32 %v558, %v257
      %586 = vmatprep.subr.bf16.mxu0 0
      %587 = vmatpush1.bf16.msra.mxu0 0
      %588 = vmatprep.subr.bf16.mxu0 0
      %589 = vmatpush1.bf16.msra.mxu0 0
      %590 = vmatprep.subr.bf16.mxu0 0
      %591 = vmatpush1.bf16.msra.mxu0 0
      %592 = vmatprep.subr.bf16.mxu0 0
      %593 = vmatpush1.bf16.msra.mxu0 0
      %594 = vmatprep.subr.bf16.mxu0 0
      %595 = vmatpush1.bf16.msra.mxu0 0
      %596 = vmatprep.subr.bf16.mxu0 0
      %597 = vmatpush1.bf16.msra.mxu0 0
      %598 = vmatprep.subr.bf16.mxu0 0
      %599 = vmatpush1.bf16.msra.mxu0 0
      %600 = vmatprep.subr.bf16.mxu0 0
      %601 = vmatpush1.bf16.msra.mxu0 %v584
      %602 = vmatprep.subr.bf16.mxu0 0
      %603 = vmatpush2.bf16.msra.mxu0 0
      %604 = vmatprep.subr.bf16.mxu0 0
      %605 = vmatpush2.bf16.msra.mxu0 0
      %606 = vmatprep.subr.bf16.mxu0 0
      %607 = vmatpush2.bf16.msra.mxu0 0
      %608 = vmatprep.subr.bf16.mxu0 0
      %609 = vmatpush2.bf16.msra.mxu0 0
      %610 = vmatprep.subr.bf16.mxu0 0
      %611 = vmatpush2.bf16.msra.mxu0 0
      %612 = vmatprep.subr.bf16.mxu0 0
      %613 = vmatpush2.bf16.msra.mxu0 0
      %614 = vmatprep.subr.bf16.mxu0 0
      %615 = vmatpush2.bf16.msra.mxu0 0
      %616 = vmatprep.subr.bf16.mxu0 0
      %617 = vmatpush2.bf16.msra.mxu0 0
      %618 = vmatprep.mubr.bf16.mxu0 0
      %619 = vmatmul.mubr.bf16.gmra.mxu0 %v572
      %v620 = vpop.f32.mrf.mxu0
      %v621 = vadd.f32 0.0, %v620
      %v622 = vpop.f32.mrf.mxu0
      %v623 = vpop.f32.mrf.mxu0
      %v624 = vadd.f32 0.0, %v623
      %v625 = vpop.f32.mrf.mxu0
      %626 = vmatprep.mubr.bf16.mxu0 0
      %627 = vmatmul.mubr.bf16.gmra.mxu0 %v575
      %v628 = vpop.f32.mrf.mxu0
      %v629 = vadd.f32 0.0, %v628
      %v630 = vpop.f32.mrf.mxu0
      %v631 = vpop.f32.mrf.mxu0
      %v632 = vadd.f32 0.0, %v631
      %v633 = vpop.f32.mrf.mxu0
      %634 = vmatprep.mubr.bf16.mxu0 0
      %635 = vmatmul.mubr.bf16.gmra.mxu0 %v578
      %v636 = vpop.f32.mrf.mxu0
      %v637 = vadd.f32 0.0, %v636
      %v638 = vpop.f32.mrf.mxu0
      %v639 = vpop.f32.mrf.mxu0
      %v640 = vadd.f32 0.0, %v639
      %v641 = vpop.f32.mrf.mxu0
      %642 = vmatprep.mubr.bf16.mxu0 0
      %643 = vmatmul.mubr.bf16.gmra.mxu0 %v581
      %v644 = vpop.f32.mrf.mxu0
      %v645 = vadd.f32 0.0, %v644
      %v646 = vpop.f32.mrf.mxu0
      %v647 = vpop.f32.mrf.mxu0
      %v648 = vadd.f32 0.0, %v647
      %v649 = vpop.f32.mrf.mxu0
      %650 = vdwg.mxu0
      %v651 = vadd.f32 %v396, %v621
      %v652 = vadd.f32 %v399, %v624
      %v653 = vadd.f32 %v404, %v629
      %v654 = vadd.f32 %v407, %v632
      %v655 = vadd.f32 %v412, %v637
      %v656 = vadd.f32 %v415, %v640
      %v657 = vadd.f32 %v420, %v645
      %v658 = vadd.f32 %v423, %v648
      %s659 = sadd.s32 %s196, 36
      %s660 = smul.addr %s659, 4
      %s661 = scalar_lea.vmem %s183, %s660
      %v662 = vld [vmem:[%s661] sm:$0xf]
      %v663 = vld [vmem:[%s661 + $0x8] sm:$0xf]
      %v664 = vld [vmem:[%s661 + $0x10] sm:$0xf]
      %v665 = vld [vmem:[%s661 + $0x18] sm:$0xf]
      %v666 = vld [vmem:[%s661 + $0x20] sm:$0xf]
      %v667 = vld [vmem:[%s661 + $0x28] sm:$0xf]
      %v668 = vld [vmem:[%s661 + $0x30] sm:$0xf]
      %v669 = vld [vmem:[%s661 + $0x38] sm:$0xf]
      %s670 = scalar_lea.vmem %s1, 6
      %v671 = vld [vmem:[%s670] sm:$0x3]
      %v680 = vunpack.c.l.b16 %v662
      %v681 = vunpack.c.l.b16 %v663
      %v682 = vunpack.c.l.b16 %v664
      %v683 = vunpack.c.l.b16 %v665
      %v684 = vunpack.c.l.b16 %v666
      %v685 = vunpack.c.l.b16 %v667
      %v686 = vunpack.c.l.b16 %v668
      %v687 = vunpack.c.l.b16 %v669
      %v688 = vpack.c.b16 %v681, %v680
      %v689 = vpack.c.b16 %v683, %v682
      %v690 = vpack.c.b16 %v685, %v684
      %v691 = vpack.c.b16 %v687, %v686
      %v693 = vsel %vm241, %v688, 0
      %v696 = vsel %vm241, %v689, 0
      %v699 = vsel %vm241, %v690, 0
      %v702 = vsel %vm241, %v691, 0
      %v705 = vand.u32 %v671, %v257
      %707 = vmatprep.subr.bf16.mxu0 0
      %708 = vmatpush1.bf16.msra.mxu0 0
      %709 = vmatprep.subr.bf16.mxu0 0
      %710 = vmatpush1.bf16.msra.mxu0 0
      %711 = vmatprep.subr.bf16.mxu0 0
      %712 = vmatpush1.bf16.msra.mxu0 0
      %713 = vmatprep.subr.bf16.mxu0 0
      %714 = vmatpush1.bf16.msra.mxu0 0
      %715 = vmatprep.subr.bf16.mxu0 0
      %716 = vmatpush1.bf16.msra.mxu0 0
      %717 = vmatprep.subr.bf16.mxu0 0
      %718 = vmatpush1.bf16.msra.mxu0 0
      %719 = vmatprep.subr.bf16.mxu0 0
      %720 = vmatpush1.bf16.msra.mxu0 0
      %721 = vmatprep.subr.bf16.mxu0 0
      %722 = vmatpush1.bf16.msra.mxu0 %v705
      %723 = vmatprep.subr.bf16.mxu0 0
      %724 = vmatpush2.bf16.msra.mxu0 0
      %725 = vmatprep.subr.bf16.mxu0 0
      %726 = vmatpush2.bf16.msra.mxu0 0
      %727 = vmatprep.subr.bf16.mxu0 0
      %728 = vmatpush2.bf16.msra.mxu0 0
      %729 = vmatprep.subr.bf16.mxu0 0
      %730 = vmatpush2.bf16.msra.mxu0 0
      %731 = vmatprep.subr.bf16.mxu0 0
      %732 = vmatpush2.bf16.msra.mxu0 0
      %733 = vmatprep.subr.bf16.mxu0 0
      %734 = vmatpush2.bf16.msra.mxu0 0
      %735 = vmatprep.subr.bf16.mxu0 0
      %736 = vmatpush2.bf16.msra.mxu0 0
      %737 = vmatprep.subr.bf16.mxu0 0
      %738 = vmatpush2.bf16.msra.mxu0 0
      %739 = vmatprep.mubr.bf16.mxu0 0
      %740 = vmatmul.mubr.bf16.gmra.mxu0 %v693
      %v741 = vpop.f32.mrf.mxu0
      %v742 = vadd.f32 0.0, %v741
      %v743 = vpop.f32.mrf.mxu0
      %v744 = vpop.f32.mrf.mxu0
      %v745 = vadd.f32 0.0, %v744
      %v746 = vpop.f32.mrf.mxu0
      %747 = vmatprep.mubr.bf16.mxu0 0
      %748 = vmatmul.mubr.bf16.gmra.mxu0 %v696
      %v749 = vpop.f32.mrf.mxu0
      %v750 = vadd.f32 0.0, %v749
      %v751 = vpop.f32.mrf.mxu0
      %v752 = vpop.f32.mrf.mxu0
      %v753 = vadd.f32 0.0, %v752
      %v754 = vpop.f32.mrf.mxu0
      %755 = vmatprep.mubr.bf16.mxu0 0
      %756 = vmatmul.mubr.bf16.gmra.mxu0 %v699
      %v757 = vpop.f32.mrf.mxu0
      %v758 = vadd.f32 0.0, %v757
      %v759 = vpop.f32.mrf.mxu0
      %v760 = vpop.f32.mrf.mxu0
      %v761 = vadd.f32 0.0, %v760
      %v762 = vpop.f32.mrf.mxu0
      %763 = vmatprep.mubr.bf16.mxu0 0
      %764 = vmatmul.mubr.bf16.gmra.mxu0 %v702
      %v765 = vpop.f32.mrf.mxu0
      %v766 = vadd.f32 0.0, %v765
      %v767 = vpop.f32.mrf.mxu0
      %v768 = vpop.f32.mrf.mxu0
      %v769 = vadd.f32 0.0, %v768
      %v770 = vpop.f32.mrf.mxu0
      %771 = vdwg.mxu0
      %v772 = vadd.f32 %v651, %v742
      %v773 = vadd.f32 %v652, %v745
      %v774 = vadd.f32 %v653, %v750
      %v775 = vadd.f32 %v654, %v753
      %v776 = vadd.f32 %v655, %v758
      %v777 = vadd.f32 %v656, %v761
      %v778 = vadd.f32 %v657, %v766
      %v779 = vadd.f32 %v658, %v769
      %s780 = sadd.s32 %s196, 54
      %s781 = smul.addr %s780, 4
      %s782 = scalar_lea.vmem %s183, %s781
      %v783 = vld [vmem:[%s782] sm:$0xf]
      %v784 = vld [vmem:[%s782 + $0x8] sm:$0xf]
      %v785 = vld [vmem:[%s782 + $0x10] sm:$0xf]
      %v786 = vld [vmem:[%s782 + $0x18] sm:$0xf]
      %v787 = vld [vmem:[%s782 + $0x20] sm:$0xf]
      %v788 = vld [vmem:[%s782 + $0x28] sm:$0xf]
      %v789 = vld [vmem:[%s782 + $0x30] sm:$0xf]
      %v790 = vld [vmem:[%s782 + $0x38] sm:$0xf]
      %s791 = scalar_lea.vmem %s1, 8
      %v792 = vld [vmem:[%s791] sm:$0x3]
      %v801 = vunpack.c.l.b16 %v783
      %v802 = vunpack.c.l.b16 %v784
      %v803 = vunpack.c.l.b16 %v785
      %v804 = vunpack.c.l.b16 %v786
      %v805 = vunpack.c.l.b16 %v787
      %v806 = vunpack.c.l.b16 %v788
      %v807 = vunpack.c.l.b16 %v789
      %v808 = vunpack.c.l.b16 %v790
      %v809 = vpack.c.b16 %v802, %v801
      %v810 = vpack.c.b16 %v804, %v803
      %v811 = vpack.c.b16 %v806, %v805
      %v812 = vpack.c.b16 %v808, %v807
      %v814 = vsel %vm241, %v809, 0
      %v817 = vsel %vm241, %v810, 0
      %v820 = vsel %vm241, %v811, 0
      %v823 = vsel %vm241, %v812, 0
      %v826 = vand.u32 %v792, %v257
      %828 = vmatprep.subr.bf16.mxu0 0
      %829 = vmatpush1.bf16.msra.mxu0 0
      %830 = vmatprep.subr.bf16.mxu0 0
      %831 = vmatpush1.bf16.msra.mxu0 0
      %832 = vmatprep.subr.bf16.mxu0 0
      %833 = vmatpush1.bf16.msra.mxu0 0
      %834 = vmatprep.subr.bf16.mxu0 0
      %835 = vmatpush1.bf16.msra.mxu0 0
      %836 = vmatprep.subr.bf16.mxu0 0
      %837 = vmatpush1.bf16.msra.mxu0 0
      %838 = vmatprep.subr.bf16.mxu0 0
      %839 = vmatpush1.bf16.msra.mxu0 0
      %840 = vmatprep.subr.bf16.mxu0 0
      %841 = vmatpush1.bf16.msra.mxu0 0
      %842 = vmatprep.subr.bf16.mxu0 0
      %843 = vmatpush1.bf16.msra.mxu0 %v826
      %844 = vmatprep.subr.bf16.mxu0 0
      %845 = vmatpush2.bf16.msra.mxu0 0
      %846 = vmatprep.subr.bf16.mxu0 0
      %847 = vmatpush2.bf16.msra.mxu0 0
      %848 = vmatprep.subr.bf16.mxu0 0
      %849 = vmatpush2.bf16.msra.mxu0 0
      %850 = vmatprep.subr.bf16.mxu0 0
      %851 = vmatpush2.bf16.msra.mxu0 0
      %852 = vmatprep.subr.bf16.mxu0 0
      %853 = vmatpush2.bf16.msra.mxu0 0
      %854 = vmatprep.subr.bf16.mxu0 0
      %855 = vmatpush2.bf16.msra.mxu0 0
      %856 = vmatprep.subr.bf16.mxu0 0
      %857 = vmatpush2.bf16.msra.mxu0 0
      %858 = vmatprep.subr.bf16.mxu0 0
      %859 = vmatpush2.bf16.msra.mxu0 0
      %860 = vmatprep.mubr.bf16.mxu0 0
      %861 = vmatmul.mubr.bf16.gmra.mxu0 %v814
      %v862 = vpop.f32.mrf.mxu0
      %v863 = vadd.f32 0.0, %v862
      %v864 = vpop.f32.mrf.mxu0
      %v865 = vpop.f32.mrf.mxu0
      %v866 = vadd.f32 0.0, %v865
      %v867 = vpop.f32.mrf.mxu0
      %868 = vmatprep.mubr.bf16.mxu0 0
      %869 = vmatmul.mubr.bf16.gmra.mxu0 %v817
      %v870 = vpop.f32.mrf.mxu0
      %v871 = vadd.f32 0.0, %v870
      %v872 = vpop.f32.mrf.mxu0
      %v873 = vpop.f32.mrf.mxu0
      %v874 = vadd.f32 0.0, %v873
      %v875 = vpop.f32.mrf.mxu0
      %876 = vmatprep.mubr.bf16.mxu0 0
      %877 = vmatmul.mubr.bf16.gmra.mxu0 %v820
      %v878 = vpop.f32.mrf.mxu0
      %v879 = vadd.f32 0.0, %v878
      %v880 = vpop.f32.mrf.mxu0
      %v881 = vpop.f32.mrf.mxu0
      %v882 = vadd.f32 0.0, %v881
      %v883 = vpop.f32.mrf.mxu0
      %884 = vmatprep.mubr.bf16.mxu0 0
      %885 = vmatmul.mubr.bf16.gmra.mxu0 %v823
      %v886 = vpop.f32.mrf.mxu0
      %v887 = vadd.f32 0.0, %v886
      %v888 = vpop.f32.mrf.mxu0
      %v889 = vpop.f32.mrf.mxu0
      %v890 = vadd.f32 0.0, %v889
      %v891 = vpop.f32.mrf.mxu0
      %892 = vdwg.mxu0
      %v893 = vadd.f32 %v772, %v863
      %v894 = vadd.f32 %v773, %v866
      %v895 = vadd.f32 %v774, %v871
      %v896 = vadd.f32 %v775, %v874
      %v897 = vadd.f32 %v776, %v879
      %v898 = vadd.f32 %v777, %v882
      %v899 = vadd.f32 %v778, %v887
      %v900 = vadd.f32 %v779, %v890
      %v901 = vld [vmem:[%s661] sm:$0xf]
      %v902 = vld [vmem:[%s661 + $0x4] sm:$0x1]
      %v903 = vld [vmem:[%s661 + $0x8] sm:$0xf]
      %v904 = vld [vmem:[%s661 + $0xc] sm:$0x1]
      %v905 = vld [vmem:[%s661 + $0x10] sm:$0xf]
      %v906 = vld [vmem:[%s661 + $0x14] sm:$0x1]
      %v907 = vld [vmem:[%s661 + $0x18] sm:$0xf]
      %v908 = vld [vmem:[%s661 + $0x1c] sm:$0x1]
      %v909 = vld [vmem:[%s661 + $0x20] sm:$0xf]
      %v910 = vld [vmem:[%s661 + $0x24] sm:$0x1]
      %v911 = vld [vmem:[%s661 + $0x28] sm:$0xf]
      %v912 = vld [vmem:[%s661 + $0x2c] sm:$0x1]
      %v913 = vld [vmem:[%s661 + $0x30] sm:$0xf]
      %v914 = vld [vmem:[%s661 + $0x34] sm:$0x1]
      %v915 = vld [vmem:[%s661 + $0x38] sm:$0xf]
      %v916 = vld [vmem:[%s661 + $0x3c] sm:$0x1]
      %v918 = vshrl.u32 %v901, 16
      %v920 = vrot.slane %v918, 4
      %v921 = vshll.u32 %v901, 16
      %v923 = vrot.slane %v921, 5
      %v924 = vor.u32 %v920, %v923
      %v925 = vrot.slane %v924, 4
      %v927 = vshll.u32 %v902, 16
      %v929 = vrot.slane %v927, 5
      %v930 = vsel %vm444, %v925, %v929
      %v932 = vshrl.u32 %v903, 16
      %v934 = vrot.slane %v932, 4
      %v935 = vshll.u32 %v903, 16
      %v937 = vrot.slane %v935, 5
      %v938 = vor.u32 %v934, %v937
      %v939 = vrot.slane %v938, 4
      %v941 = vshll.u32 %v904, 16
      %v943 = vrot.slane %v941, 5
      %v944 = vsel %vm444, %v939, %v943
      %v946 = vshrl.u32 %v905, 16
      %v948 = vrot.slane %v946, 4
      %v949 = vshll.u32 %v905, 16
      %v951 = vrot.slane %v949, 5
      %v952 = vor.u32 %v948, %v951
      %v953 = vrot.slane %v952, 4
      %v955 = vshll.u32 %v906, 16
      %v957 = vrot.slane %v955, 5
      %v958 = vsel %vm444, %v953, %v957
      %v960 = vshrl.u32 %v907, 16
      %v962 = vrot.slane %v960, 4
      %v963 = vshll.u32 %v907, 16
      %v965 = vrot.slane %v963, 5
      %v966 = vor.u32 %v962, %v965
      %v967 = vrot.slane %v966, 4
      %v969 = vshll.u32 %v908, 16
      %v971 = vrot.slane %v969, 5
      %v972 = vsel %vm444, %v967, %v971
      %v974 = vshrl.u32 %v909, 16
      %v976 = vrot.slane %v974, 4
      %v977 = vshll.u32 %v909, 16
      %v979 = vrot.slane %v977, 5
      %v980 = vor.u32 %v976, %v979
      %v981 = vrot.slane %v980, 4
      %v983 = vshll.u32 %v910, 16
      %v985 = vrot.slane %v983, 5
      %v986 = vsel %vm444, %v981, %v985
      %v988 = vshrl.u32 %v911, 16
      %v990 = vrot.slane %v988, 4
      %v991 = vshll.u32 %v911, 16
      %v993 = vrot.slane %v991, 5
      %v994 = vor.u32 %v990, %v993
      %v995 = vrot.slane %v994, 4
      %v997 = vshll.u32 %v912, 16
      %v999 = vrot.slane %v997, 5
      %v1000 = vsel %vm444, %v995, %v999
      %v1002 = vshrl.u32 %v913, 16
      %v1004 = vrot.slane %v1002, 4
      %v1005 = vshll.u32 %v913, 16
      %v1007 = vrot.slane %v1005, 5
      %v1008 = vor.u32 %v1004, %v1007
      %v1009 = vrot.slane %v1008, 4
      %v1011 = vshll.u32 %v914, 16
      %v1013 = vrot.slane %v1011, 5
      %v1014 = vsel %vm444, %v1009, %v1013
      %v1016 = vshrl.u32 %v915, 16
      %v1018 = vrot.slane %v1016, 4
      %v1019 = vshll.u32 %v915, 16
      %v1021 = vrot.slane %v1019, 5
      %v1022 = vor.u32 %v1018, %v1021
      %v1023 = vrot.slane %v1022, 4
      %v1025 = vshll.u32 %v916, 16
      %v1027 = vrot.slane %v1025, 5
      %v1028 = vsel %vm444, %v1023, %v1027
      %s1029 = scalar_lea.vmem %s1, 10
      %v1030 = vld [vmem:[%s1029] sm:$0x3]
      %v1031 = vunpack.c.l.b16 %v930
      %v1032 = vunpack.c.l.b16 %v944
      %v1033 = vunpack.c.l.b16 %v958
      %v1034 = vunpack.c.l.b16 %v972
      %v1035 = vunpack.c.l.b16 %v986
      %v1036 = vunpack.c.l.b16 %v1000
      %v1037 = vunpack.c.l.b16 %v1014
      %v1038 = vunpack.c.l.b16 %v1028
      %v1039 = vpack.c.b16 %v1032, %v1031
      %v1040 = vpack.c.b16 %v1034, %v1033
      %v1041 = vpack.c.b16 %v1036, %v1035
      %v1042 = vpack.c.b16 %v1038, %v1037
      %v1044 = vsel %vm241, %v1039, 0
      %v1047 = vsel %vm241, %v1040, 0
      %v1050 = vsel %vm241, %v1041, 0
      %v1053 = vsel %vm241, %v1042, 0
      %v1056 = vand.u32 %v1030, %v257
      %1058 = vmatprep.subr.bf16.mxu0 0
      %1059 = vmatpush1.bf16.msra.mxu0 0
      %1060 = vmatprep.subr.bf16.mxu0 0
      %1061 = vmatpush1.bf16.msra.mxu0 0
      %1062 = vmatprep.subr.bf16.mxu0 0
      %1063 = vmatpush1.bf16.msra.mxu0 0
      %1064 = vmatprep.subr.bf16.mxu0 0
      %1065 = vmatpush1.bf16.msra.mxu0 0
      %1066 = vmatprep.subr.bf16.mxu0 0
      %1067 = vmatpush1.bf16.msra.mxu0 0
      %1068 = vmatprep.subr.bf16.mxu0 0
      %1069 = vmatpush1.bf16.msra.mxu0 0
      %1070 = vmatprep.subr.bf16.mxu0 0
      %1071 = vmatpush1.bf16.msra.mxu0 0
      %1072 = vmatprep.subr.bf16.mxu0 0
      %1073 = vmatpush1.bf16.msra.mxu0 %v1056
      %1074 = vmatprep.subr.bf16.mxu0 0
      %1075 = vmatpush2.bf16.msra.mxu0 0
      %1076 = vmatprep.subr.bf16.mxu0 0
      %1077 = vmatpush2.bf16.msra.mxu0 0
      %1078 = vmatprep.subr.bf16.mxu0 0
      %1079 = vmatpush2.bf16.msra.mxu0 0
      %1080 = vmatprep.subr.bf16.mxu0 0
      %1081 = vmatpush2.bf16.msra.mxu0 0
      %1082 = vmatprep.subr.bf16.mxu0 0
      %1083 = vmatpush2.bf16.msra.mxu0 0
      %1084 = vmatprep.subr.bf16.mxu0 0
      %1085 = vmatpush2.bf16.msra.mxu0 0
      %1086 = vmatprep.subr.bf16.mxu0 0
      %1087 = vmatpush2.bf16.msra.mxu0 0
      %1088 = vmatprep.subr.bf16.mxu0 0
      %1089 = vmatpush2.bf16.msra.mxu0 0
      %1090 = vmatprep.mubr.bf16.mxu0 0
      %1091 = vmatmul.mubr.bf16.gmra.mxu0 %v1044
      %v1092 = vpop.f32.mrf.mxu0
      %v1093 = vadd.f32 0.0, %v1092
      %v1094 = vpop.f32.mrf.mxu0
      %v1095 = vpop.f32.mrf.mxu0
      %v1096 = vadd.f32 0.0, %v1095
      %v1097 = vpop.f32.mrf.mxu0
      %1098 = vmatprep.mubr.bf16.mxu0 0
      %1099 = vmatmul.mubr.bf16.gmra.mxu0 %v1047
      %v1100 = vpop.f32.mrf.mxu0
      %v1101 = vadd.f32 0.0, %v1100
      %v1102 = vpop.f32.mrf.mxu0
      %v1103 = vpop.f32.mrf.mxu0
      %v1104 = vadd.f32 0.0, %v1103
      %v1105 = vpop.f32.mrf.mxu0
      %1106 = vmatprep.mubr.bf16.mxu0 0
      %1107 = vmatmul.mubr.bf16.gmra.mxu0 %v1050
      %v1108 = vpop.f32.mrf.mxu0
      %v1109 = vadd.f32 0.0, %v1108
      %v1110 = vpop.f32.mrf.mxu0
      %v1111 = vpop.f32.mrf.mxu0
      %v1112 = vadd.f32 0.0, %v1111
      %v1113 = vpop.f32.mrf.mxu0
      %1114 = vmatprep.mubr.bf16.mxu0 0
      %1115 = vmatmul.mubr.bf16.gmra.mxu0 %v1053
      %v1116 = vpop.f32.mrf.mxu0
      %v1117 = vadd.f32 0.0, %v1116
      %v1118 = vpop.f32.mrf.mxu0
      %v1119 = vpop.f32.mrf.mxu0
      %v1120 = vadd.f32 0.0, %v1119
      %v1121 = vpop.f32.mrf.mxu0
      %1122 = vdwg.mxu0
      %v1123 = vadd.f32 %v893, %v1093
      %v1124 = vadd.f32 %v894, %v1096
      %v1125 = vadd.f32 %v895, %v1101
      %v1126 = vadd.f32 %v896, %v1104
      %v1127 = vadd.f32 %v897, %v1109
      %v1128 = vadd.f32 %v898, %v1112
      %v1129 = vadd.f32 %v899, %v1117
      %v1130 = vadd.f32 %v900, %v1120
      %s1131 = sadd.s32 %s195, 1
      %s1132 = smul.u32 %s1131, 2
      %s1133 = smul.addr %s1132, 4
      %s1134 = scalar_lea.vmem %s183, %s1133
      %v1135 = vld [vmem:[%s1134] sm:$0xf]
      %v1136 = vld [vmem:[%s1134 + $0x8] sm:$0xf]
      %v1137 = vld [vmem:[%s1134 + $0x10] sm:$0xf]
      %v1138 = vld [vmem:[%s1134 + $0x18] sm:$0xf]
      %v1139 = vld [vmem:[%s1134 + $0x20] sm:$0xf]
      %v1140 = vld [vmem:[%s1134 + $0x28] sm:$0xf]
      %v1141 = vld [vmem:[%s1134 + $0x30] sm:$0xf]
      %v1142 = vld [vmem:[%s1134 + $0x38] sm:$0xf]
      %s1143 = scalar_lea.vmem %s1, 12
      %v1144 = vld [vmem:[%s1143] sm:$0x3]
      %v1153 = vunpack.c.l.b16 %v1135
      %v1154 = vunpack.c.l.b16 %v1136
      %v1155 = vunpack.c.l.b16 %v1137
      %v1156 = vunpack.c.l.b16 %v1138
      %v1157 = vunpack.c.l.b16 %v1139
      %v1158 = vunpack.c.l.b16 %v1140
      %v1159 = vunpack.c.l.b16 %v1141
      %v1160 = vunpack.c.l.b16 %v1142
      %v1161 = vpack.c.b16 %v1154, %v1153
      %v1162 = vpack.c.b16 %v1156, %v1155
      %v1163 = vpack.c.b16 %v1158, %v1157
      %v1164 = vpack.c.b16 %v1160, %v1159
      %v1166 = vsel %vm241, %v1161, 0
      %v1169 = vsel %vm241, %v1162, 0
      %v1172 = vsel %vm241, %v1163, 0
      %v1175 = vsel %vm241, %v1164, 0
      %v1178 = vand.u32 %v1144, %v257
      %1180 = vmatprep.subr.bf16.mxu0 0
      %1181 = vmatpush1.bf16.msra.mxu0 0
      %1182 = vmatprep.subr.bf16.mxu0 0
      %1183 = vmatpush1.bf16.msra.mxu0 0
      %1184 = vmatprep.subr.bf16.mxu0 0
      %1185 = vmatpush1.bf16.msra.mxu0 0
      %1186 = vmatprep.subr.bf16.mxu0 0
      %1187 = vmatpush1.bf16.msra.mxu0 0
      %1188 = vmatprep.subr.bf16.mxu0 0
      %1189 = vmatpush1.bf16.msra.mxu0 0
      %1190 = vmatprep.subr.bf16.mxu0 0
      %1191 = vmatpush1.bf16.msra.mxu0 0
      %1192 = vmatprep.subr.bf16.mxu0 0
      %1193 = vmatpush1.bf16.msra.mxu0 0
      %1194 = vmatprep.subr.bf16.mxu0 0
      %1195 = vmatpush1.bf16.msra.mxu0 %v1178
      %1196 = vmatprep.subr.bf16.mxu0 0
      %1197 = vmatpush2.bf16.msra.mxu0 0
      %1198 = vmatprep.subr.bf16.mxu0 0
      %1199 = vmatpush2.bf16.msra.mxu0 0
      %1200 = vmatprep.subr.bf16.mxu0 0
      %1201 = vmatpush2.bf16.msra.mxu0 0
      %1202 = vmatprep.subr.bf16.mxu0 0
      %1203 = vmatpush2.bf16.msra.mxu0 0
      %1204 = vmatprep.subr.bf16.mxu0 0
      %1205 = vmatpush2.bf16.msra.mxu0 0
      %1206 = vmatprep.subr.bf16.mxu0 0
      %1207 = vmatpush2.bf16.msra.mxu0 0
      %1208 = vmatprep.subr.bf16.mxu0 0
      %1209 = vmatpush2.bf16.msra.mxu0 0
      %1210 = vmatprep.subr.bf16.mxu0 0
      %1211 = vmatpush2.bf16.msra.mxu0 0
      %1212 = vmatprep.mubr.bf16.mxu0 0
      %1213 = vmatmul.mubr.bf16.gmra.mxu0 %v1166
      %v1214 = vpop.f32.mrf.mxu0
      %v1215 = vadd.f32 0.0, %v1214
      %v1216 = vpop.f32.mrf.mxu0
      %v1217 = vpop.f32.mrf.mxu0
      %v1218 = vadd.f32 0.0, %v1217
      %v1219 = vpop.f32.mrf.mxu0
      %1220 = vmatprep.mubr.bf16.mxu0 0
      %1221 = vmatmul.mubr.bf16.gmra.mxu0 %v1169
      %v1222 = vpop.f32.mrf.mxu0
      %v1223 = vadd.f32 0.0, %v1222
      %v1224 = vpop.f32.mrf.mxu0
      %v1225 = vpop.f32.mrf.mxu0
      %v1226 = vadd.f32 0.0, %v1225
      %v1227 = vpop.f32.mrf.mxu0
      %1228 = vmatprep.mubr.bf16.mxu0 0
      %1229 = vmatmul.mubr.bf16.gmra.mxu0 %v1172
      %v1230 = vpop.f32.mrf.mxu0
      %v1231 = vadd.f32 0.0, %v1230
      %v1232 = vpop.f32.mrf.mxu0
      %v1233 = vpop.f32.mrf.mxu0
      %v1234 = vadd.f32 0.0, %v1233
      %v1235 = vpop.f32.mrf.mxu0
      %1236 = vmatprep.mubr.bf16.mxu0 0
      %1237 = vmatmul.mubr.bf16.gmra.mxu0 %v1175
      %v1238 = vpop.f32.mrf.mxu0
      %v1239 = vadd.f32 0.0, %v1238
      %v1240 = vpop.f32.mrf.mxu0
      %v1241 = vpop.f32.mrf.mxu0
      %v1242 = vadd.f32 0.0, %v1241
      %v1243 = vpop.f32.mrf.mxu0
      %1244 = vdwg.mxu0
      %v1245 = vadd.f32 %v1123, %v1215
      %v1246 = vadd.f32 %v1124, %v1218
      %v1247 = vadd.f32 %v1125, %v1223
      %v1248 = vadd.f32 %v1126, %v1226
      %v1249 = vadd.f32 %v1127, %v1231
      %v1250 = vadd.f32 %v1128, %v1234
      %v1251 = vadd.f32 %v1129, %v1239
      %v1252 = vadd.f32 %v1130, %v1242
      %s1253 = sadd.s32 %s1132, 18
      %s1254 = smul.addr %s1253, 4
      %s1255 = scalar_lea.vmem %s183, %s1254
      %v1256 = vld [vmem:[%s1255] sm:$0xf]
      %v1257 = vld [vmem:[%s1255 + $0x8] sm:$0xf]
      %v1258 = vld [vmem:[%s1255 + $0x10] sm:$0xf]
      %v1259 = vld [vmem:[%s1255 + $0x18] sm:$0xf]
      %v1260 = vld [vmem:[%s1255 + $0x20] sm:$0xf]
      %v1261 = vld [vmem:[%s1255 + $0x28] sm:$0xf]
      %v1262 = vld [vmem:[%s1255 + $0x30] sm:$0xf]
      %v1263 = vld [vmem:[%s1255 + $0x38] sm:$0xf]
      %s1264 = scalar_lea.vmem %s1, 14
      %v1265 = vld [vmem:[%s1264] sm:$0x3]
      %v1274 = vunpack.c.l.b16 %v1256
      %v1275 = vunpack.c.l.b16 %v1257
      %v1276 = vunpack.c.l.b16 %v1258
      %v1277 = vunpack.c.l.b16 %v1259
      %v1278 = vunpack.c.l.b16 %v1260
      %v1279 = vunpack.c.l.b16 %v1261
      %v1280 = vunpack.c.l.b16 %v1262
      %v1281 = vunpack.c.l.b16 %v1263
      %v1282 = vpack.c.b16 %v1275, %v1274
      %v1283 = vpack.c.b16 %v1277, %v1276
      %v1284 = vpack.c.b16 %v1279, %v1278
      %v1285 = vpack.c.b16 %v1281, %v1280
      %v1287 = vsel %vm241, %v1282, 0
      %v1290 = vsel %vm241, %v1283, 0
      %v1293 = vsel %vm241, %v1284, 0
      %v1296 = vsel %vm241, %v1285, 0
      %v1299 = vand.u32 %v1265, %v257
      %1301 = vmatprep.subr.bf16.mxu0 0
      %1302 = vmatpush1.bf16.msra.mxu0 0
      %1303 = vmatprep.subr.bf16.mxu0 0
      %1304 = vmatpush1.bf16.msra.mxu0 0
      %1305 = vmatprep.subr.bf16.mxu0 0
      %1306 = vmatpush1.bf16.msra.mxu0 0
      %1307 = vmatprep.subr.bf16.mxu0 0
      %1308 = vmatpush1.bf16.msra.mxu0 0
      %1309 = vmatprep.subr.bf16.mxu0 0
      %1310 = vmatpush1.bf16.msra.mxu0 0
      %1311 = vmatprep.subr.bf16.mxu0 0
      %1312 = vmatpush1.bf16.msra.mxu0 0
      %1313 = vmatprep.subr.bf16.mxu0 0
      %1314 = vmatpush1.bf16.msra.mxu0 0
      %1315 = vmatprep.subr.bf16.mxu0 0
      %1316 = vmatpush1.bf16.msra.mxu0 %v1299
      %1317 = vmatprep.subr.bf16.mxu0 0
      %1318 = vmatpush2.bf16.msra.mxu0 0
      %1319 = vmatprep.subr.bf16.mxu0 0
      %1320 = vmatpush2.bf16.msra.mxu0 0
      %1321 = vmatprep.subr.bf16.mxu0 0
      %1322 = vmatpush2.bf16.msra.mxu0 0
      %1323 = vmatprep.subr.bf16.mxu0 0
      %1324 = vmatpush2.bf16.msra.mxu0 0
      %1325 = vmatprep.subr.bf16.mxu0 0
      %1326 = vmatpush2.bf16.msra.mxu0 0
      %1327 = vmatprep.subr.bf16.mxu0 0
      %1328 = vmatpush2.bf16.msra.mxu0 0
      %1329 = vmatprep.subr.bf16.mxu0 0
      %1330 = vmatpush2.bf16.msra.mxu0 0
      %1331 = vmatprep.subr.bf16.mxu0 0
      %1332 = vmatpush2.bf16.msra.mxu0 0
      %1333 = vmatprep.mubr.bf16.mxu0 0
      %1334 = vmatmul.mubr.bf16.gmra.mxu0 %v1287
      %v1335 = vpop.f32.mrf.mxu0
      %v1336 = vadd.f32 0.0, %v1335
      %v1337 = vpop.f32.mrf.mxu0
      %v1338 = vpop.f32.mrf.mxu0
      %v1339 = vadd.f32 0.0, %v1338
      %v1340 = vpop.f32.mrf.mxu0
      %1341 = vmatprep.mubr.bf16.mxu0 0
      %1342 = vmatmul.mubr.bf16.gmra.mxu0 %v1290
      %v1343 = vpop.f32.mrf.mxu0
      %v1344 = vadd.f32 0.0, %v1343
      %v1345 = vpop.f32.mrf.mxu0
      %v1346 = vpop.f32.mrf.mxu0
      %v1347 = vadd.f32 0.0, %v1346
      %v1348 = vpop.f32.mrf.mxu0
      %1349 = vmatprep.mubr.bf16.mxu0 0
      %1350 = vmatmul.mubr.bf16.gmra.mxu0 %v1293
      %v1351 = vpop.f32.mrf.mxu0
      %v1352 = vadd.f32 0.0, %v1351
      %v1353 = vpop.f32.mrf.mxu0
      %v1354 = vpop.f32.mrf.mxu0
      %v1355 = vadd.f32 0.0, %v1354
      %v1356 = vpop.f32.mrf.mxu0
      %1357 = vmatprep.mubr.bf16.mxu0 0
      %1358 = vmatmul.mubr.bf16.gmra.mxu0 %v1296
      %v1359 = vpop.f32.mrf.mxu0
      %v1360 = vadd.f32 0.0, %v1359
      %v1361 = vpop.f32.mrf.mxu0
      %v1362 = vpop.f32.mrf.mxu0
      %v1363 = vadd.f32 0.0, %v1362
      %v1364 = vpop.f32.mrf.mxu0
      %1365 = vdwg.mxu0
      %v1366 = vadd.f32 %v1245, %v1336
      %v1367 = vadd.f32 %v1246, %v1339
      %v1368 = vadd.f32 %v1247, %v1344
      %v1369 = vadd.f32 %v1248, %v1347
      %v1370 = vadd.f32 %v1249, %v1352
      %v1371 = vadd.f32 %v1250, %v1355
      %v1372 = vadd.f32 %v1251, %v1360
      %v1373 = vadd.f32 %v1252, %v1363
      %v1374 = vld [vmem:[%s1134] sm:$0xf]
      %v1375 = vld [vmem:[%s1134 + $0x4] sm:$0x1]
      %v1376 = vld [vmem:[%s1134 + $0x8] sm:$0xf]
      %v1377 = vld [vmem:[%s1134 + $0xc] sm:$0x1]
      %v1378 = vld [vmem:[%s1134 + $0x10] sm:$0xf]
      %v1379 = vld [vmem:[%s1134 + $0x14] sm:$0x1]
      %v1380 = vld [vmem:[%s1134 + $0x18] sm:$0xf]
      %v1381 = vld [vmem:[%s1134 + $0x1c] sm:$0x1]
      %v1382 = vld [vmem:[%s1134 + $0x20] sm:$0xf]
      %v1383 = vld [vmem:[%s1134 + $0x24] sm:$0x1]
      %v1384 = vld [vmem:[%s1134 + $0x28] sm:$0xf]
      %v1385 = vld [vmem:[%s1134 + $0x2c] sm:$0x1]
      %v1386 = vld [vmem:[%s1134 + $0x30] sm:$0xf]
      %v1387 = vld [vmem:[%s1134 + $0x34] sm:$0x1]
      %v1388 = vld [vmem:[%s1134 + $0x38] sm:$0xf]
      %v1389 = vld [vmem:[%s1134 + $0x3c] sm:$0x1]
      %v1391 = vshrl.u32 %v1374, 16
      %v1393 = vrot.slane %v1391, 4
      %v1394 = vshll.u32 %v1374, 16
      %v1396 = vrot.slane %v1394, 5
      %v1397 = vor.u32 %v1393, %v1396
      %v1398 = vrot.slane %v1397, 4
      %v1400 = vshll.u32 %v1375, 16
      %v1402 = vrot.slane %v1400, 5
      %v1403 = vsel %vm444, %v1398, %v1402
      %v1405 = vshrl.u32 %v1376, 16
      %v1407 = vrot.slane %v1405, 4
      %v1408 = vshll.u32 %v1376, 16
      %v1410 = vrot.slane %v1408, 5
      %v1411 = vor.u32 %v1407, %v1410
      %v1412 = vrot.slane %v1411, 4
      %v1414 = vshll.u32 %v1377, 16
      %v1416 = vrot.slane %v1414, 5
      %v1417 = vsel %vm444, %v1412, %v1416
      %v1419 = vshrl.u32 %v1378, 16
      %v1421 = vrot.slane %v1419, 4
      %v1422 = vshll.u32 %v1378, 16
      %v1424 = vrot.slane %v1422, 5
      %v1425 = vor.u32 %v1421, %v1424
      %v1426 = vrot.slane %v1425, 4
      %v1428 = vshll.u32 %v1379, 16
      %v1430 = vrot.slane %v1428, 5
      %v1431 = vsel %vm444, %v1426, %v1430
      %v1433 = vshrl.u32 %v1380, 16
      %v1435 = vrot.slane %v1433, 4
      %v1436 = vshll.u32 %v1380, 16
      %v1438 = vrot.slane %v1436, 5
      %v1439 = vor.u32 %v1435, %v1438
      %v1440 = vrot.slane %v1439, 4
      %v1442 = vshll.u32 %v1381, 16
      %v1444 = vrot.slane %v1442, 5
      %v1445 = vsel %vm444, %v1440, %v1444
      %v1447 = vshrl.u32 %v1382, 16
      %v1449 = vrot.slane %v1447, 4
      %v1450 = vshll.u32 %v1382, 16
      %v1452 = vrot.slane %v1450, 5
      %v1453 = vor.u32 %v1449, %v1452
      %v1454 = vrot.slane %v1453, 4
      %v1456 = vshll.u32 %v1383, 16
      %v1458 = vrot.slane %v1456, 5
      %v1459 = vsel %vm444, %v1454, %v1458
      %v1461 = vshrl.u32 %v1384, 16
      %v1463 = vrot.slane %v1461, 4
      %v1464 = vshll.u32 %v1384, 16
      %v1466 = vrot.slane %v1464, 5
      %v1467 = vor.u32 %v1463, %v1466
      %v1468 = vrot.slane %v1467, 4
      %v1470 = vshll.u32 %v1385, 16
      %v1472 = vrot.slane %v1470, 5
      %v1473 = vsel %vm444, %v1468, %v1472
      %v1475 = vshrl.u32 %v1386, 16
      %v1477 = vrot.slane %v1475, 4
      %v1478 = vshll.u32 %v1386, 16
      %v1480 = vrot.slane %v1478, 5
      %v1481 = vor.u32 %v1477, %v1480
      %v1482 = vrot.slane %v1481, 4
      %v1484 = vshll.u32 %v1387, 16
      %v1486 = vrot.slane %v1484, 5
      %v1487 = vsel %vm444, %v1482, %v1486
      %v1489 = vshrl.u32 %v1388, 16
      %v1491 = vrot.slane %v1489, 4
      %v1492 = vshll.u32 %v1388, 16
      %v1494 = vrot.slane %v1492, 5
      %v1495 = vor.u32 %v1491, %v1494
      %v1496 = vrot.slane %v1495, 4
      %v1498 = vshll.u32 %v1389, 16
      %v1500 = vrot.slane %v1498, 5
      %v1501 = vsel %vm444, %v1496, %v1500
      %s1502 = scalar_lea.vmem %s1, 16
      %v1503 = vld [vmem:[%s1502] sm:$0x3]
      %v1504 = vunpack.c.l.b16 %v1403
      %v1505 = vunpack.c.l.b16 %v1417
      %v1506 = vunpack.c.l.b16 %v1431
      %v1507 = vunpack.c.l.b16 %v1445
      %v1508 = vunpack.c.l.b16 %v1459
      %v1509 = vunpack.c.l.b16 %v1473
      %v1510 = vunpack.c.l.b16 %v1487
      %v1511 = vunpack.c.l.b16 %v1501
      %v1512 = vpack.c.b16 %v1505, %v1504
      %v1513 = vpack.c.b16 %v1507, %v1506
      %v1514 = vpack.c.b16 %v1509, %v1508
      %v1515 = vpack.c.b16 %v1511, %v1510
      %v1517 = vsel %vm241, %v1512, 0
      %v1520 = vsel %vm241, %v1513, 0
      %v1523 = vsel %vm241, %v1514, 0
      %v1526 = vsel %vm241, %v1515, 0
      %v1529 = vand.u32 %v1503, %v257
      %1531 = vmatprep.subr.bf16.mxu0 0
      %1532 = vmatpush1.bf16.msra.mxu0 0
      %1533 = vmatprep.subr.bf16.mxu0 0
      %1534 = vmatpush1.bf16.msra.mxu0 0
      %1535 = vmatprep.subr.bf16.mxu0 0
      %1536 = vmatpush1.bf16.msra.mxu0 0
      %1537 = vmatprep.subr.bf16.mxu0 0
      %1538 = vmatpush1.bf16.msra.mxu0 0
      %1539 = vmatprep.subr.bf16.mxu0 0
      %1540 = vmatpush1.bf16.msra.mxu0 0
      %1541 = vmatprep.subr.bf16.mxu0 0
      %1542 = vmatpush1.bf16.msra.mxu0 0
      %1543 = vmatprep.subr.bf16.mxu0 0
      %1544 = vmatpush1.bf16.msra.mxu0 0
      %1545 = vmatprep.subr.bf16.mxu0 0
      %1546 = vmatpush1.bf16.msra.mxu0 %v1529
      %1547 = vmatprep.subr.bf16.mxu0 0
      %1548 = vmatpush2.bf16.msra.mxu0 0
      %1549 = vmatprep.subr.bf16.mxu0 0
      %1550 = vmatpush2.bf16.msra.mxu0 0
      %1551 = vmatprep.subr.bf16.mxu0 0
      %1552 = vmatpush2.bf16.msra.mxu0 0
      %1553 = vmatprep.subr.bf16.mxu0 0
      %1554 = vmatpush2.bf16.msra.mxu0 0
      %1555 = vmatprep.subr.bf16.mxu0 0
      %1556 = vmatpush2.bf16.msra.mxu0 0
      %1557 = vmatprep.subr.bf16.mxu0 0
      %1558 = vmatpush2.bf16.msra.mxu0 0
      %1559 = vmatprep.subr.bf16.mxu0 0
      %1560 = vmatpush2.bf16.msra.mxu0 0
      %1561 = vmatprep.subr.bf16.mxu0 0
      %1562 = vmatpush2.bf16.msra.mxu0 0
      %1563 = vmatprep.mubr.bf16.mxu0 0
      %1564 = vmatmul.mubr.bf16.gmra.mxu0 %v1517
      %v1565 = vpop.f32.mrf.mxu0
      %v1566 = vadd.f32 0.0, %v1565
      %v1567 = vpop.f32.mrf.mxu0
      %v1568 = vpop.f32.mrf.mxu0
      %v1569 = vadd.f32 0.0, %v1568
      %v1570 = vpop.f32.mrf.mxu0
      %1571 = vmatprep.mubr.bf16.mxu0 0
      %1572 = vmatmul.mubr.bf16.gmra.mxu0 %v1520
      %v1573 = vpop.f32.mrf.mxu0
      %v1574 = vadd.f32 0.0, %v1573
      %v1575 = vpop.f32.mrf.mxu0
      %v1576 = vpop.f32.mrf.mxu0
      %v1577 = vadd.f32 0.0, %v1576
      %v1578 = vpop.f32.mrf.mxu0
      %1579 = vmatprep.mubr.bf16.mxu0 0
      %1580 = vmatmul.mubr.bf16.gmra.mxu0 %v1523
      %v1581 = vpop.f32.mrf.mxu0
      %v1582 = vadd.f32 0.0, %v1581
      %v1583 = vpop.f32.mrf.mxu0
      %v1584 = vpop.f32.mrf.mxu0
      %v1585 = vadd.f32 0.0, %v1584
      %v1586 = vpop.f32.mrf.mxu0
      %1587 = vmatprep.mubr.bf16.mxu0 0
      %1588 = vmatmul.mubr.bf16.gmra.mxu0 %v1526
      %v1589 = vpop.f32.mrf.mxu0
      %v1590 = vadd.f32 0.0, %v1589
      %v1591 = vpop.f32.mrf.mxu0
      %v1592 = vpop.f32.mrf.mxu0
      %v1593 = vadd.f32 0.0, %v1592
      %v1594 = vpop.f32.mrf.mxu0
      %1595 = vdwg.mxu0
      %v1596 = vadd.f32 %v1366, %v1566
      %v1597 = vadd.f32 %v1367, %v1569
      %v1598 = vadd.f32 %v1368, %v1574
      %v1599 = vadd.f32 %v1369, %v1577
      %v1600 = vadd.f32 %v1370, %v1582
      %v1601 = vadd.f32 %v1371, %v1585
      %v1602 = vadd.f32 %v1372, %v1590
      %v1603 = vadd.f32 %v1373, %v1593
      %v1604 = vld [vmem:[%s2] sm:$0x1]
      %v1606 = vlaneseq
      %v1607 = vshrl.u32 %v1606, 7
      %v1608 = vsub.s32 0, %v1607
      %v1609 = vrot.slane %v1604, %v1608
      %v1611 = vadd.f32 %v1596, %v1609
      %v1612 = vadd.f32 %v1597, %v1609
      %v1613 = vadd.f32 %v1598, %v1609
      %v1614 = vadd.f32 %v1599, %v1609
      %v1615 = vadd.f32 %v1600, %v1609
      %v1616 = vadd.f32 %v1601, %v1609
      %v1617 = vadd.f32 %v1602, %v1609
      %v1618 = vadd.f32 %v1603, %v1609
      %v1619 = vmax.f32 %v1611, 0.0
      %v1620 = vmax.f32 %v1612, 0.0
      %v1621 = vmax.f32 %v1613, 0.0
      %v1622 = vmax.f32 %v1614, 0.0
      %v1623 = vmax.f32 %v1615, 0.0
      %v1624 = vmax.f32 %v1616, 0.0
      %v1625 = vmax.f32 %v1617, 0.0
      %v1626 = vmax.f32 %v1618, 0.0
      %vm1627 = vcmask 64512
      %1628 = vst.msk [vmem:[%s192] sm:$0xff] %vm1627, %v1619
      %1629 = vst.msk [vmem:[%s192 + $0x8] sm:$0xff] %vm1627, %v1620
      %1630 = vst.msk [vmem:[%s192 + $0x10] sm:$0xff] %vm1627, %v1621
      %1631 = vst.msk [vmem:[%s192 + $0x18] sm:$0xff] %vm1627, %v1622
      %1632 = vst.msk [vmem:[%s192 + $0x20] sm:$0xff] %vm1627, %v1623
      %1633 = vst.msk [vmem:[%s192 + $0x28] sm:$0xff] %vm1627, %v1624
      %1634 = vst.msk [vmem:[%s192 + $0x30] sm:$0xff] %vm1627, %v1625
      %1635 = vst.msk [vmem:[%s192 + $0x38] sm:$0xff] %vm1627, %v1626
      %s1636 = smul.u32 8, %s19
      %p1637 = scmp.lt.s32.totalorder %s18, 1
      %s1638 = scalar_select %p1637, %s18, 1
      %p1639 = scmp.lt.s32.totalorder %s1636, 7
      %s1640 = scalar_select %p1639, %s1636, 7
      %s1641 = smul.addr %s1638, 8
      %s1642 = sadd.s32 %s1640, %s1641
      %s1643 = smul.addr %s1642, 8
      %s1644 = scalar_lea.vmem %s3, %s1643
      // Predicated region
      $region33: #{a_call__.4} parent=31 // pred_check
        %p1645 = pneg %p114
      $region34: #{a_call__.4} parent=31 // pred_check_branch
        %1647 = sbr.rel (%p1645) target = $region36
      $region35: #{a_call__.4} parent=31 // pred_region
        %s1648 = smul.u32 8, %s19
      $region36: #{a_call__.4} parent=31 // pred_fallthru
        _
    $region32: #{a_call__.4} parent=5 // pred_fallthru
      _
    %p1649 = scmp.le.s32.totalorder 2, %s9
    // Predicated region
    $region37: #{a_call__.4} parent=5 // pred_check
      %p1650 = pneg %p1649
    $region38: #{a_call__.4} parent=5 // pred_check_branch
      %1652 = sbr.rel (%p1650) target = $region40
    $region39: #{a_call__.4} parent=5 // pred_region
      %s1653 = ssub.s32 %s9, 2
      // Predicated region
      $region41: #{a_call__.4} parent=39 // pred_check
        %p1654 = pneg %p120
      $region42: #{a_call__.4} parent=39 // pred_check_branch
        %1656 = sbr.rel (%p1654) target = $region44
      $region43: #{a_call__.4} parent=39 // pred_region
        %s1657 = smul.u32 8, %s21
        %p1658 = scmp.lt.s32.totalorder %s20, 1
        %s1659 = scalar_select %p1658, %s20, 1
        %p1660 = scmp.lt.s32.totalorder %s1657, 7
        %s1661 = scalar_select %p1660, %s1657, 7
        %s1662 = smul.addr %s1659, 8
        %s1663 = sadd.s32 %s1661, %s1662
        %s1664 = smul.addr %s1663, 8
        %s1665 = scalar_lea.vmem %s3, %s1664
      $region44: #{a_call__.4} parent=39 // pred_fallthru
        _
    $region40: #{a_call__.4} parent=5 // pred_fallthru
      _
  $region6: #{a_call__.4} parent=0 // loop_footer
    %s13 = sadd.s32 1, %s9
  $region7: #{a_call__.4} parent=0 // loop_footer_branch
    %8 = sbr.rel target = $region3
  $region8: #{a_call__.4} parent=0 // loop_exit
    _

// kernel: a_call__.6
$region0: #{a_call__.6}
  #allocation0 [shape = 'u32[]', space=smem, size = 0x4, offset = 0x4, fixed_abs, tag = 'smem constant byte address 0x4 - core index']
  #allocation1 [shape = 'u32[144,128]{1,0:T(1,128)}', space=vmem, size = 0x12000, scoped, tag = 'internal scratch']
  %s0 = inlined_call_operand.vmem [shape: bf16[2,4,3,9,16], index: 0, kind: input, shape index: {}]
  %s1 = inlined_call_operand.vmem [shape: bf16[9,16,32], index: 1, kind: input, shape index: {}]
  %s2 = inlined_call_operand.vmem [shape: f32[1,32], index: 2, kind: input, shape index: {}]
  %s3 = inlined_call_operand.vmem [shape: f32[2,2,8,32], index: 3, kind: output, shape index: {}]
  %s4 = sld [smem:[#allocation0]]
  $region45: #{a_call__.6} parent=0
    _
  %s6 = ssub.s32 1, %s4
  %s7 = scalar_select 0, %s6, %s4
  loop: start=0, step=1, limit=4
  $region2: #{a_call__.6} parent=0 // loop_pre_header
    _
  $region3: #{a_call__.6} parent=0 // loop_header
    %s9 = sphi 0, %s13
    %p10 = scmp.ge.s32.totalorder %s9, 4
    %s16 = sphi 0, %s28
    %s17 = sphi 0, %s24
    %s18 = sphi 0, %s16
    %s19 = sphi 0, %s17
    %s20 = sphi 0, %s18
    %s21 = sphi 0, %s19
    %s31 = sphi 0, %s33
    %s34 = sphi 0, %s31
    %s35 = sphi 0, %s34
    %s51 = sphi 0, %s35
    %s55 = sphi 0, %s55
    %s57 = sphi 0, %s55
    %s58 = sphi 0, %s57
    %s72 = sphi 0, %s58
    %s76 = sphi 0, %s76
    %s78 = sphi 0, %s76
    %s79 = sphi 0, %s78
    %s93 = sphi 0, %s79
    %s101 = sphi 0, %s103
    %s104 = sphi 0, %s101
    %s105 = sphi 0, %s104
    %s121 = sphi 0, %s105
  $region4: #{a_call__.6} parent=0 // loop_header_branch
    %12 = sbr.rel (%p10) target = $region8
  $region5: #{a_call__.6} parent=0 // loop_body
    %s14 = ssub.s32 %s9, 1
    %s15 = ssub.s32 %s9, 2
    %s22 = sadd.s32 1, %s17
    %p23 = scmp.ge.s32.totalorder %s22, 1
    %s24 = scalar_select %p23, 0, %s22
    %s25 = sadd.s32 1, %s16
    %s26 = scalar_select %p23, %s25, %s16
    %p27 = scmp.ge.s32.totalorder %s26, 2
    %s28 = scalar_select %p27, 0, %s26
    %s29 = ssub.s32 %s16, %s28
    %p30 = scmp.eq.s32.totalorder %s29, 0
    %s32 = sadd.s32 %s31, 1
    %s33 = scalar_select %p30, %s31, %s32
    %p36 = pneg %p30
    %p37 = scmp.eq.s32.totalorder %s9, 1
    %p38 = por %p36, %p37
    %p39 = scmp.ne.s32.totalorder %s31, %s34
    %p40 = scmp.eq.s32.totalorder %s9, 0
    %p41 = por %p39, %p40
    %p42 = scmp.ne.s32.totalorder %s31, %s34
    %p43 = scmp.eq.s32.totalorder %s14, 1
    %p44 = por %p42, %p43
    %p45 = scmp.ne.s32.totalorder %s34, %s35
    %p46 = scmp.eq.s32.totalorder %s14, 0
    %p47 = por %p45, %p46
    %p48 = scmp.ne.s32.totalorder %s34, %s35
    %p49 = scmp.eq.s32.totalorder %s15, 1
    %p50 = por %p48, %p49
    %p52 = scmp.ne.s32.totalorder %s35, %s51
    %p53 = scmp.eq.s32.totalorder %s15, 0
    %p54 = por %p52, %p53
    %s56 = sadd.s32 %s55, 1
    %p59 = scmp.eq.s32.totalorder %s9, 1
    %p60 = scmp.ne.s32.totalorder %s55, %s57
    %p61 = scmp.eq.s32.totalorder %s9, 0
    %p62 = por %p60, %p61
    %p63 = scmp.ne.s32.totalorder %s55, %s57
    %p64 = scmp.eq.s32.totalorder %s14, 1
    %p65 = por %p63, %p64
    %p66 = scmp.ne.s32.totalorder %s57, %s58
    %p67 = scmp.eq.s32.totalorder %s14, 0
    %p68 = por %p66, %p67
    %p69 = scmp.ne.s32.totalorder %s57, %s58
    %p70 = scmp.eq.s32.totalorder %s15, 1
    %p71 = por %p69, %p70
    %p73 = scmp.ne.s32.totalorder %s58, %s72
    %p74 = scmp.eq.s32.totalorder %s15, 0
    %p75 = por %p73, %p74
    %s77 = sadd.s32 %s76, 1
    %p80 = scmp.eq.s32.totalorder %s9, 1
    %p81 = scmp.ne.s32.totalorder %s76, %s78
    %p82 = scmp.eq.s32.totalorder %s9, 0
    %p83 = por %p81, %p82
    %p84 = scmp.ne.s32.totalorder %s76, %s78
    %p85 = scmp.eq.s32.totalorder %s14, 1
    %p86 = por %p84, %p85
    %p87 = scmp.ne.s32.totalorder %s78, %s79
    %p88 = scmp.eq.s32.totalorder %s14, 0
    %p89 = por %p87, %p88
    %p90 = scmp.ne.s32.totalorder %s78, %s79
    %p91 = scmp.eq.s32.totalorder %s15, 1
    %p92 = por %p90, %p91
    %p94 = scmp.ne.s32.totalorder %s79, %s93
    %p95 = scmp.eq.s32.totalorder %s15, 0
    %p96 = por %p94, %p95
    %s97 = ssub.s32 %s16, %s28
    %s98 = ssub.s32 %s17, %s24
    %s99 = sor.u32 %s97, %s98
    %p100 = scmp.eq.s32.totalorder %s99, 0
    %s102 = sadd.s32 %s101, 1
    %s103 = scalar_select %p100, %s101, %s102
    %p106 = pneg %p100
    %p107 = scmp.eq.s32.totalorder %s9, 1
    %p108 = por %p106, %p107
    %p109 = scmp.ne.s32.totalorder %s101, %s104
    %p110 = scmp.eq.s32.totalorder %s9, 0
    %p111 = por %p109, %p110
    %p112 = scmp.ne.s32.totalorder %s101, %s104
    %p113 = scmp.eq.s32.totalorder %s14, 1
    %p114 = por %p112, %p113
    %p115 = scmp.ne.s32.totalorder %s104, %s105
    %p116 = scmp.eq.s32.totalorder %s14, 0
    %p117 = por %p115, %p116
    %p118 = scmp.ne.s32.totalorder %s104, %s105
    %p119 = scmp.eq.s32.totalorder %s15, 1
    %p120 = por %p118, %p119
    %p122 = scmp.ne.s32.totalorder %s105, %s121
    %p123 = scmp.eq.s32.totalorder %s15, 0
    %p124 = por %p122, %p123
    %p125 = scmp.le.s32.totalorder 1, %s9
    %p126 = scmp.lt.s32.totalorder %s9, 3
    %p127 = pnand %p125, %p126
    %p128 = pneg %p127
    // Predicated region
    $region9: #{a_call__.6} parent=5 // pred_check
      _
    $region10: #{a_call__.6} parent=5 // pred_check_branch
      %130 = sbr.rel (%p127) target = $region12
    $region11: #{a_call__.6} parent=5 // pred_region
      %s131 = ssub.s32 %s9, 1
      // Predicated region
      $region13: #{a_call__.6} parent=11 // pred_check
        %p132 = pneg %p68
      $region14: #{a_call__.6} parent=11 // pred_check_branch
        %134 = sbr.rel (%p132) target = $region16
      $region15: #{a_call__.6} parent=11 // pred_region
        _
      $region16: #{a_call__.6} parent=11 // pred_fallthru
        _
      // Predicated region
      $region17: #{a_call__.6} parent=11 // pred_check
        %p135 = pneg %p89
      $region18: #{a_call__.6} parent=11 // pred_check_branch
        %137 = sbr.rel (%p135) target = $region20
      $region19: #{a_call__.6} parent=11 // pred_region
        _
      $region20: #{a_call__.6} parent=11 // pred_fallthru
        _
    $region12: #{a_call__.6} parent=5 // pred_fallthru
      _
    %p138 = scmp.lt.s32.totalorder %s9, 2
    // Predicated region
    $region21: #{a_call__.6} parent=5 // pred_check
      %p139 = pneg %p138
    $region22: #{a_call__.6} parent=5 // pred_check_branch
      %141 = sbr.rel (%p139) target = $region24
    $region23: #{a_call__.6} parent=5 // pred_region
      // Predicated region
      $region25: #{a_call__.6} parent=23 // pred_check
        %p142 = pneg %p41
      $region26: #{a_call__.6} parent=23 // pred_check_branch
        %144 = sbr.rel (%p142) target = $region28
      $region27: #{a_call__.6} parent=23 // pred_region
        %p145 = scmp.lt.s32.totalorder %s16, 1
        %s146 = scalar_select %p145, %s16, 1
        %s147 = smul.addr %s146, 24
        %s148 = smul.addr %s147, 4
        %s149 = scalar_lea.vmem %s0, %s148
      $region28: #{a_call__.6} parent=23 // pred_fallthru
        _
    $region24: #{a_call__.6} parent=5 // pred_fallthru
      _
    %p150 = scmp.le.s32.totalorder 1, %s9
    %p151 = scmp.lt.s32.totalorder %s9, 3
    %p152 = pnand %p150, %p151
    %p153 = pneg %p152
    // Predicated region
    $region29: #{a_call__.6} parent=5 // pred_check
      _
    $region30: #{a_call__.6} parent=5 // pred_check_branch
      %155 = sbr.rel (%p152) target = $region32
    $region31: #{a_call__.6} parent=5 // pred_region
      %s156 = ssub.s32 %s9, 1
      %p157 = scmp.lt.s32.totalorder %s18, 1
      %s158 = scalar_select %p157, %s18, 1
      %s159 = smul.addr %s158, 24
      %s160 = smul.addr %s159, 4
      %s161 = scalar_lea.vmem %s0, %s160
      %p162 = pneg %p47
      %p163 = pneg %p44
      %p164 = pneg %p68
      %p165 = pneg %p65
      %p166 = pneg %p89
      %p167 = pneg %p86
      %p168 = pneg %p117
      %p169 = pneg %p114
      %s170 = smul.u32 2, %s19
      %p171 = scmp.lt.s32.totalorder %s18, 1
      %s172 = scalar_select %p171, %s18, 1
      %p173 = scmp.lt.s32.totalorder %s170, 1
      %s174 = scalar_select %p173, %s170, 1
      %s175 = smul.addr %s172, 2
      %s176 = sadd.s32 %s174, %s175
      %s177 = smul.addr %s176, 8
      %s178 = scalar_lea.vmem %s3, %s177
      %p179 = scmp.lt.s32.totalorder %s18, 1
      %s180 = scalar_select %p179, %s18, 1
      %s181 = smul.addr %s180, 24
      %s182 = smul.addr %s181, 4
      %s183 = scalar_lea.vmem %s0, %s182
      %s184 = smul.u32 2, %s19
      %p185 = scmp.lt.s32.totalorder %s18, 1
      %s186 = scalar_select %p185, %s18, 1
      %p187 = scmp.lt.s32.totalorder %s184, 1
      %s188 = scalar_select %p187, %s184, 1
      %s189 = smul.addr %s186, 2
      %s190 = sadd.s32 %s188, %s189
      %s191 = smul.addr %s190, 8
      %s192 = scalar_lea.vmem %s3, %s191
      %s193 = smul.u32 2, %s19
      %s195 = smul.u32 %s19, 2
      %s196 = smul.u32 %s195, 2
      %s197 = smul.addr %s196, 4
      %s198 = scalar_lea.vmem %s183, %s197
      %v199 = vld [vmem:[%s198] sm:$0xf]
      %v200 = vld [vmem:[%s198 + $0x8] sm:$0xf]
      %v201 = vld [vmem:[%s1] sm:$0xf]
      %v202 = vld [vmem:[%s1 + $0x4] sm:$0xf]
      %s203 = sadd.s32 %s196, 6
      %s204 = smul.addr %s203, 4
      %s205 = scalar_lea.vmem %s183, %s204
      %v206 = vld [vmem:[%s205] sm:$0xf]
      %v207 = vld [vmem:[%s205 + $0x8] sm:$0xf]
      %s208 = scalar_lea.vmem %s1, 8
      %v209 = vld [vmem:[%s208] sm:$0xf]
      %v210 = vld [vmem:[%s208 + $0x4] sm:$0xf]
      %v213 = vunpack.c.l.b16 %v206
      %v214 = vunpack.c.l.b16 %v207
      %v215 = vpack.c.b16 %v214, %v213
      %v218 = vunpack.c.l.b16 %v209
      %v219 = vunpack.c.l.b16 %v210
      %v220 = vpack.c.b16 %v219, %v218
      %vm222 = vcmask 130048
      %v224 = vsel %vm222, %v215, 0
      %226 = vmatprep.subr.bf16.mxu0 0
      %227 = vmatpush1.bf16.msra.mxu0 0
      %228 = vmatprep.subr.bf16.mxu0 0
      %229 = vmatpush1.bf16.msra.mxu0 0
      %230 = vmatprep.subr.bf16.mxu0 0
      %231 = vmatpush1.bf16.msra.mxu0 0
      %232 = vmatprep.subr.bf16.mxu0 0
      %233 = vmatpush1.bf16.msra.mxu0 0
      %234 = vmatprep.subr.bf16.mxu0 0
      %235 = vmatpush1.bf16.msra.mxu0 0
      %236 = vmatprep.subr.bf16.mxu0 0
      %237 = vmatpush1.bf16.msra.mxu0 0
      %238 = vmatprep.subr.bf16.mxu0 0
      %239 = vmatpush1.bf16.msra.mxu0 0
      %240 = vmatprep.subr.bf16.mxu0 0
      %241 = vmatpush1.bf16.msra.mxu0 %v220
      %242 = vmatprep.subr.bf16.mxu0 0
      %243 = vmatpush2.bf16.msra.mxu0 0
      %244 = vmatprep.subr.bf16.mxu0 0
      %245 = vmatpush2.bf16.msra.mxu0 0
      %246 = vmatprep.subr.bf16.mxu0 0
      %247 = vmatpush2.bf16.msra.mxu0 0
      %248 = vmatprep.subr.bf16.mxu0 0
      %249 = vmatpush2.bf16.msra.mxu0 0
      %250 = vmatprep.subr.bf16.mxu0 0
      %251 = vmatpush2.bf16.msra.mxu0 0
      %252 = vmatprep.subr.bf16.mxu0 0
      %253 = vmatpush2.bf16.msra.mxu0 0
      %254 = vmatprep.subr.bf16.mxu0 0
      %255 = vmatpush2.bf16.msra.mxu0 0
      %256 = vmatprep.subr.bf16.mxu0 0
      %257 = vmatpush2.bf16.msra.mxu0 0
      %258 = vmatprep.mubr.bf16.mxu0 0
      %259 = vmatmul.mubr.bf16.gmra.mxu0 %v224
      %v260 = vpop.f32.mrf.mxu0
      %v261 = vadd.f32 0.0, %v260
      %v262 = vpop.f32.mrf.mxu0
      %v263 = vpop.f32.mrf.mxu0
      %v264 = vadd.f32 0.0, %v263
      %v265 = vpop.f32.mrf.mxu0
      %266 = vdwg.mxu0
      %v269 = vunpack.c.l.b16 %v199
      %v270 = vunpack.c.l.b16 %v200
      %v271 = vpack.c.b16 %v270, %v269
      %v274 = vunpack.c.l.b16 %v201
      %v275 = vunpack.c.l.b16 %v202
      %v276 = vpack.c.b16 %v275, %v274
      %v279 = vsel %vm222, %v271, 0
      %281 = vmatprep.subr.bf16.mxu0 0
      %282 = vmatpush1.bf16.msra.mxu0 0
      %283 = vmatprep.subr.bf16.mxu0 0
      %284 = vmatpush1.bf16.msra.mxu0 0
      %285 = vmatprep.subr.bf16.mxu0 0
      %286 = vmatpush1.bf16.msra.mxu0 0
      %287 = vmatprep.subr.bf16.mxu0 0
      %288 = vmatpush1.bf16.msra.mxu0 0
      %289 = vmatprep.subr.bf16.mxu0 0
      %290 = vmatpush1.bf16.msra.mxu0 0
      %291 = vmatprep.subr.bf16.mxu0 0
      %292 = vmatpush1.bf16.msra.mxu0 0
      %293 = vmatprep.subr.bf16.mxu0 0
      %294 = vmatpush1.bf16.msra.mxu0 0
      %295 = vmatprep.subr.bf16.mxu0 0
      %296 = vmatpush1.bf16.msra.mxu0 %v276
      %297 = vmatprep.subr.bf16.mxu0 0
      %298 = vmatpush2.bf16.msra.mxu0 0
      %299 = vmatprep.subr.bf16.mxu0 0
      %300 = vmatpush2.bf16.msra.mxu0 0
      %301 = vmatprep.subr.bf16.mxu0 0
      %302 = vmatpush2.bf16.msra.mxu0 0
      %303 = vmatprep.subr.bf16.mxu0 0
      %304 = vmatpush2.bf16.msra.mxu0 0
      %305 = vmatprep.subr.bf16.mxu0 0
      %306 = vmatpush2.bf16.msra.mxu0 0
      %307 = vmatprep.subr.bf16.mxu0 0
      %308 = vmatpush2.bf16.msra.mxu0 0
      %309 = vmatprep.subr.bf16.mxu0 0
      %310 = vmatpush2.bf16.msra.mxu0 0
      %311 = vmatprep.subr.bf16.mxu0 0
      %312 = vmatpush2.bf16.msra.mxu0 0
      %313 = vmatprep.mubr.bf16.mxu0 0
      %314 = vmatmul.mubr.bf16.gmra.mxu0 %v279
      %v315 = vpop.f32.mrf.mxu0
      %v316 = vadd.f32 %v261, %v315
      %v317 = vpop.f32.mrf.mxu0
      %v318 = vpop.f32.mrf.mxu0
      %v319 = vadd.f32 %v264, %v318
      %v320 = vpop.f32.mrf.mxu0
      %321 = vdwg.mxu0
      %v322 = vld [vmem:[%s198] sm:$0xf]
      %v323 = vld [vmem:[%s198 + $0x4] sm:$0x1]
      %v324 = vld [vmem:[%s198 + $0x8] sm:$0xf]
      %v325 = vld [vmem:[%s198 + $0xc] sm:$0x1]
      %vm326 = vsmask.f32 3328
      %vm327 = vsmask.f32 7440
      %vm328 = vmor %vm326, %vm327
      %v330 = vshrl.u32 %v322, 16
      %v332 = vrot.slane %v330, 4
      %v333 = vshll.u32 %v322, 16
      %v335 = vrot.slane %v333, 5
      %v336 = vor.u32 %v332, %v335
      %v337 = vrot.slane %v336, 4
      %v339 = vshll.u32 %v323, 16
      %v341 = vrot.slane %v339, 5
      %v342 = vsel %vm328, %v337, %v341
      %v344 = vshrl.u32 %v324, 16
      %v346 = vrot.slane %v344, 4
      %v347 = vshll.u32 %v324, 16
      %v349 = vrot.slane %v347, 5
      %v350 = vor.u32 %v346, %v349
      %v351 = vrot.slane %v350, 4
      %v353 = vshll.u32 %v325, 16
      %v355 = vrot.slane %v353, 5
      %v356 = vsel %vm328, %v351, %v355
      %s357 = scalar_lea.vmem %s1, 16
      %v358 = vld [vmem:[%s357] sm:$0xf]
      %v359 = vld [vmem:[%s357 + $0x4] sm:$0xf]
      %v360 = vunpack.c.l.b16 %v342
      %v361 = vunpack.c.l.b16 %v356
      %v362 = vpack.c.b16 %v361, %v360
      %v365 = vunpack.c.l.b16 %v358
      %v366 = vunpack.c.l.b16 %v359
      %v367 = vpack.c.b16 %v366, %v365
      %v370 = vsel %vm222, %v362, 0
      %372 = vmatprep.subr.bf16.mxu0 0
      %373 = vmatpush1.bf16.msra.mxu0 0
      %374 = vmatprep.subr.bf16.mxu0 0
      %375 = vmatpush1.bf16.msra.mxu0 0
      %376 = vmatprep.subr.bf16.mxu0 0
      %377 = vmatpush1.bf16.msra.mxu0 0
      %378 = vmatprep.subr.bf16.mxu0 0
      %379 = vmatpush1.bf16.msra.mxu0 0
      %380 = vmatprep.subr.bf16.mxu0 0
      %381 = vmatpush1.bf16.msra.mxu0 0
      %382 = vmatprep.subr.bf16.mxu0 0
      %383 = vmatpush1.bf16.msra.mxu0 0
      %384 = vmatprep.subr.bf16.mxu0 0
      %385 = vmatpush1.bf16.msra.mxu0 0
      %386 = vmatprep.subr.bf16.mxu0 0
      %387 = vmatpush1.bf16.msra.mxu0 %v367
      %388 = vmatprep.subr.bf16.mxu0 0
      %389 = vmatpush2.bf16.msra.mxu0 0
      %390 = vmatprep.subr.bf16.mxu0 0
      %391 = vmatpush2.bf16.msra.mxu0 0
      %392 = vmatprep.subr.bf16.mxu0 0
      %393 = vmatpush2.bf16.msra.mxu0 0
      %394 = vmatprep.subr.bf16.mxu0 0
      %395 = vmatpush2.bf16.msra.mxu0 0
      %396 = vmatprep.subr.bf16.mxu0 0
      %397 = vmatpush2.bf16.msra.mxu0 0
      %398 = vmatprep.subr.bf16.mxu0 0
      %399 = vmatpush2.bf16.msra.mxu0 0
      %400 = vmatprep.subr.bf16.mxu0 0
      %401 = vmatpush2.bf16.msra.mxu0 0
      %402 = vmatprep.subr.bf16.mxu0 0
      %403 = vmatpush2.bf16.msra.mxu0 0
      %404 = vmatprep.mubr.bf16.mxu0 0
      %405 = vmatmul.mubr.bf16.gmra.mxu0 %v370
      %v406 = vpop.f32.mrf.mxu0
      %v407 = vadd.f32 0.0, %v406
      %v408 = vpop.f32.mrf.mxu0
      %v409 = vpop.f32.mrf.mxu0
      %v410 = vadd.f32 0.0, %v409
      %v411 = vpop.f32.mrf.mxu0
      %412 = vdwg.mxu0
      %v413 = vadd.f32 %v316, %v407
      %v414 = vadd.f32 %v319, %v410
      %s415 = sadd.s32 %s196, 12
      %s416 = smul.addr %s415, 4
      %s417 = scalar_lea.vmem %s183, %s416
      %v418 = vld [vmem:[%s417] sm:$0xf]
      %v419 = vld [vmem:[%s417 + $0x8] sm:$0xf]
      %s420 = scalar_lea.vmem %s1, 24
      %v421 = vld [vmem:[%s420] sm:$0xf]
      %v422 = vld [vmem:[%s420 + $0x4] sm:$0xf]
      %v425 = vunpack.c.l.b16 %v418
      %v426 = vunpack.c.l.b16 %v419
      %v427 = vpack.c.b16 %v426, %v425
      %v430 = vunpack.c.l.b16 %v421
      %v431 = vunpack.c.l.b16 %v422
      %v432 = vpack.c.b16 %v431, %v430
      %v435 = vsel %vm222, %v427, 0
      %437 = vmatprep.subr.bf16.mxu0 0
      %438 = vmatpush1.bf16.msra.mxu0 0
      %439 = vmatprep.subr.bf16.mxu0 0
      %440 = vmatpush1.bf16.msra.mxu0 0
      %441 = vmatprep.subr.bf16.mxu0 0
      %442 = vmatpush1.bf16.msra.mxu0 0
      %443 = vmatprep.subr.bf16.mxu0 0
      %444 = vmatpush1.bf16.msra.mxu0 0
      %445 = vmatprep.subr.bf16.mxu0 0
      %446 = vmatpush1.bf16.msra.mxu0 0
      %447 = vmatprep.subr.bf16.mxu0 0
      %448 = vmatpush1.bf16.msra.mxu0 0
      %449 = vmatprep.subr.bf16.mxu0 0
      %450 = vmatpush1.bf16.msra.mxu0 0
      %451 = vmatprep.subr.bf16.mxu0 0
      %452 = vmatpush1.bf16.msra.mxu0 %v432
      %453 = vmatprep.subr.bf16.mxu0 0
      %454 = vmatpush2.bf16.msra.mxu0 0
      %455 = vmatprep.subr.bf16.mxu0 0
      %456 = vmatpush2.bf16.msra.mxu0 0
      %457 = vmatprep.subr.bf16.mxu0 0
      %458 = vmatpush2.bf16.msra.mxu0 0
      %459 = vmatprep.subr.bf16.mxu0 0
      %460 = vmatpush2.bf16.msra.mxu0 0
      %461 = vmatprep.subr.bf16.mxu0 0
      %462 = vmatpush2.bf16.msra.mxu0 0
      %463 = vmatprep.subr.bf16.mxu0 0
      %464 = vmatpush2.bf16.msra.mxu0 0
      %465 = vmatprep.subr.bf16.mxu0 0
      %466 = vmatpush2.bf16.msra.mxu0 0
      %467 = vmatprep.subr.bf16.mxu0 0
      %468 = vmatpush2.bf16.msra.mxu0 0
      %469 = vmatprep.mubr.bf16.mxu0 0
      %470 = vmatmul.mubr.bf16.gmra.mxu0 %v435
      %v471 = vpop.f32.mrf.mxu0
      %v472 = vadd.f32 0.0, %v471
      %v473 = vpop.f32.mrf.mxu0
      %v474 = vpop.f32.mrf.mxu0
      %v475 = vadd.f32 0.0, %v474
      %v476 = vpop.f32.mrf.mxu0
      %477 = vdwg.mxu0
      %v478 = vadd.f32 %v413, %v472
      %v479 = vadd.f32 %v414, %v475
      %s480 = sadd.s32 %s196, 18
      %s481 = smul.addr %s480, 4
      %s482 = scalar_lea.vmem %s183, %s481
      %v483 = vld [vmem:[%s482] sm:$0xf]
      %v484 = vld [vmem:[%s482 + $0x8] sm:$0xf]
      %s485 = scalar_lea.vmem %s1, 32
      %v486 = vld [vmem:[%s485] sm:$0xf]
      %v487 = vld [vmem:[%s485 + $0x4] sm:$0xf]
      %v490 = vunpack.c.l.b16 %v483
      %v491 = vunpack.c.l.b16 %v484
      %v492 = vpack.c.b16 %v491, %v490
      %v495 = vunpack.c.l.b16 %v486
      %v496 = vunpack.c.l.b16 %v487
      %v497 = vpack.c.b16 %v496, %v495
      %v500 = vsel %vm222, %v492, 0
      %502 = vmatprep.subr.bf16.mxu0 0
      %503 = vmatpush1.bf16.msra.mxu0 0
      %504 = vmatprep.subr.bf16.mxu0 0
      %505 = vmatpush1.bf16.msra.mxu0 0
      %506 = vmatprep.subr.bf16.mxu0 0
      %507 = vmatpush1.bf16.msra.mxu0 0
      %508 = vmatprep.subr.bf16.mxu0 0
      %509 = vmatpush1.bf16.msra.mxu0 0
      %510 = vmatprep.subr.bf16.mxu0 0
      %511 = vmatpush1.bf16.msra.mxu0 0
      %512 = vmatprep.subr.bf16.mxu0 0
      %513 = vmatpush1.bf16.msra.mxu0 0
      %514 = vmatprep.subr.bf16.mxu0 0
      %515 = vmatpush1.bf16.msra.mxu0 0
      %516 = vmatprep.subr.bf16.mxu0 0
      %517 = vmatpush1.bf16.msra.mxu0 %v497
      %518 = vmatprep.subr.bf16.mxu0 0
      %519 = vmatpush2.bf16.msra.mxu0 0
      %520 = vmatprep.subr.bf16.mxu0 0
      %521 = vmatpush2.bf16.msra.mxu0 0
      %522 = vmatprep.subr.bf16.mxu0 0
      %523 = vmatpush2.bf16.msra.mxu0 0
      %524 = vmatprep.subr.bf16.mxu0 0
      %525 = vmatpush2.bf16.msra.mxu0 0
      %526 = vmatprep.subr.bf16.mxu0 0
      %527 = vmatpush2.bf16.msra.mxu0 0
      %528 = vmatprep.subr.bf16.mxu0 0
      %529 = vmatpush2.bf16.msra.mxu0 0
      %530 = vmatprep.subr.bf16.mxu0 0
      %531 = vmatpush2.bf16.msra.mxu0 0
      %532 = vmatprep.subr.bf16.mxu0 0
      %533 = vmatpush2.bf16.msra.mxu0 0
      %534 = vmatprep.mubr.bf16.mxu0 0
      %535 = vmatmul.mubr.bf16.gmra.mxu0 %v500
      %v536 = vpop.f32.mrf.mxu0
      %v537 = vadd.f32 0.0, %v536
      %v538 = vpop.f32.mrf.mxu0
      %v539 = vpop.f32.mrf.mxu0
      %v540 = vadd.f32 0.0, %v539
      %v541 = vpop.f32.mrf.mxu0
      %542 = vdwg.mxu0
      %v543 = vadd.f32 %v478, %v537
      %v544 = vadd.f32 %v479, %v540
      %v545 = vld [vmem:[%s417] sm:$0xf]
      %v546 = vld [vmem:[%s417 + $0x4] sm:$0x1]
      %v547 = vld [vmem:[%s417 + $0x8] sm:$0xf]
      %v548 = vld [vmem:[%s417 + $0xc] sm:$0x1]
      %v550 = vshrl.u32 %v545, 16
      %v552 = vrot.slane %v550, 4
      %v553 = vshll.u32 %v545, 16
      %v555 = vrot.slane %v553, 5
      %v556 = vor.u32 %v552, %v555
      %v557 = vrot.slane %v556, 4
      %v559 = vshll.u32 %v546, 16
      %v561 = vrot.slane %v559, 5
      %v562 = vsel %vm328, %v557, %v561
      %v564 = vshrl.u32 %v547, 16
      %v566 = vrot.slane %v564, 4
      %v567 = vshll.u32 %v547, 16
      %v569 = vrot.slane %v567, 5
      %v570 = vor.u32 %v566, %v569
      %v571 = vrot.slane %v570, 4
      %v573 = vshll.u32 %v548, 16
      %v575 = vrot.slane %v573, 5
      %v576 = vsel %vm328, %v571, %v575
      %s577 = scalar_lea.vmem %s1, 40
      %v578 = vld [vmem:[%s577] sm:$0xf]
      %v579 = vld [vmem:[%s577 + $0x4] sm:$0xf]
      %v580 = vunpack.c.l.b16 %v562
      %v581 = vunpack.c.l.b16 %v576
      %v582 = vpack.c.b16 %v581, %v580
      %v585 = vunpack.c.l.b16 %v578
      %v586 = vunpack.c.l.b16 %v579
      %v587 = vpack.c.b16 %v586, %v585
      %v590 = vsel %vm222, %v582, 0
      %592 = vmatprep.subr.bf16.mxu0 0
      %593 = vmatpush1.bf16.msra.mxu0 0
      %594 = vmatprep.subr.bf16.mxu0 0
      %595 = vmatpush1.bf16.msra.mxu0 0
      %596 = vmatprep.subr.bf16.mxu0 0
      %597 = vmatpush1.bf16.msra.mxu0 0
      %598 = vmatprep.subr.bf16.mxu0 0
      %599 = vmatpush1.bf16.msra.mxu0 0
      %600 = vmatprep.subr.bf16.mxu0 0
      %601 = vmatpush1.bf16.msra.mxu0 0
      %602 = vmatprep.subr.bf16.mxu0 0
      %603 = vmatpush1.bf16.msra.mxu0 0
      %604 = vmatprep.subr.bf16.mxu0 0
      %605 = vmatpush1.bf16.msra.mxu0 0
      %606 = vmatprep.subr.bf16.mxu0 0
      %607 = vmatpush1.bf16.msra.mxu0 %v587
      %608 = vmatprep.subr.bf16.mxu0 0
      %609 = vmatpush2.bf16.msra.mxu0 0
      %610 = vmatprep.subr.bf16.mxu0 0
      %611 = vmatpush2.bf16.msra.mxu0 0
      %612 = vmatprep.subr.bf16.mxu0 0
      %613 = vmatpush2.bf16.msra.mxu0 0
      %614 = vmatprep.subr.bf16.mxu0 0
      %615 = vmatpush2.bf16.msra.mxu0 0
      %616 = vmatprep.subr.bf16.mxu0 0
      %617 = vmatpush2.bf16.msra.mxu0 0
      %618 = vmatprep.subr.bf16.mxu0 0
      %619 = vmatpush2.bf16.msra.mxu0 0
      %620 = vmatprep.subr.bf16.mxu0 0
      %621 = vmatpush2.bf16.msra.mxu0 0
      %622 = vmatprep.subr.bf16.mxu0 0
      %623 = vmatpush2.bf16.msra.mxu0 0
      %624 = vmatprep.mubr.bf16.mxu0 0
      %625 = vmatmul.mubr.bf16.gmra.mxu0 %v590
      %v626 = vpop.f32.mrf.mxu0
      %v627 = vadd.f32 0.0, %v626
      %v628 = vpop.f32.mrf.mxu0
      %v629 = vpop.f32.mrf.mxu0
      %v630 = vadd.f32 0.0, %v629
      %v631 = vpop.f32.mrf.mxu0
      %632 = vdwg.mxu0
      %v633 = vadd.f32 %v543, %v627
      %v634 = vadd.f32 %v544, %v630
      %s635 = sadd.s32 %s195, 1
      %s636 = smul.u32 %s635, 2
      %s637 = smul.addr %s636, 4
      %s638 = scalar_lea.vmem %s183, %s637
      %v639 = vld [vmem:[%s638] sm:$0xf]
      %v640 = vld [vmem:[%s638 + $0x8] sm:$0xf]
      %s641 = scalar_lea.vmem %s1, 48
      %v642 = vld [vmem:[%s641] sm:$0xf]
      %v643 = vld [vmem:[%s641 + $0x4] sm:$0xf]
      %v646 = vunpack.c.l.b16 %v639
      %v647 = vunpack.c.l.b16 %v640
      %v648 = vpack.c.b16 %v647, %v646
      %v651 = vunpack.c.l.b16 %v642
      %v652 = vunpack.c.l.b16 %v643
      %v653 = vpack.c.b16 %v652, %v651
      %v656 = vsel %vm222, %v648, 0
      %658 = vmatprep.subr.bf16.mxu0 0
      %659 = vmatpush1.bf16.msra.mxu0 0
      %660 = vmatprep.subr.bf16.mxu0 0
      %661 = vmatpush1.bf16.msra.mxu0 0
      %662 = vmatprep.subr.bf16.mxu0 0
      %663 = vmatpush1.bf16.msra.mxu0 0
      %664 = vmatprep.subr.bf16.mxu0 0
      %665 = vmatpush1.bf16.msra.mxu0 0
      %666 = vmatprep.subr.bf16.mxu0 0
      %667 = vmatpush1.bf16.msra.mxu0 0
      %668 = vmatprep.subr.bf16.mxu0 0
      %669 = vmatpush1.bf16.msra.mxu0 0
      %670 = vmatprep.subr.bf16.mxu0 0
      %671 = vmatpush1.bf16.msra.mxu0 0
      %672 = vmatprep.subr.bf16.mxu0 0
      %673 = vmatpush1.bf16.msra.mxu0 %v653
      %674 = vmatprep.subr.bf16.mxu0 0
      %675 = vmatpush2.bf16.msra.mxu0 0
      %676 = vmatprep.subr.bf16.mxu0 0
      %677 = vmatpush2.bf16.msra.mxu0 0
      %678 = vmatprep.subr.bf16.mxu0 0
      %679 = vmatpush2.bf16.msra.mxu0 0
      %680 = vmatprep.subr.bf16.mxu0 0
      %681 = vmatpush2.bf16.msra.mxu0 0
      %682 = vmatprep.subr.bf16.mxu0 0
      %683 = vmatpush2.bf16.msra.mxu0 0
      %684 = vmatprep.subr.bf16.mxu0 0
      %685 = vmatpush2.bf16.msra.mxu0 0
      %686 = vmatprep.subr.bf16.mxu0 0
      %687 = vmatpush2.bf16.msra.mxu0 0
      %688 = vmatprep.subr.bf16.mxu0 0
      %689 = vmatpush2.bf16.msra.mxu0 0
      %690 = vmatprep.mubr.bf16.mxu0 0
      %691 = vmatmul.mubr.bf16.gmra.mxu0 %v656
      %v692 = vpop.f32.mrf.mxu0
      %v693 = vadd.f32 0.0, %v692
      %v694 = vpop.f32.mrf.mxu0
      %v695 = vpop.f32.mrf.mxu0
      %v696 = vadd.f32 0.0, %v695
      %v697 = vpop.f32.mrf.mxu0
      %698 = vdwg.mxu0
      %v699 = vadd.f32 %v633, %v693
      %v700 = vadd.f32 %v634, %v696
      %s701 = sadd.s32 %s636, 6
      %s702 = smul.addr %s701, 4
      %s703 = scalar_lea.vmem %s183, %s702
      %v704 = vld [vmem:[%s703] sm:$0xf]
      %v705 = vld [vmem:[%s703 + $0x8] sm:$0xf]
      %s706 = scalar_lea.vmem %s1, 56
      %v707 = vld [vmem:[%s706] sm:$0xf]
      %v708 = vld [vmem:[%s706 + $0x4] sm:$0xf]
      %v711 = vunpack.c.l.b16 %v704
      %v712 = vunpack.c.l.b16 %v705
      %v713 = vpack.c.b16 %v712, %v711
      %v716 = vunpack.c.l.b16 %v707
      %v717 = vunpack.c.l.b16 %v708
      %v718 = vpack.c.b16 %v717, %v716
      %v721 = vsel %vm222, %v713, 0
      %723 = vmatprep.subr.bf16.mxu0 0
      %724 = vmatpush1.bf16.msra.mxu0 0
      %725 = vmatprep.subr.bf16.mxu0 0
      %726 = vmatpush1.bf16.msra.mxu0 0
      %727 = vmatprep.subr.bf16.mxu0 0
      %728 = vmatpush1.bf16.msra.mxu0 0
      %729 = vmatprep.subr.bf16.mxu0 0
      %730 = vmatpush1.bf16.msra.mxu0 0
      %731 = vmatprep.subr.bf16.mxu0 0
      %732 = vmatpush1.bf16.msra.mxu0 0
      %733 = vmatprep.subr.bf16.mxu0 0
      %734 = vmatpush1.bf16.msra.mxu0 0
      %735 = vmatprep.subr.bf16.mxu0 0
      %736 = vmatpush1.bf16.msra.mxu0 0
      %737 = vmatprep.subr.bf16.mxu0 0
      %738 = vmatpush1.bf16.msra.mxu0 %v718
      %739 = vmatprep.subr.bf16.mxu0 0
      %740 = vmatpush2.bf16.msra.mxu0 0
      %741 = vmatprep.subr.bf16.mxu0 0
      %742 = vmatpush2.bf16.msra.mxu0 0
      %743 = vmatprep.subr.bf16.mxu0 0
      %744 = vmatpush2.bf16.msra.mxu0 0
      %745 = vmatprep.subr.bf16.mxu0 0
      %746 = vmatpush2.bf16.msra.mxu0 0
      %747 = vmatprep.subr.bf16.mxu0 0
      %748 = vmatpush2.bf16.msra.mxu0 0
      %749 = vmatprep.subr.bf16.mxu0 0
      %750 = vmatpush2.bf16.msra.mxu0 0
      %751 = vmatprep.subr.bf16.mxu0 0
      %752 = vmatpush2.bf16.msra.mxu0 0
      %753 = vmatprep.subr.bf16.mxu0 0
      %754 = vmatpush2.bf16.msra.mxu0 0
      %755 = vmatprep.mubr.bf16.mxu0 0
      %756 = vmatmul.mubr.bf16.gmra.mxu0 %v721
      %v757 = vpop.f32.mrf.mxu0
      %v758 = vadd.f32 0.0, %v757
      %v759 = vpop.f32.mrf.mxu0
      %v760 = vpop.f32.mrf.mxu0
      %v761 = vadd.f32 0.0, %v760
      %v762 = vpop.f32.mrf.mxu0
      %763 = vdwg.mxu0
      %v764 = vadd.f32 %v699, %v758
      %v765 = vadd.f32 %v700, %v761
      %v766 = vld [vmem:[%s638] sm:$0xf]
      %v767 = vld [vmem:[%s638 + $0x4] sm:$0x1]
      %v768 = vld [vmem:[%s638 + $0x8] sm:$0xf]
      %v769 = vld [vmem:[%s638 + $0xc] sm:$0x1]
      %v771 = vshrl.u32 %v766, 16
      %v773 = vrot.slane %v771, 4
      %v774 = vshll.u32 %v766, 16
      %v776 = vrot.slane %v774, 5
      %v777 = vor.u32 %v773, %v776
      %v778 = vrot.slane %v777, 4
      %v780 = vshll.u32 %v767, 16
      %v782 = vrot.slane %v780, 5
      %v783 = vsel %vm328, %v778, %v782
      %v785 = vshrl.u32 %v768, 16
      %v787 = vrot.slane %v785, 4
      %v788 = vshll.u32 %v768, 16
      %v790 = vrot.slane %v788, 5
      %v791 = vor.u32 %v787, %v790
      %v792 = vrot.slane %v791, 4
      %v794 = vshll.u32 %v769, 16
      %v796 = vrot.slane %v794, 5
      %v797 = vsel %vm328, %v792, %v796
      %s798 = scalar_lea.vmem %s1, 64
      %v799 = vld [vmem:[%s798] sm:$0xf]
      %v800 = vld [vmem:[%s798 + $0x4] sm:$0xf]
      %v801 = vunpack.c.l.b16 %v783
      %v802 = vunpack.c.l.b16 %v797
      %v803 = vpack.c.b16 %v802, %v801
      %v806 = vunpack.c.l.b16 %v799
      %v807 = vunpack.c.l.b16 %v800
      %v808 = vpack.c.b16 %v807, %v806
      %v811 = vsel %vm222, %v803, 0
      %813 = vmatprep.subr.bf16.mxu0 0
      %814 = vmatpush1.bf16.msra.mxu0 0
      %815 = vmatprep.subr.bf16.mxu0 0
      %816 = vmatpush1.bf16.msra.mxu0 0
      %817 = vmatprep.subr.bf16.mxu0 0
      %818 = vmatpush1.bf16.msra.mxu0 0
      %819 = vmatprep.subr.bf16.mxu0 0
      %820 = vmatpush1.bf16.msra.mxu0 0
      %821 = vmatprep.subr.bf16.mxu0 0
      %822 = vmatpush1.bf16.msra.mxu0 0
      %823 = vmatprep.subr.bf16.mxu0 0
      %824 = vmatpush1.bf16.msra.mxu0 0
      %825 = vmatprep.subr.bf16.mxu0 0
      %826 = vmatpush1.bf16.msra.mxu0 0
      %827 = vmatprep.subr.bf16.mxu0 0
      %828 = vmatpush1.bf16.msra.mxu0 %v808
      %829 = vmatprep.subr.bf16.mxu0 0
      %830 = vmatpush2.bf16.msra.mxu0 0
      %831 = vmatprep.subr.bf16.mxu0 0
      %832 = vmatpush2.bf16.msra.mxu0 0
      %833 = vmatprep.subr.bf16.mxu0 0
      %834 = vmatpush2.bf16.msra.mxu0 0
      %835 = vmatprep.subr.bf16.mxu0 0
      %836 = vmatpush2.bf16.msra.mxu0 0
      %837 = vmatprep.subr.bf16.mxu0 0
      %838 = vmatpush2.bf16.msra.mxu0 0
      %839 = vmatprep.subr.bf16.mxu0 0
      %840 = vmatpush2.bf16.msra.mxu0 0
      %841 = vmatprep.subr.bf16.mxu0 0
      %842 = vmatpush2.bf16.msra.mxu0 0
      %843 = vmatprep.subr.bf16.mxu0 0
      %844 = vmatpush2.bf16.msra.mxu0 0
      %845 = vmatprep.mubr.bf16.mxu0 0
      %846 = vmatmul.mubr.bf16.gmra.mxu0 %v811
      %v847 = vpop.f32.mrf.mxu0
      %v848 = vadd.f32 0.0, %v847
      %v849 = vpop.f32.mrf.mxu0
      %v850 = vpop.f32.mrf.mxu0
      %v851 = vadd.f32 0.0, %v850
      %v852 = vpop.f32.mrf.mxu0
      %853 = vdwg.mxu0
      %v854 = vadd.f32 %v764, %v848
      %v855 = vadd.f32 %v765, %v851
      %v856 = vld [vmem:[%s2] sm:$0x1]
      %v858 = vlaneseq
      %v859 = vshrl.u32 %v858, 7
      %v860 = vsub.s32 0, %v859
      %v861 = vrot.slane %v856, %v860
      %v863 = vadd.f32 %v854, %v861
      %v864 = vadd.f32 %v855, %v861
      %v865 = vmax.f32 %v863, 0.0
      %v866 = vmax.f32 %v864, 0.0
      %vm867 = vcmask 261120
      %868 = vst.msk [vmem:[%s192] sm:$0xff] %vm867, %v865
      %869 = vst.msk [vmem:[%s192 + $0x8] sm:$0xff] %vm867, %v866
      %s870 = smul.u32 2, %s19
      %p871 = scmp.lt.s32.totalorder %s18, 1
      %s872 = scalar_select %p871, %s18, 1
      %p873 = scmp.lt.s32.totalorder %s870, 1
      %s874 = scalar_select %p873, %s870, 1
      %s875 = smul.addr %s872, 2
      %s876 = sadd.s32 %s874, %s875
      %s877 = smul.addr %s876, 8
      %s878 = scalar_lea.vmem %s3, %s877
      // Predicated region
      $region33: #{a_call__.6} parent=31 // pred_check
        %p879 = pneg %p114
      $region34: #{a_call__.6} parent=31 // pred_check_branch
        %881 = sbr.rel (%p879) target = $region36
      $region35: #{a_call__.6} parent=31 // pred_region
        %s882 = smul.u32 2, %s19
      $region36: #{a_call__.6} parent=31 // pred_fallthru
        _
    $region32: #{a_call__.6} parent=5 // pred_fallthru
      _
    %p883 = scmp.le.s32.totalorder 2, %s9
    // Predicated region
    $region37: #{a_call__.6} parent=5 // pred_check
      %p884 = pneg %p883
    $region38: #{a_call__.6} parent=5 // pred_check_branch
      %886 = sbr.rel (%p884) target = $region40
    $region39: #{a_call__.6} parent=5 // pred_region
      %s887 = ssub.s32 %s9, 2
      // Predicated region
      $region41: #{a_call__.6} parent=39 // pred_check
        %p888 = pneg %p120
      $region42: #{a_call__.6} parent=39 // pred_check_branch
        %890 = sbr.rel (%p888) target = $region44
      $region43: #{a_call__.6} parent=39 // pred_region
        %s891 = smul.u32 2, %s21
        %p892 = scmp.lt.s32.totalorder %s20, 1
        %s893 = scalar_select %p892, %s20, 1
        %p894 = scmp.lt.s32.totalorder %s891, 1
        %s895 = scalar_select %p894, %s891, 1
        %s896 = smul.addr %s893, 2
        %s897 = sadd.s32 %s895, %s896
        %s898 = smul.addr %s897, 8
        %s899 = scalar_lea.vmem %s3, %s898
      $region44: #{a_call__.6} parent=39 // pred_fallthru
        _
    $region40: #{a_call__.6} parent=5 // pred_fallthru
      _
  $region6: #{a_call__.6} parent=0 // loop_footer
    %s13 = sadd.s32 1, %s9
  $region7: #{a_call__.6} parent=0 // loop_footer_branch
    %8 = sbr.rel target = $region3
  $region8: #{a_call__.6} parent=0 // loop_exit
    _

// kernel: a_call__.7
$region0: #{a_call__.7}
  #allocation0 [shape = 'u32[]', space=smem, size = 0x4, offset = 0x4, fixed_abs, tag = 'smem constant byte address 0x4 - core index']
  #allocation1 [shape = 'u32[144,128]{1,0:T(1,128)}', space=vmem, size = 0x12000, scoped, tag = 'internal scratch']
  %s0 = inlined_call_operand.vmem [shape: bf16[2,1,10,10,56], index: 0, kind: input, shape index: {}]
  %s1 = inlined_call_operand.vmem [shape: bf16[9,56,128], index: 1, kind: input, shape index: {}]
  %s2 = inlined_call_operand.vmem [shape: f32[1,128], index: 2, kind: input, shape index: {}]
  %s3 = inlined_call_operand.vmem [shape: bf16[128,128], index: 3, kind: input, shape index: {}]
  %s4 = inlined_call_operand.vmem [shape: f32[1,128], index: 4, kind: input, shape index: {}]
  %s5 = inlined_call_operand.vmem [shape: f32[2,8,8,128], index: 5, kind: output, shape index: {}]
  %s6 = sld [smem:[#allocation0]]
  $region53: #{a_call__.7} parent=0
    _
  %s8 = ssub.s32 1, %s6
  %s9 = scalar_select 0, %s8, %s6
  loop: start=0, step=1, limit=4
  $region2: #{a_call__.7} parent=0 // loop_pre_header
    _
  $region3: #{a_call__.7} parent=0 // loop_header
    %s11 = sphi 0, %s15
    %p12 = scmp.ge.s32.totalorder %s11, 4
    %s18 = sphi 0, %s30
    %s19 = sphi 0, %s26
    %s20 = sphi 0, %s18
    %s21 = sphi 0, %s19
    %s22 = sphi 0, %s20
    %s23 = sphi 0, %s21
    %s33 = sphi 0, %s35
    %s36 = sphi 0, %s33
    %s37 = sphi 0, %s36
    %s53 = sphi 0, %s37
    %s57 = sphi 0, %s57
    %s59 = sphi 0, %s57
    %s60 = sphi 0, %s59
    %s74 = sphi 0, %s60
    %s78 = sphi 0, %s78
    %s80 = sphi 0, %s78
    %s81 = sphi 0, %s80
    %s95 = sphi 0, %s81
    %s99 = sphi 0, %s99
    %s101 = sphi 0, %s99
    %s102 = sphi 0, %s101
    %s116 = sphi 0, %s102
    %s120 = sphi 0, %s120
    %s122 = sphi 0, %s120
    %s123 = sphi 0, %s122
    %s137 = sphi 0, %s123
    %s145 = sphi 0, %s147
    %s148 = sphi 0, %s145
    %s149 = sphi 0, %s148
    %s165 = sphi 0, %s149
  $region4: #{a_call__.7} parent=0 // loop_header_branch
    %14 = sbr.rel (%p12) target = $region8
  $region5: #{a_call__.7} parent=0 // loop_body
    %s16 = ssub.s32 %s11, 1
    %s17 = ssub.s32 %s11, 2
    %s24 = sadd.s32 1, %s19
    %p25 = scmp.ge.s32.totalorder %s24, 1
    %s26 = scalar_select %p25, 0, %s24
    %s27 = sadd.s32 1, %s18
    %s28 = scalar_select %p25, %s27, %s18
    %p29 = scmp.ge.s32.totalorder %s28, 2
    %s30 = scalar_select %p29, 0, %s28
    %s31 = ssub.s32 %s18, %s30
    %p32 = scmp.eq.s32.totalorder %s31, 0
    %s34 = sadd.s32 %s33, 1
    %s35 = scalar_select %p32, %s33, %s34
    %p38 = pneg %p32
    %p39 = scmp.eq.s32.totalorder %s11, 1
    %p40 = por %p38, %p39
    %p41 = scmp.ne.s32.totalorder %s33, %s36
    %p42 = scmp.eq.s32.totalorder %s11, 0
    %p43 = por %p41, %p42
    %p44 = scmp.ne.s32.totalorder %s33, %s36
    %p45 = scmp.eq.s32.totalorder %s16, 1
    %p46 = por %p44, %p45
    %p47 = scmp.ne.s32.totalorder %s36, %s37
    %p48 = scmp.eq.s32.totalorder %s16, 0
    %p49 = por %p47, %p48
    %p50 = scmp.ne.s32.totalorder %s36, %s37
    %p51 = scmp.eq.s32.totalorder %s17, 1
    %p52 = por %p50, %p51
    %p54 = scmp.ne.s32.totalorder %s37, %s53
    %p55 = scmp.eq.s32.totalorder %s17, 0
    %p56 = por %p54, %p55
    %s58 = sadd.s32 %s57, 1
    %p61 = scmp.eq.s32.totalorder %s11, 1
    %p62 = scmp.ne.s32.totalorder %s57, %s59
    %p63 = scmp.eq.s32.totalorder %s11, 0
    %p64 = por %p62, %p63
    %p65 = scmp.ne.s32.totalorder %s57, %s59
    %p66 = scmp.eq.s32.totalorder %s16, 1
    %p67 = por %p65, %p66
    %p68 = scmp.ne.s32.totalorder %s59, %s60
    %p69 = scmp.eq.s32.totalorder %s16, 0
    %p70 = por %p68, %p69
    %p71 = scmp.ne.s32.totalorder %s59, %s60
    %p72 = scmp.eq.s32.totalorder %s17, 1
    %p73 = por %p71, %p72
    %p75 = scmp.ne.s32.totalorder %s60, %s74
    %p76 = scmp.eq.s32.totalorder %s17, 0
    %p77 = por %p75, %p76
    %s79 = sadd.s32 %s78, 1
    %p82 = scmp.eq.s32.totalorder %s11, 1
    %p83 = scmp.ne.s32.totalorder %s78, %s80
    %p84 = scmp.eq.s32.totalorder %s11, 0
    %p85 = por %p83, %p84
    %p86 = scmp.ne.s32.totalorder %s78, %s80
    %p87 = scmp.eq.s32.totalorder %s16, 1
    %p88 = por %p86, %p87
    %p89 = scmp.ne.s32.totalorder %s80, %s81
    %p90 = scmp.eq.s32.totalorder %s16, 0
    %p91 = por %p89, %p90
    %p92 = scmp.ne.s32.totalorder %s80, %s81
    %p93 = scmp.eq.s32.totalorder %s17, 1
    %p94 = por %p92, %p93
    %p96 = scmp.ne.s32.totalorder %s81, %s95
    %p97 = scmp.eq.s32.totalorder %s17, 0
    %p98 = por %p96, %p97
    %s100 = sadd.s32 %s99, 1
    %p103 = scmp.eq.s32.totalorder %s11, 1
    %p104 = scmp.ne.s32.totalorder %s99, %s101
    %p105 = scmp.eq.s32.totalorder %s11, 0
    %p106 = por %p104, %p105
    %p107 = scmp.ne.s32.totalorder %s99, %s101
    %p108 = scmp.eq.s32.totalorder %s16, 1
    %p109 = por %p107, %p108
    %p110 = scmp.ne.s32.totalorder %s101, %s102
    %p111 = scmp.eq.s32.totalorder %s16, 0
    %p112 = por %p110, %p111
    %p113 = scmp.ne.s32.totalorder %s101, %s102
    %p114 = scmp.eq.s32.totalorder %s17, 1
    %p115 = por %p113, %p114
    %p117 = scmp.ne.s32.totalorder %s102, %s116
    %p118 = scmp.eq.s32.totalorder %s17, 0
    %p119 = por %p117, %p118
    %s121 = sadd.s32 %s120, 1
    %p124 = scmp.eq.s32.totalorder %s11, 1
    %p125 = scmp.ne.s32.totalorder %s120, %s122
    %p126 = scmp.eq.s32.totalorder %s11, 0
    %p127 = por %p125, %p126
    %p128 = scmp.ne.s32.totalorder %s120, %s122
    %p129 = scmp.eq.s32.totalorder %s16, 1
    %p130 = por %p128, %p129
    %p131 = scmp.ne.s32.totalorder %s122, %s123
    %p132 = scmp.eq.s32.totalorder %s16, 0
    %p133 = por %p131, %p132
    %p134 = scmp.ne.s32.totalorder %s122, %s123
    %p135 = scmp.eq.s32.totalorder %s17, 1
    %p136 = por %p134, %p135
    %p138 = scmp.ne.s32.totalorder %s123, %s137
    %p139 = scmp.eq.s32.totalorder %s17, 0
    %p140 = por %p138, %p139
    %s141 = ssub.s32 %s18, %s30
    %s142 = ssub.s32 %s19, %s26
    %s143 = sor.u32 %s141, %s142
    %p144 = scmp.eq.s32.totalorder %s143, 0
    %s146 = sadd.s32 %s145, 1
    %s147 = scalar_select %p144, %s145, %s146
    %p150 = pneg %p144
    %p151 = scmp.eq.s32.totalorder %s11, 1
    %p152 = por %p150, %p151
    %p153 = scmp.ne.s32.totalorder %s145, %s148
    %p154 = scmp.eq.s32.totalorder %s11, 0
    %p155 = por %p153, %p154
    %p156 = scmp.ne.s32.totalorder %s145, %s148
    %p157 = scmp.eq.s32.totalorder %s16, 1
    %p158 = por %p156, %p157
    %p159 = scmp.ne.s32.totalorder %s148, %s149
    %p160 = scmp.eq.s32.totalorder %s16, 0
    %p161 = por %p159, %p160
    %p162 = scmp.ne.s32.totalorder %s148, %s149
    %p163 = scmp.eq.s32.totalorder %s17, 1
    %p164 = por %p162, %p163
    %p166 = scmp.ne.s32.totalorder %s149, %s165
    %p167 = scmp.eq.s32.totalorder %s17, 0
    %p168 = por %p166, %p167
    %p169 = scmp.le.s32.totalorder 1, %s11
    %p170 = scmp.lt.s32.totalorder %s11, 3
    %p171 = pnand %p169, %p170
    %p172 = pneg %p171
    // Predicated region
    $region9: #{a_call__.7} parent=5 // pred_check
      _
    $region10: #{a_call__.7} parent=5 // pred_check_branch
      %174 = sbr.rel (%p171) target = $region12
    $region11: #{a_call__.7} parent=5 // pred_region
      %s175 = ssub.s32 %s11, 1
      // Predicated region
      $region13: #{a_call__.7} parent=11 // pred_check
        %p176 = pneg %p70
      $region14: #{a_call__.7} parent=11 // pred_check_branch
        %178 = sbr.rel (%p176) target = $region16
      $region15: #{a_call__.7} parent=11 // pred_region
        _
      $region16: #{a_call__.7} parent=11 // pred_fallthru
        _
      // Predicated region
      $region17: #{a_call__.7} parent=11 // pred_check
        %p179 = pneg %p91
      $region18: #{a_call__.7} parent=11 // pred_check_branch
        %181 = sbr.rel (%p179) target = $region20
      $region19: #{a_call__.7} parent=11 // pred_region
        _
      $region20: #{a_call__.7} parent=11 // pred_fallthru
        _
      // Predicated region
      $region21: #{a_call__.7} parent=11 // pred_check
        %p182 = pneg %p112
      $region22: #{a_call__.7} parent=11 // pred_check_branch
        %184 = sbr.rel (%p182) target = $region24
      $region23: #{a_call__.7} parent=11 // pred_region
        _
      $region24: #{a_call__.7} parent=11 // pred_fallthru
        _
      // Predicated region
      $region25: #{a_call__.7} parent=11 // pred_check
        %p185 = pneg %p133
      $region26: #{a_call__.7} parent=11 // pred_check_branch
        %187 = sbr.rel (%p185) target = $region28
      $region27: #{a_call__.7} parent=11 // pred_region
        _
      $region28: #{a_call__.7} parent=11 // pred_fallthru
        _
    $region12: #{a_call__.7} parent=5 // pred_fallthru
      _
    %p188 = scmp.lt.s32.totalorder %s11, 2
    // Predicated region
    $region29: #{a_call__.7} parent=5 // pred_check
      %p189 = pneg %p188
    $region30: #{a_call__.7} parent=5 // pred_check_branch
      %191 = sbr.rel (%p189) target = $region32
    $region31: #{a_call__.7} parent=5 // pred_region
      // Predicated region
      $region33: #{a_call__.7} parent=31 // pred_check
        %p192 = pneg %p43
      $region34: #{a_call__.7} parent=31 // pred_check_branch
        %194 = sbr.rel (%p192) target = $region36
      $region35: #{a_call__.7} parent=31 // pred_region
        %p195 = scmp.lt.s32.totalorder %s18, 1
        %s196 = scalar_select %p195, %s18, 1
        %s197 = smul.addr %s196, 20
        %s198 = smul.addr %s197, 4
        %s199 = scalar_lea.vmem %s0, %s198
      $region36: #{a_call__.7} parent=31 // pred_fallthru
        _
    $region32: #{a_call__.7} parent=5 // pred_fallthru
      _
    %p200 = scmp.le.s32.totalorder 1, %s11
    %p201 = scmp.lt.s32.totalorder %s11, 3
    %p202 = pnand %p200, %p201
    %p203 = pneg %p202
    // Predicated region
    $region37: #{a_call__.7} parent=5 // pred_check
      _
    $region38: #{a_call__.7} parent=5 // pred_check_branch
      %205 = sbr.rel (%p202) target = $region40
    $region39: #{a_call__.7} parent=5 // pred_region
      %s206 = ssub.s32 %s11, 1
      %p207 = scmp.lt.s32.totalorder %s20, 1
      %s208 = scalar_select %p207, %s20, 1
      %s209 = smul.addr %s208, 20
      %s210 = smul.addr %s209, 4
      %s211 = scalar_lea.vmem %s0, %s210
      %p212 = pneg %p49
      %p213 = pneg %p46
      %p214 = pneg %p70
      %p215 = pneg %p67
      %p216 = pneg %p91
      %p217 = pneg %p88
      %p218 = pneg %p112
      %p219 = pneg %p109
      %p220 = pneg %p133
      %p221 = pneg %p130
      %p222 = pneg %p161
      %p223 = pneg %p158
      %s224 = smul.u32 8, %s21
      %p225 = scmp.lt.s32.totalorder %s20, 1
      %s226 = scalar_select %p225, %s20, 1
      %p227 = scmp.lt.s32.totalorder %s224, 7
      %s228 = scalar_select %p227, %s224, 7
      %s229 = smul.addr %s226, 8
      %s230 = sadd.s32 %s228, %s229
      %s231 = smul.addr %s230, 8
      %s232 = scalar_lea.vmem %s5, %s231
      %p233 = scmp.lt.s32.totalorder %s20, 1
      %s234 = scalar_select %p233, %s20, 1
      %s235 = smul.addr %s234, 20
      %s236 = smul.addr %s235, 4
      %s237 = scalar_lea.vmem %s0, %s236
      %s238 = smul.u32 8, %s21
      %p239 = scmp.lt.s32.totalorder %s20, 1
      %s240 = scalar_select %p239, %s20, 1
      %p241 = scmp.lt.s32.totalorder %s238, 7
      %s242 = scalar_select %p241, %s238, 7
      %s243 = smul.addr %s240, 8
      %s244 = sadd.s32 %s242, %s243
      %s245 = smul.addr %s244, 8
      %s246 = scalar_lea.vmem %s5, %s245
      %s247 = smul.u32 8, %s21
      %s249 = smul.u32 %s21, 8
      %s250 = smul.u32 %s249, 2
      %s251 = smul.addr %s250, 4
      %s252 = scalar_lea.vmem %s237, %s251
      %v253 = vld [vmem:[%s252] sm:$0xf]
      %v254 = vld [vmem:[%s252 + $0x8] sm:$0xf]
      %v255 = vld [vmem:[%s252 + $0x10] sm:$0xf]
      %v256 = vld [vmem:[%s252 + $0x18] sm:$0xf]
      %v257 = vld [vmem:[%s252 + $0x20] sm:$0xf]
      %v258 = vld [vmem:[%s252 + $0x28] sm:$0xf]
      %v259 = vld [vmem:[%s252 + $0x30] sm:$0xf]
      %v260 = vld [vmem:[%s252 + $0x38] sm:$0xf]
      %v261 = vld [vmem:[%s1] sm:$0xf]
      %v262 = vld [vmem:[%s1 + $0x4] sm:$0xf]
      %v263 = vld [vmem:[%s1 + $0x8] sm:$0xf]
      %v264 = vld [vmem:[%s1 + $0xc] sm:$0xf]
      %v265 = vld [vmem:[%s1 + $0x10] sm:$0xf]
      %v266 = vld [vmem:[%s1 + $0x14] sm:$0xf]
      %v267 = vld [vmem:[%s1 + $0x18] sm:$0xf]
      %v268 = vld [vmem:[%s252 + $0x4] sm:$0x1]
      %v269 = vld [vmem:[%s252 + $0xc] sm:$0x1]
      %v270 = vld [vmem:[%s252 + $0x14] sm:$0x1]
      %v271 = vld [vmem:[%s252 + $0x1c] sm:$0x1]
      %v272 = vld [vmem:[%s252 + $0x24] sm:$0x1]
      %v273 = vld [vmem:[%s252 + $0x2c] sm:$0x1]
      %v274 = vld [vmem:[%s252 + $0x34] sm:$0x1]
      %v275 = vld [vmem:[%s252 + $0x3c] sm:$0x1]
      %vm276 = vsmask.f32 3328
      %vm277 = vsmask.f32 7440
      %vm278 = vmor %vm276, %vm277
      %v280 = vshrl.u32 %v253, 16
      %v282 = vrot.slane %v280, 4
      %v283 = vshll.u32 %v253, 16
      %v285 = vrot.slane %v283, 5
      %v286 = vor.u32 %v282, %v285
      %v287 = vrot.slane %v286, 4
      %v289 = vshll.u32 %v268, 16
      %v291 = vrot.slane %v289, 5
      %v292 = vsel %vm278, %v287, %v291
      %v294 = vshrl.u32 %v254, 16
      %v296 = vrot.slane %v294, 4
      %v297 = vshll.u32 %v254, 16
      %v299 = vrot.slane %v297, 5
      %v300 = vor.u32 %v296, %v299
      %v301 = vrot.slane %v300, 4
      %v303 = vshll.u32 %v269, 16
      %v305 = vrot.slane %v303, 5
      %v306 = vsel %vm278, %v301, %v305
      %v308 = vshrl.u32 %v255, 16
      %v310 = vrot.slane %v308, 4
      %v311 = vshll.u32 %v255, 16
      %v313 = vrot.slane %v311, 5
      %v314 = vor.u32 %v310, %v313
      %v315 = vrot.slane %v314, 4
      %v317 = vshll.u32 %v270, 16
      %v319 = vrot.slane %v317, 5
      %v320 = vsel %vm278, %v315, %v319
      %v322 = vshrl.u32 %v256, 16
      %v324 = vrot.slane %v322, 4
      %v325 = vshll.u32 %v256, 16
      %v327 = vrot.slane %v325, 5
      %v328 = vor.u32 %v324, %v327
      %v329 = vrot.slane %v328, 4
      %v331 = vshll.u32 %v271, 16
      %v333 = vrot.slane %v331, 5
      %v334 = vsel %vm278, %v329, %v333
      %v336 = vshrl.u32 %v257, 16
      %v338 = vrot.slane %v336, 4
      %v339 = vshll.u32 %v257, 16
      %v341 = vrot.slane %v339, 5
      %v342 = vor.u32 %v338, %v341
      %v343 = vrot.slane %v342, 4
      %v345 = vshll.u32 %v272, 16
      %v347 = vrot.slane %v345, 5
      %v348 = vsel %vm278, %v343, %v347
      %v350 = vshrl.u32 %v258, 16
      %v352 = vrot.slane %v350, 4
      %v353 = vshll.u32 %v258, 16
      %v355 = vrot.slane %v353, 5
      %v356 = vor.u32 %v352, %v355
      %v357 = vrot.slane %v356, 4
      %v359 = vshll.u32 %v273, 16
      %v361 = vrot.slane %v359, 5
      %v362 = vsel %vm278, %v357, %v361
      %v364 = vshrl.u32 %v259, 16
      %v366 = vrot.slane %v364, 4
      %v367 = vshll.u32 %v259, 16
      %v369 = vrot.slane %v367, 5
      %v370 = vor.u32 %v366, %v369
      %v371 = vrot.slane %v370, 4
      %v373 = vshll.u32 %v274, 16
      %v375 = vrot.slane %v373, 5
      %v376 = vsel %vm278, %v371, %v375
      %v378 = vshrl.u32 %v260, 16
      %v380 = vrot.slane %v378, 4
      %v381 = vshll.u32 %v260, 16
      %v383 = vrot.slane %v381, 5
      %v384 = vor.u32 %v380, %v383
      %v385 = vrot.slane %v384, 4
      %v387 = vshll.u32 %v275, 16
      %v389 = vrot.slane %v387, 5
      %v390 = vsel %vm278, %v385, %v389
      %s391 = scalar_lea.vmem %s1, 28
      %v392 = vld [vmem:[%s391] sm:$0xf]
      %v393 = vld [vmem:[%s391 + $0x4] sm:$0xf]
      %v394 = vld [vmem:[%s391 + $0x8] sm:$0xf]
      %v395 = vld [vmem:[%s391 + $0xc] sm:$0xf]
      %v396 = vld [vmem:[%s391 + $0x10] sm:$0xf]
      %v397 = vld [vmem:[%s391 + $0x14] sm:$0xf]
      %v398 = vld [vmem:[%s391 + $0x18] sm:$0xf]
      %v399 = vunpack.c.l.b16 %v292
      %v400 = vunpack.c.l.b16 %v306
      %v401 = vunpack.c.l.b16 %v320
      %v402 = vunpack.c.l.b16 %v334
      %v403 = vunpack.c.l.b16 %v348
      %v404 = vunpack.c.l.b16 %v362
      %v405 = vunpack.c.l.b16 %v376
      %v406 = vunpack.c.l.b16 %v390
      %v407 = vpack.c.b16 %v400, %v399
      %v408 = vpack.c.b16 %v402, %v401
      %v409 = vpack.c.b16 %v404, %v403
      %v410 = vpack.c.b16 %v406, %v405
      %v418 = vunpack.c.l.b16 %v392
      %v419 = vunpack.c.l.b16 %v393
      %v420 = vunpack.c.l.b16 %v394
      %v421 = vunpack.c.l.b16 %v395
      %v422 = vunpack.c.l.b16 %v396
      %v423 = vunpack.c.l.b16 %v397
      %v424 = vunpack.c.l.b16 %v398
      %v425 = vpack.c.b16 %v419, %v418
      %v426 = vpack.c.b16 %v421, %v420
      %v427 = vpack.c.b16 %v423, %v422
      %v428 = vpack.c.b16 %v424, %v424
      %vm432 = vcmask 457728
      %v434 = vsel %vm432, %v407, 0
      %v437 = vsel %vm432, %v408, 0
      %v440 = vsel %vm432, %v409, 0
      %v443 = vsel %vm432, %v410, 0
      %vm445 = vcmask 1043456
      %v447 = vsel %vm445, %v428, 0
      %449 = vmatprep.subr.bf16.mxu0 0
      %450 = vmatpush1.bf16.msra.mxu0 0
      %451 = vmatprep.subr.bf16.mxu0 0
      %452 = vmatpush1.bf16.msra.mxu0 0
      %453 = vmatprep.subr.bf16.mxu0 0
      %454 = vmatpush1.bf16.msra.mxu0 0
      %455 = vmatprep.subr.bf16.mxu0 0
      %456 = vmatpush1.bf16.msra.mxu0 0
      %457 = vmatprep.subr.bf16.mxu0 0
      %458 = vmatpush1.bf16.msra.mxu0 %v447
      %459 = vmatprep.subr.bf16.mxu0 0
      %460 = vmatpush1.bf16.msra.mxu0 %v427
      %461 = vmatprep.subr.bf16.mxu0 0
      %462 = vmatpush1.bf16.msra.mxu0 %v426
      %463 = vmatprep.subr.bf16.mxu0 0
      %464 = vmatpush1.bf16.msra.mxu0 %v425
      %465 = vmatprep.subr.bf16.mxu0 0
      %466 = vmatpush2.bf16.msra.mxu0 0
      %467 = vmatprep.subr.bf16.mxu0 0
      %468 = vmatpush2.bf16.msra.mxu0 0
      %469 = vmatprep.subr.bf16.mxu0 0
      %470 = vmatpush2.bf16.msra.mxu0 0
      %471 = vmatprep.subr.bf16.mxu0 0
      %472 = vmatpush2.bf16.msra.mxu0 0
      %473 = vmatprep.subr.bf16.mxu0 0
      %474 = vmatpush2.bf16.msra.mxu0 0
      %475 = vmatprep.subr.bf16.mxu0 0
      %476 = vmatpush2.bf16.msra.mxu0 0
      %477 = vmatprep.subr.bf16.mxu0 0
      %478 = vmatpush2.bf16.msra.mxu0 0
      %479 = vmatprep.subr.bf16.mxu0 0
      %480 = vmatpush2.bf16.msra.mxu0 0
      %481 = vmatprep.mubr.bf16.mxu0 0
      %482 = vmatmul.mubr.bf16.gmra.mxu0 %v434
      %v483 = vpop.f32.mrf.mxu0
      %v484 = vadd.f32 0.0, %v483
      %v485 = vpop.f32.mrf.mxu0
      %v486 = vpop.f32.mrf.mxu0
      %v487 = vadd.f32 0.0, %v486
      %v488 = vpop.f32.mrf.mxu0
      %489 = vmatprep.mubr.bf16.mxu0 0
      %490 = vmatmul.mubr.bf16.gmra.mxu0 %v437
      %v491 = vpop.f32.mrf.mxu0
      %v492 = vadd.f32 0.0, %v491
      %v493 = vpop.f32.mrf.mxu0
      %v494 = vpop.f32.mrf.mxu0
      %v495 = vadd.f32 0.0, %v494
      %v496 = vpop.f32.mrf.mxu0
      %497 = vmatprep.mubr.bf16.mxu0 0
      %498 = vmatmul.mubr.bf16.gmra.mxu0 %v440
      %v499 = vpop.f32.mrf.mxu0
      %v500 = vadd.f32 0.0, %v499
      %v501 = vpop.f32.mrf.mxu0
      %v502 = vpop.f32.mrf.mxu0
      %v503 = vadd.f32 0.0, %v502
      %v504 = vpop.f32.mrf.mxu0
      %505 = vmatprep.mubr.bf16.mxu0 0
      %506 = vmatmul.mubr.bf16.gmra.mxu0 %v443
      %v507 = vpop.f32.mrf.mxu0
      %v508 = vadd.f32 0.0, %v507
      %v509 = vpop.f32.mrf.mxu0
      %v510 = vpop.f32.mrf.mxu0
      %v511 = vadd.f32 0.0, %v510
      %v512 = vpop.f32.mrf.mxu0
      %513 = vdwg.mxu0
      %v522 = vunpack.c.l.b16 %v253
      %v523 = vunpack.c.l.b16 %v254
      %v524 = vunpack.c.l.b16 %v255
      %v525 = vunpack.c.l.b16 %v256
      %v526 = vunpack.c.l.b16 %v257
      %v527 = vunpack.c.l.b16 %v258
      %v528 = vunpack.c.l.b16 %v259
      %v529 = vunpack.c.l.b16 %v260
      %v530 = vpack.c.b16 %v523, %v522
      %v531 = vpack.c.b16 %v525, %v524
      %v532 = vpack.c.b16 %v527, %v526
      %v533 = vpack.c.b16 %v529, %v528
      %v541 = vunpack.c.l.b16 %v261
      %v542 = vunpack.c.l.b16 %v262
      %v543 = vunpack.c.l.b16 %v263
      %v544 = vunpack.c.l.b16 %v264
      %v545 = vunpack.c.l.b16 %v265
      %v546 = vunpack.c.l.b16 %v266
      %v547 = vunpack.c.l.b16 %v267
      %v548 = vpack.c.b16 %v542, %v541
      %v549 = vpack.c.b16 %v544, %v543
      %v550 = vpack.c.b16 %v546, %v545
      %v551 = vpack.c.b16 %v547, %v547
      %v556 = vsel %vm432, %v530, 0
      %v559 = vsel %vm432, %v531, 0
      %v562 = vsel %vm432, %v532, 0
      %v565 = vsel %vm432, %v533, 0
      %v568 = vsel %vm445, %v551, 0
      %570 = vmatprep.subr.bf16.mxu0 0
      %571 = vmatpush1.bf16.msra.mxu0 0
      %572 = vmatprep.subr.bf16.mxu0 0
      %573 = vmatpush1.bf16.msra.mxu0 0
      %574 = vmatprep.subr.bf16.mxu0 0
      %575 = vmatpush1.bf16.msra.mxu0 0
      %576 = vmatprep.subr.bf16.mxu0 0
      %577 = vmatpush1.bf16.msra.mxu0 0
      %578 = vmatprep.subr.bf16.mxu0 0
      %579 = vmatpush1.bf16.msra.mxu0 %v568
      %580 = vmatprep.subr.bf16.mxu0 0
      %581 = vmatpush1.bf16.msra.mxu0 %v550
      %582 = vmatprep.subr.bf16.mxu0 0
      %583 = vmatpush1.bf16.msra.mxu0 %v549
      %584 = vmatprep.subr.bf16.mxu0 0
      %585 = vmatpush1.bf16.msra.mxu0 %v548
      %586 = vmatprep.subr.bf16.mxu0 0
      %587 = vmatpush2.bf16.msra.mxu0 0
      %588 = vmatprep.subr.bf16.mxu0 0
      %589 = vmatpush2.bf16.msra.mxu0 0
      %590 = vmatprep.subr.bf16.mxu0 0
      %591 = vmatpush2.bf16.msra.mxu0 0
      %592 = vmatprep.subr.bf16.mxu0 0
      %593 = vmatpush2.bf16.msra.mxu0 0
      %594 = vmatprep.subr.bf16.mxu0 0
      %595 = vmatpush2.bf16.msra.mxu0 0
      %596 = vmatprep.subr.bf16.mxu0 0
      %597 = vmatpush2.bf16.msra.mxu0 0
      %598 = vmatprep.subr.bf16.mxu0 0
      %599 = vmatpush2.bf16.msra.mxu0 0
      %600 = vmatprep.subr.bf16.mxu0 0
      %601 = vmatpush2.bf16.msra.mxu0 0
      %602 = vmatprep.mubr.bf16.mxu0 0
      %603 = vmatmul.mubr.bf16.gmra.mxu0 %v556
      %v604 = vpop.f32.mrf.mxu0
      %v605 = vadd.f32 %v484, %v604
      %v606 = vpop.f32.mrf.mxu0
      %v607 = vpop.f32.mrf.mxu0
      %v608 = vadd.f32 %v487, %v607
      %v609 = vpop.f32.mrf.mxu0
      %610 = vmatprep.mubr.bf16.mxu0 0
      %611 = vmatmul.mubr.bf16.gmra.mxu0 %v559
      %v612 = vpop.f32.mrf.mxu0
      %v613 = vadd.f32 %v492, %v612
      %v614 = vpop.f32.mrf.mxu0
      %v615 = vpop.f32.mrf.mxu0
      %v616 = vadd.f32 %v495, %v615
      %v617 = vpop.f32.mrf.mxu0
      %618 = vmatprep.mubr.bf16.mxu0 0
      %619 = vmatmul.mubr.bf16.gmra.mxu0 %v562
      %v620 = vpop.f32.mrf.mxu0
      %v621 = vadd.f32 %v500, %v620
      %v622 = vpop.f32.mrf.mxu0
      %v623 = vpop.f32.mrf.mxu0
      %v624 = vadd.f32 %v503, %v623
      %v625 = vpop.f32.mrf.mxu0
      %626 = vmatprep.mubr.bf16.mxu0 0
      %627 = vmatmul.mubr.bf16.gmra.mxu0 %v565
      %v628 = vpop.f32.mrf.mxu0
      %v629 = vadd.f32 %v508, %v628
      %v630 = vpop.f32.mrf.mxu0
      %v631 = vpop.f32.mrf.mxu0
      %v632 = vadd.f32 %v511, %v631
      %v633 = vpop.f32.mrf.mxu0
      %634 = vdwg.mxu0
      %v635 = vld [vmem:[%s252] sm:$0xe]
      %v636 = vld [vmem:[%s252 + $0x8] sm:$0xe]
      %v637 = vld [vmem:[%s252 + $0x10] sm:$0xe]
      %v638 = vld [vmem:[%s252 + $0x18] sm:$0xe]
      %v639 = vld [vmem:[%s252 + $0x20] sm:$0xe]
      %v640 = vld [vmem:[%s252 + $0x28] sm:$0xe]
      %v641 = vld [vmem:[%s252 + $0x30] sm:$0xe]
      %v642 = vld [vmem:[%s252 + $0x38] sm:$0xe]
      %vm659 = vcmask 1042432
      %vm660 = vcmask 1046532
      %vm661 = vmor %vm659, %vm660
      %v662 = vrot.slane %v635, 5
      %v663 = vrot.slane %v662, 4
      %v664 = vrot.slane %v268, 5
      %v665 = vsel %vm661, %v663, %v664
      %v666 = vrot.slane %v636, 5
      %v667 = vrot.slane %v666, 4
      %v668 = vrot.slane %v269, 5
      %v669 = vsel %vm661, %v667, %v668
      %v670 = vrot.slane %v637, 5
      %v671 = vrot.slane %v670, 4
      %v672 = vrot.slane %v270, 5
      %v673 = vsel %vm661, %v671, %v672
      %v674 = vrot.slane %v638, 5
      %v675 = vrot.slane %v674, 4
      %v676 = vrot.slane %v271, 5
      %v677 = vsel %vm661, %v675, %v676
      %v678 = vrot.slane %v639, 5
      %v679 = vrot.slane %v678, 4
      %v680 = vrot.slane %v272, 5
      %v681 = vsel %vm661, %v679, %v680
      %v682 = vrot.slane %v640, 5
      %v683 = vrot.slane %v682, 4
      %v684 = vrot.slane %v273, 5
      %v685 = vsel %vm661, %v683, %v684
      %v686 = vrot.slane %v641, 5
      %v687 = vrot.slane %v686, 4
      %v688 = vrot.slane %v274, 5
      %v689 = vsel %vm661, %v687, %v688
      %v690 = vrot.slane %v642, 5
      %v691 = vrot.slane %v690, 4
      %v692 = vrot.slane %v275, 5
      %v693 = vsel %vm661, %v691, %v692
      %s694 = scalar_lea.vmem %s1, 56
      %v695 = vld [vmem:[%s694] sm:$0xf]
      %v696 = vld [vmem:[%s694 + $0x4] sm:$0xf]
      %v697 = vld [vmem:[%s694 + $0x8] sm:$0xf]
      %v698 = vld [vmem:[%s694 + $0xc] sm:$0xf]
      %v699 = vld [vmem:[%s694 + $0x10] sm:$0xf]
      %v700 = vld [vmem:[%s694 + $0x14] sm:$0xf]
      %v701 = vld [vmem:[%s694 + $0x18] sm:$0xf]
      %v702 = vunpack.c.l.b16 %v665
      %v703 = vunpack.c.l.b16 %v669
      %v704 = vunpack.c.l.b16 %v673
      %v705 = vunpack.c.l.b16 %v677
      %v706 = vunpack.c.l.b16 %v681
      %v707 = vunpack.c.l.b16 %v685
      %v708 = vunpack.c.l.b16 %v689
      %v709 = vunpack.c.l.b16 %v693
      %v710 = vpack.c.b16 %v703, %v702
      %v711 = vpack.c.b16 %v705, %v704
      %v712 = vpack.c.b16 %v707, %v706
      %v713 = vpack.c.b16 %v709, %v708
      %v721 = vunpack.c.l.b16 %v695
      %v722 = vunpack.c.l.b16 %v696
      %v723 = vunpack.c.l.b16 %v697
      %v724 = vunpack.c.l.b16 %v698
      %v725 = vunpack.c.l.b16 %v699
      %v726 = vunpack.c.l.b16 %v700
      %v727 = vunpack.c.l.b16 %v701
      %v728 = vpack.c.b16 %v722, %v721
      %v729 = vpack.c.b16 %v724, %v723
      %v730 = vpack.c.b16 %v726, %v725
      %v731 = vpack.c.b16 %v727, %v727
      %v736 = vsel %vm432, %v710, 0
      %v739 = vsel %vm432, %v711, 0
      %v742 = vsel %vm432, %v712, 0
      %v745 = vsel %vm432, %v713, 0
      %v748 = vsel %vm445, %v731, 0
      %750 = vmatprep.subr.bf16.mxu0 0
      %751 = vmatpush1.bf16.msra.mxu0 0
      %752 = vmatprep.subr.bf16.mxu0 0
      %753 = vmatpush1.bf16.msra.mxu0 0
      %754 = vmatprep.subr.bf16.mxu0 0
      %755 = vmatpush1.bf16.msra.mxu0 0
      %756 = vmatprep.subr.bf16.mxu0 0
      %757 = vmatpush1.bf16.msra.mxu0 0
      %758 = vmatprep.subr.bf16.mxu0 0
      %759 = vmatpush1.bf16.msra.mxu0 %v748
      %760 = vmatprep.subr.bf16.mxu0 0
      %761 = vmatpush1.bf16.msra.mxu0 %v730
      %762 = vmatprep.subr.bf16.mxu0 0
      %763 = vmatpush1.bf16.msra.mxu0 %v729
      %764 = vmatprep.subr.bf16.mxu0 0
      %765 = vmatpush1.bf16.msra.mxu0 %v728
      %766 = vmatprep.subr.bf16.mxu0 0
      %767 = vmatpush2.bf16.msra.mxu0 0
      %768 = vmatprep.subr.bf16.mxu0 0
      %769 = vmatpush2.bf16.msra.mxu0 0
      %770 = vmatprep.subr.bf16.mxu0 0
      %771 = vmatpush2.bf16.msra.mxu0 0
      %772 = vmatprep.subr.bf16.mxu0 0
      %773 = vmatpush2.bf16.msra.mxu0 0
      %774 = vmatprep.subr.bf16.mxu0 0
      %775 = vmatpush2.bf16.msra.mxu0 0
      %776 = vmatprep.subr.bf16.mxu0 0
      %777 = vmatpush2.bf16.msra.mxu0 0
      %778 = vmatprep.subr.bf16.mxu0 0
      %779 = vmatpush2.bf16.msra.mxu0 0
      %780 = vmatprep.subr.bf16.mxu0 0
      %781 = vmatpush2.bf16.msra.mxu0 0
      %782 = vmatprep.mubr.bf16.mxu0 0
      %783 = vmatmul.mubr.bf16.gmra.mxu0 %v736
      %v784 = vpop.f32.mrf.mxu0
      %v785 = vadd.f32 0.0, %v784
      %v786 = vpop.f32.mrf.mxu0
      %v787 = vpop.f32.mrf.mxu0
      %v788 = vadd.f32 0.0, %v787
      %v789 = vpop.f32.mrf.mxu0
      %790 = vmatprep.mubr.bf16.mxu0 0
      %791 = vmatmul.mubr.bf16.gmra.mxu0 %v739
      %v792 = vpop.f32.mrf.mxu0
      %v793 = vadd.f32 0.0, %v792
      %v794 = vpop.f32.mrf.mxu0
      %v795 = vpop.f32.mrf.mxu0
      %v796 = vadd.f32 0.0, %v795
      %v797 = vpop.f32.mrf.mxu0
      %798 = vmatprep.mubr.bf16.mxu0 0
      %799 = vmatmul.mubr.bf16.gmra.mxu0 %v742
      %v800 = vpop.f32.mrf.mxu0
      %v801 = vadd.f32 0.0, %v800
      %v802 = vpop.f32.mrf.mxu0
      %v803 = vpop.f32.mrf.mxu0
      %v804 = vadd.f32 0.0, %v803
      %v805 = vpop.f32.mrf.mxu0
      %806 = vmatprep.mubr.bf16.mxu0 0
      %807 = vmatmul.mubr.bf16.gmra.mxu0 %v745
      %v808 = vpop.f32.mrf.mxu0
      %v809 = vadd.f32 0.0, %v808
      %v810 = vpop.f32.mrf.mxu0
      %v811 = vpop.f32.mrf.mxu0
      %v812 = vadd.f32 0.0, %v811
      %v813 = vpop.f32.mrf.mxu0
      %814 = vdwg.mxu0
      %v815 = vadd.f32 %v605, %v785
      %v816 = vadd.f32 %v608, %v788
      %v817 = vadd.f32 %v613, %v793
      %v818 = vadd.f32 %v616, %v796
      %v819 = vadd.f32 %v621, %v801
      %v820 = vadd.f32 %v624, %v804
      %v821 = vadd.f32 %v629, %v809
      %v822 = vadd.f32 %v632, %v812
      %s823 = sadd.s32 %s249, 1
      %s824 = smul.u32 %s823, 2
      %s825 = smul.addr %s824, 4
      %s826 = scalar_lea.vmem %s237, %s825
      %v827 = vld [vmem:[%s826] sm:$0xf]
      %v828 = vld [vmem:[%s826 + $0x8] sm:$0xf]
      %v829 = vld [vmem:[%s826 + $0x10] sm:$0xf]
      %v830 = vld [vmem:[%s826 + $0x18] sm:$0xf]
      %v831 = vld [vmem:[%s826 + $0x20] sm:$0xf]
      %v832 = vld [vmem:[%s826 + $0x28] sm:$0xf]
      %v833 = vld [vmem:[%s826 + $0x30] sm:$0xf]
      %v834 = vld [vmem:[%s826 + $0x38] sm:$0xf]
      %s835 = scalar_lea.vmem %s1, 84
      %v836 = vld [vmem:[%s835] sm:$0xf]
      %v837 = vld [vmem:[%s835 + $0x4] sm:$0xf]
      %v838 = vld [vmem:[%s835 + $0x8] sm:$0xf]
      %v839 = vld [vmem:[%s835 + $0xc] sm:$0xf]
      %v840 = vld [vmem:[%s835 + $0x10] sm:$0xf]
      %v841 = vld [vmem:[%s835 + $0x14] sm:$0xf]
      %v842 = vld [vmem:[%s835 + $0x18] sm:$0xf]
      %v851 = vunpack.c.l.b16 %v827
      %v852 = vunpack.c.l.b16 %v828
      %v853 = vunpack.c.l.b16 %v829
      %v854 = vunpack.c.l.b16 %v830
      %v855 = vunpack.c.l.b16 %v831
      %v856 = vunpack.c.l.b16 %v832
      %v857 = vunpack.c.l.b16 %v833
      %v858 = vunpack.c.l.b16 %v834
      %v859 = vpack.c.b16 %v852, %v851
      %v860 = vpack.c.b16 %v854, %v853
      %v861 = vpack.c.b16 %v856, %v855
      %v862 = vpack.c.b16 %v858, %v857
      %v870 = vunpack.c.l.b16 %v836
      %v871 = vunpack.c.l.b16 %v837
      %v872 = vunpack.c.l.b16 %v838
      %v873 = vunpack.c.l.b16 %v839
      %v874 = vunpack.c.l.b16 %v840
      %v875 = vunpack.c.l.b16 %v841
      %v876 = vunpack.c.l.b16 %v842
      %v877 = vpack.c.b16 %v871, %v870
      %v878 = vpack.c.b16 %v873, %v872
      %v879 = vpack.c.b16 %v875, %v874
      %v880 = vpack.c.b16 %v876, %v876
      %v885 = vsel %vm432, %v859, 0
      %v888 = vsel %vm432, %v860, 0
      %v891 = vsel %vm432, %v861, 0
      %v894 = vsel %vm432, %v862, 0
      %v897 = vsel %vm445, %v880, 0
      %899 = vmatprep.subr.bf16.mxu0 0
      %900 = vmatpush1.bf16.msra.mxu0 0
      %901 = vmatprep.subr.bf16.mxu0 0
      %902 = vmatpush1.bf16.msra.mxu0 0
      %903 = vmatprep.subr.bf16.mxu0 0
      %904 = vmatpush1.bf16.msra.mxu0 0
      %905 = vmatprep.subr.bf16.mxu0 0
      %906 = vmatpush1.bf16.msra.mxu0 0
      %907 = vmatprep.subr.bf16.mxu0 0
      %908 = vmatpush1.bf16.msra.mxu0 %v897
      %909 = vmatprep.subr.bf16.mxu0 0
      %910 = vmatpush1.bf16.msra.mxu0 %v879
      %911 = vmatprep.subr.bf16.mxu0 0
      %912 = vmatpush1.bf16.msra.mxu0 %v878
      %913 = vmatprep.subr.bf16.mxu0 0
      %914 = vmatpush1.bf16.msra.mxu0 %v877
      %915 = vmatprep.subr.bf16.mxu0 0
      %916 = vmatpush2.bf16.msra.mxu0 0
      %917 = vmatprep.subr.bf16.mxu0 0
      %918 = vmatpush2.bf16.msra.mxu0 0
      %919 = vmatprep.subr.bf16.mxu0 0
      %920 = vmatpush2.bf16.msra.mxu0 0
      %921 = vmatprep.subr.bf16.mxu0 0
      %922 = vmatpush2.bf16.msra.mxu0 0
      %923 = vmatprep.subr.bf16.mxu0 0
      %924 = vmatpush2.bf16.msra.mxu0 0
      %925 = vmatprep.subr.bf16.mxu0 0
      %926 = vmatpush2.bf16.msra.mxu0 0
      %927 = vmatprep.subr.bf16.mxu0 0
      %928 = vmatpush2.bf16.msra.mxu0 0
      %929 = vmatprep.subr.bf16.mxu0 0
      %930 = vmatpush2.bf16.msra.mxu0 0
      %931 = vmatprep.mubr.bf16.mxu0 0
      %932 = vmatmul.mubr.bf16.gmra.mxu0 %v885
      %v933 = vpop.f32.mrf.mxu0
      %v934 = vadd.f32 0.0, %v933
      %v935 = vpop.f32.mrf.mxu0
      %v936 = vpop.f32.mrf.mxu0
      %v937 = vadd.f32 0.0, %v936
      %v938 = vpop.f32.mrf.mxu0
      %939 = vmatprep.mubr.bf16.mxu0 0
      %940 = vmatmul.mubr.bf16.gmra.mxu0 %v888
      %v941 = vpop.f32.mrf.mxu0
      %v942 = vadd.f32 0.0, %v941
      %v943 = vpop.f32.mrf.mxu0
      %v944 = vpop.f32.mrf.mxu0
      %v945 = vadd.f32 0.0, %v944
      %v946 = vpop.f32.mrf.mxu0
      %947 = vmatprep.mubr.bf16.mxu0 0
      %948 = vmatmul.mubr.bf16.gmra.mxu0 %v891
      %v949 = vpop.f32.mrf.mxu0
      %v950 = vadd.f32 0.0, %v949
      %v951 = vpop.f32.mrf.mxu0
      %v952 = vpop.f32.mrf.mxu0
      %v953 = vadd.f32 0.0, %v952
      %v954 = vpop.f32.mrf.mxu0
      %955 = vmatprep.mubr.bf16.mxu0 0
      %956 = vmatmul.mubr.bf16.gmra.mxu0 %v894
      %v957 = vpop.f32.mrf.mxu0
      %v958 = vadd.f32 0.0, %v957
      %v959 = vpop.f32.mrf.mxu0
      %v960 = vpop.f32.mrf.mxu0
      %v961 = vadd.f32 0.0, %v960
      %v962 = vpop.f32.mrf.mxu0
      %963 = vdwg.mxu0
      %v964 = vadd.f32 %v815, %v934
      %v965 = vadd.f32 %v816, %v937
      %v966 = vadd.f32 %v817, %v942
      %v967 = vadd.f32 %v818, %v945
      %v968 = vadd.f32 %v819, %v950
      %v969 = vadd.f32 %v820, %v953
      %v970 = vadd.f32 %v821, %v958
      %v971 = vadd.f32 %v822, %v961
      %v972 = vld [vmem:[%s826] sm:$0xf]
      %v973 = vld [vmem:[%s826 + $0x4] sm:$0x1]
      %v974 = vld [vmem:[%s826 + $0x8] sm:$0xf]
      %v975 = vld [vmem:[%s826 + $0xc] sm:$0x1]
      %v976 = vld [vmem:[%s826 + $0x10] sm:$0xf]
      %v977 = vld [vmem:[%s826 + $0x14] sm:$0x1]
      %v978 = vld [vmem:[%s826 + $0x18] sm:$0xf]
      %v979 = vld [vmem:[%s826 + $0x1c] sm:$0x1]
      %v980 = vld [vmem:[%s826 + $0x20] sm:$0xf]
      %v981 = vld [vmem:[%s826 + $0x24] sm:$0x1]
      %v982 = vld [vmem:[%s826 + $0x28] sm:$0xf]
      %v983 = vld [vmem:[%s826 + $0x2c] sm:$0x1]
      %v984 = vld [vmem:[%s826 + $0x30] sm:$0xf]
      %v985 = vld [vmem:[%s826 + $0x34] sm:$0x1]
      %v986 = vld [vmem:[%s826 + $0x38] sm:$0xf]
      %v987 = vld [vmem:[%s826 + $0x3c] sm:$0x1]
      %v989 = vshrl.u32 %v972, 16
      %v991 = vrot.slane %v989, 4
      %v992 = vshll.u32 %v972, 16
      %v994 = vrot.slane %v992, 5
      %v995 = vor.u32 %v991, %v994
      %v996 = vrot.slane %v995, 4
      %v998 = vshll.u32 %v973, 16
      %v1000 = vrot.slane %v998, 5
      %v1001 = vsel %vm278, %v996, %v1000
      %v1003 = vshrl.u32 %v974, 16
      %v1005 = vrot.slane %v1003, 4
      %v1006 = vshll.u32 %v974, 16
      %v1008 = vrot.slane %v1006, 5
      %v1009 = vor.u32 %v1005, %v1008
      %v1010 = vrot.slane %v1009, 4
      %v1012 = vshll.u32 %v975, 16
      %v1014 = vrot.slane %v1012, 5
      %v1015 = vsel %vm278, %v1010, %v1014
      %v1017 = vshrl.u32 %v976, 16
      %v1019 = vrot.slane %v1017, 4
      %v1020 = vshll.u32 %v976, 16
      %v1022 = vrot.slane %v1020, 5
      %v1023 = vor.u32 %v1019, %v1022
      %v1024 = vrot.slane %v1023, 4
      %v1026 = vshll.u32 %v977, 16
      %v1028 = vrot.slane %v1026, 5
      %v1029 = vsel %vm278, %v1024, %v1028
      %v1031 = vshrl.u32 %v978, 16
      %v1033 = vrot.slane %v1031, 4
      %v1034 = vshll.u32 %v978, 16
      %v1036 = vrot.slane %v1034, 5
      %v1037 = vor.u32 %v1033, %v1036
      %v1038 = vrot.slane %v1037, 4
      %v1040 = vshll.u32 %v979, 16
      %v1042 = vrot.slane %v1040, 5
      %v1043 = vsel %vm278, %v1038, %v1042
      %v1045 = vshrl.u32 %v980, 16
      %v1047 = vrot.slane %v1045, 4
      %v1048 = vshll.u32 %v980, 16
      %v1050 = vrot.slane %v1048, 5
      %v1051 = vor.u32 %v1047, %v1050
      %v1052 = vrot.slane %v1051, 4
      %v1054 = vshll.u32 %v981, 16
      %v1056 = vrot.slane %v1054, 5
      %v1057 = vsel %vm278, %v1052, %v1056
      %v1059 = vshrl.u32 %v982, 16
      %v1061 = vrot.slane %v1059, 4
      %v1062 = vshll.u32 %v982, 16
      %v1064 = vrot.slane %v1062, 5
      %v1065 = vor.u32 %v1061, %v1064
      %v1066 = vrot.slane %v1065, 4
      %v1068 = vshll.u32 %v983, 16
      %v1070 = vrot.slane %v1068, 5
      %v1071 = vsel %vm278, %v1066, %v1070
      %v1073 = vshrl.u32 %v984, 16
      %v1075 = vrot.slane %v1073, 4
      %v1076 = vshll.u32 %v984, 16
      %v1078 = vrot.slane %v1076, 5
      %v1079 = vor.u32 %v1075, %v1078
      %v1080 = vrot.slane %v1079, 4
      %v1082 = vshll.u32 %v985, 16
      %v1084 = vrot.slane %v1082, 5
      %v1085 = vsel %vm278, %v1080, %v1084
      %v1087 = vshrl.u32 %v986, 16
      %v1089 = vrot.slane %v1087, 4
      %v1090 = vshll.u32 %v986, 16
      %v1092 = vrot.slane %v1090, 5
      %v1093 = vor.u32 %v1089, %v1092
      %v1094 = vrot.slane %v1093, 4
      %v1096 = vshll.u32 %v987, 16
      %v1098 = vrot.slane %v1096, 5
      %v1099 = vsel %vm278, %v1094, %v1098
      %s1100 = scalar_lea.vmem %s1, 112
      %v1101 = vld [vmem:[%s1100] sm:$0xf]
      %v1102 = vld [vmem:[%s1100 + $0x4] sm:$0xf]
      %v1103 = vld [vmem:[%s1100 + $0x8] sm:$0xf]
      %v1104 = vld [vmem:[%s1100 + $0xc] sm:$0xf]
      %v1105 = vld [vmem:[%s1100 + $0x10] sm:$0xf]
      %v1106 = vld [vmem:[%s1100 + $0x14] sm:$0xf]
      %v1107 = vld [vmem:[%s1100 + $0x18] sm:$0xf]
      %v1108 = vunpack.c.l.b16 %v1001
      %v1109 = vunpack.c.l.b16 %v1015
      %v1110 = vunpack.c.l.b16 %v1029
      %v1111 = vunpack.c.l.b16 %v1043
      %v1112 = vunpack.c.l.b16 %v1057
      %v1113 = vunpack.c.l.b16 %v1071
      %v1114 = vunpack.c.l.b16 %v1085
      %v1115 = vunpack.c.l.b16 %v1099
      %v1116 = vpack.c.b16 %v1109, %v1108
      %v1117 = vpack.c.b16 %v1111, %v1110
      %v1118 = vpack.c.b16 %v1113, %v1112
      %v1119 = vpack.c.b16 %v1115, %v1114
      %v1127 = vunpack.c.l.b16 %v1101
      %v1128 = vunpack.c.l.b16 %v1102
      %v1129 = vunpack.c.l.b16 %v1103
      %v1130 = vunpack.c.l.b16 %v1104
      %v1131 = vunpack.c.l.b16 %v1105
      %v1132 = vunpack.c.l.b16 %v1106
      %v1133 = vunpack.c.l.b16 %v1107
      %v1134 = vpack.c.b16 %v1128, %v1127
      %v1135 = vpack.c.b16 %v1130, %v1129
      %v1136 = vpack.c.b16 %v1132, %v1131
      %v1137 = vpack.c.b16 %v1133, %v1133
      %v1142 = vsel %vm432, %v1116, 0
      %v1145 = vsel %vm432, %v1117, 0
      %v1148 = vsel %vm432, %v1118, 0
      %v1151 = vsel %vm432, %v1119, 0
      %v1154 = vsel %vm445, %v1137, 0
      %1156 = vmatprep.subr.bf16.mxu0 0
      %1157 = vmatpush1.bf16.msra.mxu0 0
      %1158 = vmatprep.subr.bf16.mxu0 0
      %1159 = vmatpush1.bf16.msra.mxu0 0
      %1160 = vmatprep.subr.bf16.mxu0 0
      %1161 = vmatpush1.bf16.msra.mxu0 0
      %1162 = vmatprep.subr.bf16.mxu0 0
      %1163 = vmatpush1.bf16.msra.mxu0 0
      %1164 = vmatprep.subr.bf16.mxu0 0
      %1165 = vmatpush1.bf16.msra.mxu0 %v1154
      %1166 = vmatprep.subr.bf16.mxu0 0
      %1167 = vmatpush1.bf16.msra.mxu0 %v1136
      %1168 = vmatprep.subr.bf16.mxu0 0
      %1169 = vmatpush1.bf16.msra.mxu0 %v1135
      %1170 = vmatprep.subr.bf16.mxu0 0
      %1171 = vmatpush1.bf16.msra.mxu0 %v1134
      %1172 = vmatprep.subr.bf16.mxu0 0
      %1173 = vmatpush2.bf16.msra.mxu0 0
      %1174 = vmatprep.subr.bf16.mxu0 0
      %1175 = vmatpush2.bf16.msra.mxu0 0
      %1176 = vmatprep.subr.bf16.mxu0 0
      %1177 = vmatpush2.bf16.msra.mxu0 0
      %1178 = vmatprep.subr.bf16.mxu0 0
      %1179 = vmatpush2.bf16.msra.mxu0 0
      %1180 = vmatprep.subr.bf16.mxu0 0
      %1181 = vmatpush2.bf16.msra.mxu0 0
      %1182 = vmatprep.subr.bf16.mxu0 0
      %1183 = vmatpush2.bf16.msra.mxu0 0
      %1184 = vmatprep.subr.bf16.mxu0 0
      %1185 = vmatpush2.bf16.msra.mxu0 0
      %1186 = vmatprep.subr.bf16.mxu0 0
      %1187 = vmatpush2.bf16.msra.mxu0 0
      %1188 = vmatprep.mubr.bf16.mxu0 0
      %1189 = vmatmul.mubr.bf16.gmra.mxu0 %v1142
      %v1190 = vpop.f32.mrf.mxu0
      %v1191 = vadd.f32 0.0, %v1190
      %v1192 = vpop.f32.mrf.mxu0
      %v1193 = vpop.f32.mrf.mxu0
      %v1194 = vadd.f32 0.0, %v1193
      %v1195 = vpop.f32.mrf.mxu0
      %1196 = vmatprep.mubr.bf16.mxu0 0
      %1197 = vmatmul.mubr.bf16.gmra.mxu0 %v1145
      %v1198 = vpop.f32.mrf.mxu0
      %v1199 = vadd.f32 0.0, %v1198
      %v1200 = vpop.f32.mrf.mxu0
      %v1201 = vpop.f32.mrf.mxu0
      %v1202 = vadd.f32 0.0, %v1201
      %v1203 = vpop.f32.mrf.mxu0
      %1204 = vmatprep.mubr.bf16.mxu0 0
      %1205 = vmatmul.mubr.bf16.gmra.mxu0 %v1148
      %v1206 = vpop.f32.mrf.mxu0
      %v1207 = vadd.f32 0.0, %v1206
      %v1208 = vpop.f32.mrf.mxu0
      %v1209 = vpop.f32.mrf.mxu0
      %v1210 = vadd.f32 0.0, %v1209
      %v1211 = vpop.f32.mrf.mxu0
      %1212 = vmatprep.mubr.bf16.mxu0 0
      %1213 = vmatmul.mubr.bf16.gmra.mxu0 %v1151
      %v1214 = vpop.f32.mrf.mxu0
      %v1215 = vadd.f32 0.0, %v1214
      %v1216 = vpop.f32.mrf.mxu0
      %v1217 = vpop.f32.mrf.mxu0
      %v1218 = vadd.f32 0.0, %v1217
      %v1219 = vpop.f32.mrf.mxu0
      %1220 = vdwg.mxu0
      %v1221 = vadd.f32 %v964, %v1191
      %v1222 = vadd.f32 %v965, %v1194
      %v1223 = vadd.f32 %v966, %v1199
      %v1224 = vadd.f32 %v967, %v1202
      %v1225 = vadd.f32 %v968, %v1207
      %v1226 = vadd.f32 %v969, %v1210
      %v1227 = vadd.f32 %v970, %v1215
      %v1228 = vadd.f32 %v971, %v1218
      %v1229 = vld [vmem:[%s826] sm:$0xe]
      %v1230 = vld [vmem:[%s826 + $0x8] sm:$0xe]
      %v1231 = vld [vmem:[%s826 + $0x10] sm:$0xe]
      %v1232 = vld [vmem:[%s826 + $0x18] sm:$0xe]
      %v1233 = vld [vmem:[%s826 + $0x20] sm:$0xe]
      %v1234 = vld [vmem:[%s826 + $0x28] sm:$0xe]
      %v1235 = vld [vmem:[%s826 + $0x30] sm:$0xe]
      %v1236 = vld [vmem:[%s826 + $0x38] sm:$0xe]
      %v1253 = vrot.slane %v1229, 5
      %v1254 = vrot.slane %v1253, 4
      %v1255 = vrot.slane %v973, 5
      %v1256 = vsel %vm661, %v1254, %v1255
      %v1257 = vrot.slane %v1230, 5
      %v1258 = vrot.slane %v1257, 4
      %v1259 = vrot.slane %v975, 5
      %v1260 = vsel %vm661, %v1258, %v1259
      %v1261 = vrot.slane %v1231, 5
      %v1262 = vrot.slane %v1261, 4
      %v1263 = vrot.slane %v977, 5
      %v1264 = vsel %vm661, %v1262, %v1263
      %v1265 = vrot.slane %v1232, 5
      %v1266 = vrot.slane %v1265, 4
      %v1267 = vrot.slane %v979, 5
      %v1268 = vsel %vm661, %v1266, %v1267
      %v1269 = vrot.slane %v1233, 5
      %v1270 = vrot.slane %v1269, 4
      %v1271 = vrot.slane %v981, 5
      %v1272 = vsel %vm661, %v1270, %v1271
      %v1273 = vrot.slane %v1234, 5
      %v1274 = vrot.slane %v1273, 4
      %v1275 = vrot.slane %v983, 5
      %v1276 = vsel %vm661, %v1274, %v1275
      %v1277 = vrot.slane %v1235, 5
      %v1278 = vrot.slane %v1277, 4
      %v1279 = vrot.slane %v985, 5
      %v1280 = vsel %vm661, %v1278, %v1279
      %v1281 = vrot.slane %v1236, 5
      %v1282 = vrot.slane %v1281, 4
      %v1283 = vrot.slane %v987, 5
      %v1284 = vsel %vm661, %v1282, %v1283
      %s1285 = scalar_lea.vmem %s1, 140
      %v1286 = vld [vmem:[%s1285] sm:$0xf]
      %v1287 = vld [vmem:[%s1285 + $0x4] sm:$0xf]
      %v1288 = vld [vmem:[%s1285 + $0x8] sm:$0xf]
      %v1289 = vld [vmem:[%s1285 + $0xc] sm:$0xf]
      %v1290 = vld [vmem:[%s1285 + $0x10] sm:$0xf]
      %v1291 = vld [vmem:[%s1285 + $0x14] sm:$0xf]
      %v1292 = vld [vmem:[%s1285 + $0x18] sm:$0xf]
      %v1293 = vunpack.c.l.b16 %v1256
      %v1294 = vunpack.c.l.b16 %v1260
      %v1295 = vunpack.c.l.b16 %v1264
      %v1296 = vunpack.c.l.b16 %v1268
      %v1297 = vunpack.c.l.b16 %v1272
      %v1298 = vunpack.c.l.b16 %v1276
      %v1299 = vunpack.c.l.b16 %v1280
      %v1300 = vunpack.c.l.b16 %v1284
      %v1301 = vpack.c.b16 %v1294, %v1293
      %v1302 = vpack.c.b16 %v1296, %v1295
      %v1303 = vpack.c.b16 %v1298, %v1297
      %v1304 = vpack.c.b16 %v1300, %v1299
      %v1312 = vunpack.c.l.b16 %v1286
      %v1313 = vunpack.c.l.b16 %v1287
      %v1314 = vunpack.c.l.b16 %v1288
      %v1315 = vunpack.c.l.b16 %v1289
      %v1316 = vunpack.c.l.b16 %v1290
      %v1317 = vunpack.c.l.b16 %v1291
      %v1318 = vunpack.c.l.b16 %v1292
      %v1319 = vpack.c.b16 %v1313, %v1312
      %v1320 = vpack.c.b16 %v1315, %v1314
      %v1321 = vpack.c.b16 %v1317, %v1316
      %v1322 = vpack.c.b16 %v1318, %v1318
      %v1327 = vsel %vm432, %v1301, 0
      %v1330 = vsel %vm432, %v1302, 0
      %v1333 = vsel %vm432, %v1303, 0
      %v1336 = vsel %vm432, %v1304, 0
      %v1339 = vsel %vm445, %v1322, 0
      %1341 = vmatprep.subr.bf16.mxu0 0
      %1342 = vmatpush1.bf16.msra.mxu0 0
      %1343 = vmatprep.subr.bf16.mxu0 0
      %1344 = vmatpush1.bf16.msra.mxu0 0
      %1345 = vmatprep.subr.bf16.mxu0 0
      %1346 = vmatpush1.bf16.msra.mxu0 0
      %1347 = vmatprep.subr.bf16.mxu0 0
      %1348 = vmatpush1.bf16.msra.mxu0 0
      %1349 = vmatprep.subr.bf16.mxu0 0
      %1350 = vmatpush1.bf16.msra.mxu0 %v1339
      %1351 = vmatprep.subr.bf16.mxu0 0
      %1352 = vmatpush1.bf16.msra.mxu0 %v1321
      %1353 = vmatprep.subr.bf16.mxu0 0
      %1354 = vmatpush1.bf16.msra.mxu0 %v1320
      %1355 = vmatprep.subr.bf16.mxu0 0
      %1356 = vmatpush1.bf16.msra.mxu0 %v1319
      %1357 = vmatprep.subr.bf16.mxu0 0
      %1358 = vmatpush2.bf16.msra.mxu0 0
      %1359 = vmatprep.subr.bf16.mxu0 0
      %1360 = vmatpush2.bf16.msra.mxu0 0
      %1361 = vmatprep.subr.bf16.mxu0 0
      %1362 = vmatpush2.bf16.msra.mxu0 0
      %1363 = vmatprep.subr.bf16.mxu0 0
      %1364 = vmatpush2.bf16.msra.mxu0 0
      %1365 = vmatprep.subr.bf16.mxu0 0
      %1366 = vmatpush2.bf16.msra.mxu0 0
      %1367 = vmatprep.subr.bf16.mxu0 0
      %1368 = vmatpush2.bf16.msra.mxu0 0
      %1369 = vmatprep.subr.bf16.mxu0 0
      %1370 = vmatpush2.bf16.msra.mxu0 0
      %1371 = vmatprep.subr.bf16.mxu0 0
      %1372 = vmatpush2.bf16.msra.mxu0 0
      %1373 = vmatprep.mubr.bf16.mxu0 0
      %1374 = vmatmul.mubr.bf16.gmra.mxu0 %v1327
      %v1375 = vpop.f32.mrf.mxu0
      %v1376 = vadd.f32 0.0, %v1375
      %v1377 = vpop.f32.mrf.mxu0
      %v1378 = vpop.f32.mrf.mxu0
      %v1379 = vadd.f32 0.0, %v1378
      %v1380 = vpop.f32.mrf.mxu0
      %1381 = vmatprep.mubr.bf16.mxu0 0
      %1382 = vmatmul.mubr.bf16.gmra.mxu0 %v1330
      %v1383 = vpop.f32.mrf.mxu0
      %v1384 = vadd.f32 0.0, %v1383
      %v1385 = vpop.f32.mrf.mxu0
      %v1386 = vpop.f32.mrf.mxu0
      %v1387 = vadd.f32 0.0, %v1386
      %v1388 = vpop.f32.mrf.mxu0
      %1389 = vmatprep.mubr.bf16.mxu0 0
      %1390 = vmatmul.mubr.bf16.gmra.mxu0 %v1333
      %v1391 = vpop.f32.mrf.mxu0
      %v1392 = vadd.f32 0.0, %v1391
      %v1393 = vpop.f32.mrf.mxu0
      %v1394 = vpop.f32.mrf.mxu0
      %v1395 = vadd.f32 0.0, %v1394
      %v1396 = vpop.f32.mrf.mxu0
      %1397 = vmatprep.mubr.bf16.mxu0 0
      %1398 = vmatmul.mubr.bf16.gmra.mxu0 %v1336
      %v1399 = vpop.f32.mrf.mxu0
      %v1400 = vadd.f32 0.0, %v1399
      %v1401 = vpop.f32.mrf.mxu0
      %v1402 = vpop.f32.mrf.mxu0
      %v1403 = vadd.f32 0.0, %v1402
      %v1404 = vpop.f32.mrf.mxu0
      %1405 = vdwg.mxu0
      %v1406 = vadd.f32 %v1221, %v1376
      %v1407 = vadd.f32 %v1222, %v1379
      %v1408 = vadd.f32 %v1223, %v1384
      %v1409 = vadd.f32 %v1224, %v1387
      %v1410 = vadd.f32 %v1225, %v1392
      %v1411 = vadd.f32 %v1226, %v1395
      %v1412 = vadd.f32 %v1227, %v1400
      %v1413 = vadd.f32 %v1228, %v1403
      %s1414 = sadd.s32 %s249, 2
      %s1415 = smul.u32 %s1414, 2
      %s1416 = smul.addr %s1415, 4
      %s1417 = scalar_lea.vmem %s237, %s1416
      %v1418 = vld [vmem:[%s1417] sm:$0xf]
      %v1419 = vld [vmem:[%s1417 + $0x8] sm:$0xf]
      %v1420 = vld [vmem:[%s1417 + $0x10] sm:$0xf]
      %v1421 = vld [vmem:[%s1417 + $0x18] sm:$0xf]
      %v1422 = vld [vmem:[%s1417 + $0x20] sm:$0xf]
      %v1423 = vld [vmem:[%s1417 + $0x28] sm:$0xf]
      %v1424 = vld [vmem:[%s1417 + $0x30] sm:$0xf]
      %v1425 = vld [vmem:[%s1417 + $0x38] sm:$0xf]
      %s1426 = scalar_lea.vmem %s1, 168
      %v1427 = vld [vmem:[%s1426] sm:$0xf]
      %v1428 = vld [vmem:[%s1426 + $0x4] sm:$0xf]
      %v1429 = vld [vmem:[%s1426 + $0x8] sm:$0xf]
      %v1430 = vld [vmem:[%s1426 + $0xc] sm:$0xf]
      %v1431 = vld [vmem:[%s1426 + $0x10] sm:$0xf]
      %v1432 = vld [vmem:[%s1426 + $0x14] sm:$0xf]
      %v1433 = vld [vmem:[%s1426 + $0x18] sm:$0xf]
      %v1442 = vunpack.c.l.b16 %v1418
      %v1443 = vunpack.c.l.b16 %v1419
      %v1444 = vunpack.c.l.b16 %v1420
      %v1445 = vunpack.c.l.b16 %v1421
      %v1446 = vunpack.c.l.b16 %v1422
      %v1447 = vunpack.c.l.b16 %v1423
      %v1448 = vunpack.c.l.b16 %v1424
      %v1449 = vunpack.c.l.b16 %v1425
      %v1450 = vpack.c.b16 %v1443, %v1442
      %v1451 = vpack.c.b16 %v1445, %v1444
      %v1452 = vpack.c.b16 %v1447, %v1446
      %v1453 = vpack.c.b16 %v1449, %v1448
      %v1461 = vunpack.c.l.b16 %v1427
      %v1462 = vunpack.c.l.b16 %v1428
      %v1463 = vunpack.c.l.b16 %v1429
      %v1464 = vunpack.c.l.b16 %v1430
      %v1465 = vunpack.c.l.b16 %v1431
      %v1466 = vunpack.c.l.b16 %v1432
      %v1467 = vunpack.c.l.b16 %v1433
      %v1468 = vpack.c.b16 %v1462, %v1461
      %v1469 = vpack.c.b16 %v1464, %v1463
      %v1470 = vpack.c.b16 %v1466, %v1465
      %v1471 = vpack.c.b16 %v1467, %v1467
      %v1476 = vsel %vm432, %v1450, 0
      %v1479 = vsel %vm432, %v1451, 0
      %v1482 = vsel %vm432, %v1452, 0
      %v1485 = vsel %vm432, %v1453, 0
      %v1488 = vsel %vm445, %v1471, 0
      %1490 = vmatprep.subr.bf16.mxu0 0
      %1491 = vmatpush1.bf16.msra.mxu0 0
      %1492 = vmatprep.subr.bf16.mxu0 0
      %1493 = vmatpush1.bf16.msra.mxu0 0
      %1494 = vmatprep.subr.bf16.mxu0 0
      %1495 = vmatpush1.bf16.msra.mxu0 0
      %1496 = vmatprep.subr.bf16.mxu0 0
      %1497 = vmatpush1.bf16.msra.mxu0 0
      %1498 = vmatprep.subr.bf16.mxu0 0
      %1499 = vmatpush1.bf16.msra.mxu0 %v1488
      %1500 = vmatprep.subr.bf16.mxu0 0
      %1501 = vmatpush1.bf16.msra.mxu0 %v1470
      %1502 = vmatprep.subr.bf16.mxu0 0
      %1503 = vmatpush1.bf16.msra.mxu0 %v1469
      %1504 = vmatprep.subr.bf16.mxu0 0
      %1505 = vmatpush1.bf16.msra.mxu0 %v1468
      %1506 = vmatprep.subr.bf16.mxu0 0
      %1507 = vmatpush2.bf16.msra.mxu0 0
      %1508 = vmatprep.subr.bf16.mxu0 0
      %1509 = vmatpush2.bf16.msra.mxu0 0
      %1510 = vmatprep.subr.bf16.mxu0 0
      %1511 = vmatpush2.bf16.msra.mxu0 0
      %1512 = vmatprep.subr.bf16.mxu0 0
      %1513 = vmatpush2.bf16.msra.mxu0 0
      %1514 = vmatprep.subr.bf16.mxu0 0
      %1515 = vmatpush2.bf16.msra.mxu0 0
      %1516 = vmatprep.subr.bf16.mxu0 0
      %1517 = vmatpush2.bf16.msra.mxu0 0
      %1518 = vmatprep.subr.bf16.mxu0 0
      %1519 = vmatpush2.bf16.msra.mxu0 0
      %1520 = vmatprep.subr.bf16.mxu0 0
      %1521 = vmatpush2.bf16.msra.mxu0 0
      %1522 = vmatprep.mubr.bf16.mxu0 0
      %1523 = vmatmul.mubr.bf16.gmra.mxu0 %v1476
      %v1524 = vpop.f32.mrf.mxu0
      %v1525 = vadd.f32 0.0, %v1524
      %v1526 = vpop.f32.mrf.mxu0
      %v1527 = vpop.f32.mrf.mxu0
      %v1528 = vadd.f32 0.0, %v1527
      %v1529 = vpop.f32.mrf.mxu0
      %1530 = vmatprep.mubr.bf16.mxu0 0
      %1531 = vmatmul.mubr.bf16.gmra.mxu0 %v1479
      %v1532 = vpop.f32.mrf.mxu0
      %v1533 = vadd.f32 0.0, %v1532
      %v1534 = vpop.f32.mrf.mxu0
      %v1535 = vpop.f32.mrf.mxu0
      %v1536 = vadd.f32 0.0, %v1535
      %v1537 = vpop.f32.mrf.mxu0
      %1538 = vmatprep.mubr.bf16.mxu0 0
      %1539 = vmatmul.mubr.bf16.gmra.mxu0 %v1482
      %v1540 = vpop.f32.mrf.mxu0
      %v1541 = vadd.f32 0.0, %v1540
      %v1542 = vpop.f32.mrf.mxu0
      %v1543 = vpop.f32.mrf.mxu0
      %v1544 = vadd.f32 0.0, %v1543
      %v1545 = vpop.f32.mrf.mxu0
      %1546 = vmatprep.mubr.bf16.mxu0 0
      %1547 = vmatmul.mubr.bf16.gmra.mxu0 %v1485
      %v1548 = vpop.f32.mrf.mxu0
      %v1549 = vadd.f32 0.0, %v1548
      %v1550 = vpop.f32.mrf.mxu0
      %v1551 = vpop.f32.mrf.mxu0
      %v1552 = vadd.f32 0.0, %v1551
      %v1553 = vpop.f32.mrf.mxu0
      %1554 = vdwg.mxu0
      %v1555 = vadd.f32 %v1406, %v1525
      %v1556 = vadd.f32 %v1407, %v1528
      %v1557 = vadd.f32 %v1408, %v1533
      %v1558 = vadd.f32 %v1409, %v1536
      %v1559 = vadd.f32 %v1410, %v1541
      %v1560 = vadd.f32 %v1411, %v1544
      %v1561 = vadd.f32 %v1412, %v1549
      %v1562 = vadd.f32 %v1413, %v1552
      %v1563 = vld [vmem:[%s1417] sm:$0xf]
      %v1564 = vld [vmem:[%s1417 + $0x4] sm:$0x1]
      %v1565 = vld [vmem:[%s1417 + $0x8] sm:$0xf]
      %v1566 = vld [vmem:[%s1417 + $0xc] sm:$0x1]
      %v1567 = vld [vmem:[%s1417 + $0x10] sm:$0xf]
      %v1568 = vld [vmem:[%s1417 + $0x14] sm:$0x1]
      %v1569 = vld [vmem:[%s1417 + $0x18] sm:$0xf]
      %v1570 = vld [vmem:[%s1417 + $0x1c] sm:$0x1]
      %v1571 = vld [vmem:[%s1417 + $0x20] sm:$0xf]
      %v1572 = vld [vmem:[%s1417 + $0x24] sm:$0x1]
      %v1573 = vld [vmem:[%s1417 + $0x28] sm:$0xf]
      %v1574 = vld [vmem:[%s1417 + $0x2c] sm:$0x1]
      %v1575 = vld [vmem:[%s1417 + $0x30] sm:$0xf]
      %v1576 = vld [vmem:[%s1417 + $0x34] sm:$0x1]
      %v1577 = vld [vmem:[%s1417 + $0x38] sm:$0xf]
      %v1578 = vld [vmem:[%s1417 + $0x3c] sm:$0x1]
      %v1580 = vshrl.u32 %v1563, 16
      %v1582 = vrot.slane %v1580, 4
      %v1583 = vshll.u32 %v1563, 16
      %v1585 = vrot.slane %v1583, 5
      %v1586 = vor.u32 %v1582, %v1585
      %v1587 = vrot.slane %v1586, 4
      %v1589 = vshll.u32 %v1564, 16
      %v1591 = vrot.slane %v1589, 5
      %v1592 = vsel %vm278, %v1587, %v1591
      %v1594 = vshrl.u32 %v1565, 16
      %v1596 = vrot.slane %v1594, 4
      %v1597 = vshll.u32 %v1565, 16
      %v1599 = vrot.slane %v1597, 5
      %v1600 = vor.u32 %v1596, %v1599
      %v1601 = vrot.slane %v1600, 4
      %v1603 = vshll.u32 %v1566, 16
      %v1605 = vrot.slane %v1603, 5
      %v1606 = vsel %vm278, %v1601, %v1605
      %v1608 = vshrl.u32 %v1567, 16
      %v1610 = vrot.slane %v1608, 4
      %v1611 = vshll.u32 %v1567, 16
      %v1613 = vrot.slane %v1611, 5
      %v1614 = vor.u32 %v1610, %v1613
      %v1615 = vrot.slane %v1614, 4
      %v1617 = vshll.u32 %v1568, 16
      %v1619 = vrot.slane %v1617, 5
      %v1620 = vsel %vm278, %v1615, %v1619
      %v1622 = vshrl.u32 %v1569, 16
      %v1624 = vrot.slane %v1622, 4
      %v1625 = vshll.u32 %v1569, 16
      %v1627 = vrot.slane %v1625, 5
      %v1628 = vor.u32 %v1624, %v1627
      %v1629 = vrot.slane %v1628, 4
      %v1631 = vshll.u32 %v1570, 16
      %v1633 = vrot.slane %v1631, 5
      %v1634 = vsel %vm278, %v1629, %v1633
      %v1636 = vshrl.u32 %v1571, 16
      %v1638 = vrot.slane %v1636, 4
      %v1639 = vshll.u32 %v1571, 16
      %v1641 = vrot.slane %v1639, 5
      %v1642 = vor.u32 %v1638, %v1641
      %v1643 = vrot.slane %v1642, 4
      %v1645 = vshll.u32 %v1572, 16
      %v1647 = vrot.slane %v1645, 5
      %v1648 = vsel %vm278, %v1643, %v1647
      %v1650 = vshrl.u32 %v1573, 16
      %v1652 = vrot.slane %v1650, 4
      %v1653 = vshll.u32 %v1573, 16
      %v1655 = vrot.slane %v1653, 5
      %v1656 = vor.u32 %v1652, %v1655
      %v1657 = vrot.slane %v1656, 4
      %v1659 = vshll.u32 %v1574, 16
      %v1661 = vrot.slane %v1659, 5
      %v1662 = vsel %vm278, %v1657, %v1661
      %v1664 = vshrl.u32 %v1575, 16
      %v1666 = vrot.slane %v1664, 4
      %v1667 = vshll.u32 %v1575, 16
      %v1669 = vrot.slane %v1667, 5
      %v1670 = vor.u32 %v1666, %v1669
      %v1671 = vrot.slane %v1670, 4
      %v1673 = vshll.u32 %v1576, 16
      %v1675 = vrot.slane %v1673, 5
      %v1676 = vsel %vm278, %v1671, %v1675
      %v1678 = vshrl.u32 %v1577, 16
      %v1680 = vrot.slane %v1678, 4
      %v1681 = vshll.u32 %v1577, 16
      %v1683 = vrot.slane %v1681, 5
      %v1684 = vor.u32 %v1680, %v1683
      %v1685 = vrot.slane %v1684, 4
      %v1687 = vshll.u32 %v1578, 16
      %v1689 = vrot.slane %v1687, 5
      %v1690 = vsel %vm278, %v1685, %v1689
      %s1691 = scalar_lea.vmem %s1, 196
      %v1692 = vld [vmem:[%s1691] sm:$0xf]
      %v1693 = vld [vmem:[%s1691 + $0x4] sm:$0xf]
      %v1694 = vld [vmem:[%s1691 + $0x8] sm:$0xf]
      %v1695 = vld [vmem:[%s1691 + $0xc] sm:$0xf]
      %v1696 = vld [vmem:[%s1691 + $0x10] sm:$0xf]
      %v1697 = vld [vmem:[%s1691 + $0x14] sm:$0xf]
      %v1698 = vld [vmem:[%s1691 + $0x18] sm:$0xf]
      %v1699 = vunpack.c.l.b16 %v1592
      %v1700 = vunpack.c.l.b16 %v1606
      %v1701 = vunpack.c.l.b16 %v1620
      %v1702 = vunpack.c.l.b16 %v1634
      %v1703 = vunpack.c.l.b16 %v1648
      %v1704 = vunpack.c.l.b16 %v1662
      %v1705 = vunpack.c.l.b16 %v1676
      %v1706 = vunpack.c.l.b16 %v1690
      %v1707 = vpack.c.b16 %v1700, %v1699
      %v1708 = vpack.c.b16 %v1702, %v1701
      %v1709 = vpack.c.b16 %v1704, %v1703
      %v1710 = vpack.c.b16 %v1706, %v1705
      %v1718 = vunpack.c.l.b16 %v1692
      %v1719 = vunpack.c.l.b16 %v1693
      %v1720 = vunpack.c.l.b16 %v1694
      %v1721 = vunpack.c.l.b16 %v1695
      %v1722 = vunpack.c.l.b16 %v1696
      %v1723 = vunpack.c.l.b16 %v1697
      %v1724 = vunpack.c.l.b16 %v1698
      %v1725 = vpack.c.b16 %v1719, %v1718
      %v1726 = vpack.c.b16 %v1721, %v1720
      %v1727 = vpack.c.b16 %v1723, %v1722
      %v1728 = vpack.c.b16 %v1724, %v1724
      %v1733 = vsel %vm432, %v1707, 0
      %v1736 = vsel %vm432, %v1708, 0
      %v1739 = vsel %vm432, %v1709, 0
      %v1742 = vsel %vm432, %v1710, 0
      %v1745 = vsel %vm445, %v1728, 0
      %1747 = vmatprep.subr.bf16.mxu0 0
      %1748 = vmatpush1.bf16.msra.mxu0 0
      %1749 = vmatprep.subr.bf16.mxu0 0
      %1750 = vmatpush1.bf16.msra.mxu0 0
      %1751 = vmatprep.subr.bf16.mxu0 0
      %1752 = vmatpush1.bf16.msra.mxu0 0
      %1753 = vmatprep.subr.bf16.mxu0 0
      %1754 = vmatpush1.bf16.msra.mxu0 0
      %1755 = vmatprep.subr.bf16.mxu0 0
      %1756 = vmatpush1.bf16.msra.mxu0 %v1745
      %1757 = vmatprep.subr.bf16.mxu0 0
      %1758 = vmatpush1.bf16.msra.mxu0 %v1727
      %1759 = vmatprep.subr.bf16.mxu0 0
      %1760 = vmatpush1.bf16.msra.mxu0 %v1726
      %1761 = vmatprep.subr.bf16.mxu0 0
      %1762 = vmatpush1.bf16.msra.mxu0 %v1725
      %1763 = vmatprep.subr.bf16.mxu0 0
      %1764 = vmatpush2.bf16.msra.mxu0 0
      %1765 = vmatprep.subr.bf16.mxu0 0
      %1766 = vmatpush2.bf16.msra.mxu0 0
      %1767 = vmatprep.subr.bf16.mxu0 0
      %1768 = vmatpush2.bf16.msra.mxu0 0
      %1769 = vmatprep.subr.bf16.mxu0 0
      %1770 = vmatpush2.bf16.msra.mxu0 0
      %1771 = vmatprep.subr.bf16.mxu0 0
      %1772 = vmatpush2.bf16.msra.mxu0 0
      %1773 = vmatprep.subr.bf16.mxu0 0
      %1774 = vmatpush2.bf16.msra.mxu0 0
      %1775 = vmatprep.subr.bf16.mxu0 0
      %1776 = vmatpush2.bf16.msra.mxu0 0
      %1777 = vmatprep.subr.bf16.mxu0 0
      %1778 = vmatpush2.bf16.msra.mxu0 0
      %1779 = vmatprep.mubr.bf16.mxu0 0
      %1780 = vmatmul.mubr.bf16.gmra.mxu0 %v1733
      %v1781 = vpop.f32.mrf.mxu0
      %v1782 = vadd.f32 0.0, %v1781
      %v1783 = vpop.f32.mrf.mxu0
      %v1784 = vpop.f32.mrf.mxu0
      %v1785 = vadd.f32 0.0, %v1784
      %v1786 = vpop.f32.mrf.mxu0
      %1787 = vmatprep.mubr.bf16.mxu0 0
      %1788 = vmatmul.mubr.bf16.gmra.mxu0 %v1736
      %v1789 = vpop.f32.mrf.mxu0
      %v1790 = vadd.f32 0.0, %v1789
      %v1791 = vpop.f32.mrf.mxu0
      %v1792 = vpop.f32.mrf.mxu0
      %v1793 = vadd.f32 0.0, %v1792
      %v1794 = vpop.f32.mrf.mxu0
      %1795 = vmatprep.mubr.bf16.mxu0 0
      %1796 = vmatmul.mubr.bf16.gmra.mxu0 %v1739
      %v1797 = vpop.f32.mrf.mxu0
      %v1798 = vadd.f32 0.0, %v1797
      %v1799 = vpop.f32.mrf.mxu0
      %v1800 = vpop.f32.mrf.mxu0
      %v1801 = vadd.f32 0.0, %v1800
      %v1802 = vpop.f32.mrf.mxu0
      %1803 = vmatprep.mubr.bf16.mxu0 0
      %1804 = vmatmul.mubr.bf16.gmra.mxu0 %v1742
      %v1805 = vpop.f32.mrf.mxu0
      %v1806 = vadd.f32 0.0, %v1805
      %v1807 = vpop.f32.mrf.mxu0
      %v1808 = vpop.f32.mrf.mxu0
      %v1809 = vadd.f32 0.0, %v1808
      %v1810 = vpop.f32.mrf.mxu0
      %1811 = vdwg.mxu0
      %v1812 = vadd.f32 %v1555, %v1782
      %v1813 = vadd.f32 %v1556, %v1785
      %v1814 = vadd.f32 %v1557, %v1790
      %v1815 = vadd.f32 %v1558, %v1793
      %v1816 = vadd.f32 %v1559, %v1798
      %v1817 = vadd.f32 %v1560, %v1801
      %v1818 = vadd.f32 %v1561, %v1806
      %v1819 = vadd.f32 %v1562, %v1809
      %v1820 = vld [vmem:[%s1417] sm:$0xe]
      %v1821 = vld [vmem:[%s1417 + $0x8] sm:$0xe]
      %v1822 = vld [vmem:[%s1417 + $0x10] sm:$0xe]
      %v1823 = vld [vmem:[%s1417 + $0x18] sm:$0xe]
      %v1824 = vld [vmem:[%s1417 + $0x20] sm:$0xe]
      %v1825 = vld [vmem:[%s1417 + $0x28] sm:$0xe]
      %v1826 = vld [vmem:[%s1417 + $0x30] sm:$0xe]
      %v1827 = vld [vmem:[%s1417 + $0x38] sm:$0xe]
      %v1844 = vrot.slane %v1820, 5
      %v1845 = vrot.slane %v1844, 4
      %v1846 = vrot.slane %v1564, 5
      %v1847 = vsel %vm661, %v1845, %v1846
      %v1848 = vrot.slane %v1821, 5
      %v1849 = vrot.slane %v1848, 4
      %v1850 = vrot.slane %v1566, 5
      %v1851 = vsel %vm661, %v1849, %v1850
      %v1852 = vrot.slane %v1822, 5
      %v1853 = vrot.slane %v1852, 4
      %v1854 = vrot.slane %v1568, 5
      %v1855 = vsel %vm661, %v1853, %v1854
      %v1856 = vrot.slane %v1823, 5
      %v1857 = vrot.slane %v1856, 4
      %v1858 = vrot.slane %v1570, 5
      %v1859 = vsel %vm661, %v1857, %v1858
      %v1860 = vrot.slane %v1824, 5
      %v1861 = vrot.slane %v1860, 4
      %v1862 = vrot.slane %v1572, 5
      %v1863 = vsel %vm661, %v1861, %v1862
      %v1864 = vrot.slane %v1825, 5
      %v1865 = vrot.slane %v1864, 4
      %v1866 = vrot.slane %v1574, 5
      %v1867 = vsel %vm661, %v1865, %v1866
      %v1868 = vrot.slane %v1826, 5
      %v1869 = vrot.slane %v1868, 4
      %v1870 = vrot.slane %v1576, 5
      %v1871 = vsel %vm661, %v1869, %v1870
      %v1872 = vrot.slane %v1827, 5
      %v1873 = vrot.slane %v1872, 4
      %v1874 = vrot.slane %v1578, 5
      %v1875 = vsel %vm661, %v1873, %v1874
      %s1876 = scalar_lea.vmem %s1, 224
      %v1877 = vld [vmem:[%s1876] sm:$0xf]
      %v1878 = vld [vmem:[%s1876 + $0x4] sm:$0xf]
      %v1879 = vld [vmem:[%s1876 + $0x8] sm:$0xf]
      %v1880 = vld [vmem:[%s1876 + $0xc] sm:$0xf]
      %v1881 = vld [vmem:[%s1876 + $0x10] sm:$0xf]
      %v1882 = vld [vmem:[%s1876 + $0x14] sm:$0xf]
      %v1883 = vld [vmem:[%s1876 + $0x18] sm:$0xf]
      %v1884 = vunpack.c.l.b16 %v1847
      %v1885 = vunpack.c.l.b16 %v1851
      %v1886 = vunpack.c.l.b16 %v1855
      %v1887 = vunpack.c.l.b16 %v1859
      %v1888 = vunpack.c.l.b16 %v1863
      %v1889 = vunpack.c.l.b16 %v1867
      %v1890 = vunpack.c.l.b16 %v1871
      %v1891 = vunpack.c.l.b16 %v1875
      %v1892 = vpack.c.b16 %v1885, %v1884
      %v1893 = vpack.c.b16 %v1887, %v1886
      %v1894 = vpack.c.b16 %v1889, %v1888
      %v1895 = vpack.c.b16 %v1891, %v1890
      %v1903 = vunpack.c.l.b16 %v1877
      %v1904 = vunpack.c.l.b16 %v1878
      %v1905 = vunpack.c.l.b16 %v1879
      %v1906 = vunpack.c.l.b16 %v1880
      %v1907 = vunpack.c.l.b16 %v1881
      %v1908 = vunpack.c.l.b16 %v1882
      %v1909 = vunpack.c.l.b16 %v1883
      %v1910 = vpack.c.b16 %v1904, %v1903
      %v1911 = vpack.c.b16 %v1906, %v1905
      %v1912 = vpack.c.b16 %v1908, %v1907
      %v1913 = vpack.c.b16 %v1909, %v1909
      %v1918 = vsel %vm432, %v1892, 0
      %v1921 = vsel %vm432, %v1893, 0
      %v1924 = vsel %vm432, %v1894, 0
      %v1927 = vsel %vm432, %v1895, 0
      %v1930 = vsel %vm445, %v1913, 0
      %1932 = vmatprep.subr.bf16.mxu0 0
      %1933 = vmatpush1.bf16.msra.mxu0 0
      %1934 = vmatprep.subr.bf16.mxu0 0
      %1935 = vmatpush1.bf16.msra.mxu0 0
      %1936 = vmatprep.subr.bf16.mxu0 0
      %1937 = vmatpush1.bf16.msra.mxu0 0
      %1938 = vmatprep.subr.bf16.mxu0 0
      %1939 = vmatpush1.bf16.msra.mxu0 0
      %1940 = vmatprep.subr.bf16.mxu0 0
      %1941 = vmatpush1.bf16.msra.mxu0 %v1930
      %1942 = vmatprep.subr.bf16.mxu0 0
      %1943 = vmatpush1.bf16.msra.mxu0 %v1912
      %1944 = vmatprep.subr.bf16.mxu0 0
      %1945 = vmatpush1.bf16.msra.mxu0 %v1911
      %1946 = vmatprep.subr.bf16.mxu0 0
      %1947 = vmatpush1.bf16.msra.mxu0 %v1910
      %1948 = vmatprep.subr.bf16.mxu0 0
      %1949 = vmatpush2.bf16.msra.mxu0 0
      %1950 = vmatprep.subr.bf16.mxu0 0
      %1951 = vmatpush2.bf16.msra.mxu0 0
      %1952 = vmatprep.subr.bf16.mxu0 0
      %1953 = vmatpush2.bf16.msra.mxu0 0
      %1954 = vmatprep.subr.bf16.mxu0 0
      %1955 = vmatpush2.bf16.msra.mxu0 0
      %1956 = vmatprep.subr.bf16.mxu0 0
      %1957 = vmatpush2.bf16.msra.mxu0 0
      %1958 = vmatprep.subr.bf16.mxu0 0
      %1959 = vmatpush2.bf16.msra.mxu0 0
      %1960 = vmatprep.subr.bf16.mxu0 0
      %1961 = vmatpush2.bf16.msra.mxu0 0
      %1962 = vmatprep.subr.bf16.mxu0 0
      %1963 = vmatpush2.bf16.msra.mxu0 0
      %1964 = vmatprep.mubr.bf16.mxu0 0
      %1965 = vmatmul.mubr.bf16.gmra.mxu0 %v1918
      %v1966 = vpop.f32.mrf.mxu0
      %v1967 = vadd.f32 0.0, %v1966
      %v1968 = vpop.f32.mrf.mxu0
      %v1969 = vpop.f32.mrf.mxu0
      %v1970 = vadd.f32 0.0, %v1969
      %v1971 = vpop.f32.mrf.mxu0
      %1972 = vmatprep.mubr.bf16.mxu0 0
      %1973 = vmatmul.mubr.bf16.gmra.mxu0 %v1921
      %v1974 = vpop.f32.mrf.mxu0
      %v1975 = vadd.f32 0.0, %v1974
      %v1976 = vpop.f32.mrf.mxu0
      %v1977 = vpop.f32.mrf.mxu0
      %v1978 = vadd.f32 0.0, %v1977
      %v1979 = vpop.f32.mrf.mxu0
      %1980 = vmatprep.mubr.bf16.mxu0 0
      %1981 = vmatmul.mubr.bf16.gmra.mxu0 %v1924
      %v1982 = vpop.f32.mrf.mxu0
      %v1983 = vadd.f32 0.0, %v1982
      %v1984 = vpop.f32.mrf.mxu0
      %v1985 = vpop.f32.mrf.mxu0
      %v1986 = vadd.f32 0.0, %v1985
      %v1987 = vpop.f32.mrf.mxu0
      %1988 = vmatprep.mubr.bf16.mxu0 0
      %1989 = vmatmul.mubr.bf16.gmra.mxu0 %v1927
      %v1990 = vpop.f32.mrf.mxu0
      %v1991 = vadd.f32 0.0, %v1990
      %v1992 = vpop.f32.mrf.mxu0
      %v1993 = vpop.f32.mrf.mxu0
      %v1994 = vadd.f32 0.0, %v1993
      %v1995 = vpop.f32.mrf.mxu0
      %1996 = vdwg.mxu0
      %v1997 = vadd.f32 %v1812, %v1967
      %v1998 = vadd.f32 %v1813, %v1970
      %v1999 = vadd.f32 %v1814, %v1975
      %v2000 = vadd.f32 %v1815, %v1978
      %v2001 = vadd.f32 %v1816, %v1983
      %v2002 = vadd.f32 %v1817, %v1986
      %v2003 = vadd.f32 %v1818, %v1991
      %v2004 = vadd.f32 %v1819, %v1994
      %v2005 = vld [vmem:[%s2] sm:$0x1]
      %v2007 = vlaneseq
      %v2008 = vshrl.u32 %v2007, 7
      %v2009 = vsub.s32 0, %v2008
      %v2010 = vrot.slane %v2005, %v2009
      %v2012 = vadd.f32 %v1997, %v2010
      %v2013 = vadd.f32 %v1998, %v2010
      %v2014 = vadd.f32 %v1999, %v2010
      %v2015 = vadd.f32 %v2000, %v2010
      %v2016 = vadd.f32 %v2001, %v2010
      %v2017 = vadd.f32 %v2002, %v2010
      %v2018 = vadd.f32 %v2003, %v2010
      %v2019 = vadd.f32 %v2004, %v2010
      %v2020 = vmax.f32 %v2012, 0.0
      %v2021 = vmax.f32 %v2013, 0.0
      %v2022 = vmax.f32 %v2014, 0.0
      %v2023 = vmax.f32 %v2015, 0.0
      %v2024 = vmax.f32 %v2016, 0.0
      %v2025 = vmax.f32 %v2017, 0.0
      %v2026 = vmax.f32 %v2018, 0.0
      %v2027 = vmax.f32 %v2019, 0.0
      %v2028 = vpack.c.bf16 %v2021, %v2020
      %v2029 = vpack.c.bf16 %v2023, %v2022
      %v2030 = vpack.c.bf16 %v2025, %v2024
      %v2031 = vpack.c.bf16 %v2027, %v2026
      %v2032 = vld [vmem:[%s3] sm:$0xf]
      %v2033 = vld [vmem:[%s3 + $0x4] sm:$0xf]
      %v2034 = vld [vmem:[%s3 + $0x8] sm:$0xf]
      %v2035 = vld [vmem:[%s3 + $0xc] sm:$0xf]
      %v2036 = vld [vmem:[%s3 + $0x10] sm:$0xf]
      %v2037 = vld [vmem:[%s3 + $0x14] sm:$0xf]
      %v2038 = vld [vmem:[%s3 + $0x18] sm:$0xf]
      %v2039 = vld [vmem:[%s3 + $0x1c] sm:$0xf]
      %v2040 = vld [vmem:[%s3 + $0x20] sm:$0xf]
      %v2041 = vld [vmem:[%s3 + $0x24] sm:$0xf]
      %v2042 = vld [vmem:[%s3 + $0x28] sm:$0xf]
      %v2043 = vld [vmem:[%s3 + $0x2c] sm:$0xf]
      %v2044 = vld [vmem:[%s3 + $0x30] sm:$0xf]
      %v2045 = vld [vmem:[%s3 + $0x34] sm:$0xf]
      %v2046 = vld [vmem:[%s3 + $0x38] sm:$0xf]
      %v2047 = vld [vmem:[%s3 + $0x3c] sm:$0xf]
      %v2048 = vld [vmem:[%s4] sm:$0x1]
      %v2050 = vlaneseq
      %v2051 = vshrl.u32 %v2050, 7
      %v2052 = vsub.s32 0, %v2051
      %v2053 = vrot.slane %v2048, %v2052
      %v2071 = vunpack.c.l.b16 %v2032
      %v2072 = vunpack.c.l.b16 %v2033
      %v2073 = vunpack.c.l.b16 %v2034
      %v2074 = vunpack.c.l.b16 %v2035
      %v2075 = vunpack.c.l.b16 %v2036
      %v2076 = vunpack.c.l.b16 %v2037
      %v2077 = vunpack.c.l.b16 %v2038
      %v2078 = vunpack.c.l.b16 %v2039
      %v2079 = vunpack.c.l.b16 %v2040
      %v2080 = vunpack.c.l.b16 %v2041
      %v2081 = vunpack.c.l.b16 %v2042
      %v2082 = vunpack.c.l.b16 %v2043
      %v2083 = vunpack.c.l.b16 %v2044
      %v2084 = vunpack.c.l.b16 %v2045
      %v2085 = vunpack.c.l.b16 %v2046
      %v2086 = vunpack.c.l.b16 %v2047
      %v2087 = vpack.c.b16 %v2072, %v2071
      %v2088 = vpack.c.b16 %v2074, %v2073
      %v2089 = vpack.c.b16 %v2076, %v2075
      %v2090 = vpack.c.b16 %v2078, %v2077
      %v2091 = vpack.c.b16 %v2080, %v2079
      %v2092 = vpack.c.b16 %v2082, %v2081
      %v2093 = vpack.c.b16 %v2084, %v2083
      %v2094 = vpack.c.b16 %v2086, %v2085
      %2103 = vmatprep.subr.bf16.mxu0 0
      %2104 = vmatpush1.bf16.msra.mxu0 %v2094
      %2105 = vmatprep.subr.bf16.mxu0 0
      %2106 = vmatpush1.bf16.msra.mxu0 %v2093
      %2107 = vmatprep.subr.bf16.mxu0 0
      %2108 = vmatpush1.bf16.msra.mxu0 %v2092
      %2109 = vmatprep.subr.bf16.mxu0 0
      %2110 = vmatpush1.bf16.msra.mxu0 %v2091
      %2111 = vmatprep.subr.bf16.mxu0 0
      %2112 = vmatpush1.bf16.msra.mxu0 %v2090
      %2113 = vmatprep.subr.bf16.mxu0 0
      %2114 = vmatpush1.bf16.msra.mxu0 %v2089
      %2115 = vmatprep.subr.bf16.mxu0 0
      %2116 = vmatpush1.bf16.msra.mxu0 %v2088
      %2117 = vmatprep.subr.bf16.mxu0 0
      %2118 = vmatpush1.bf16.msra.mxu0 %v2087
      %2119 = vmatprep.subr.bf16.mxu0 0
      %2120 = vmatpush2.bf16.msra.mxu0 0
      %2121 = vmatprep.subr.bf16.mxu0 0
      %2122 = vmatpush2.bf16.msra.mxu0 0
      %2123 = vmatprep.subr.bf16.mxu0 0
      %2124 = vmatpush2.bf16.msra.mxu0 0
      %2125 = vmatprep.subr.bf16.mxu0 0
      %2126 = vmatpush2.bf16.msra.mxu0 0
      %2127 = vmatprep.subr.bf16.mxu0 0
      %2128 = vmatpush2.bf16.msra.mxu0 0
      %2129 = vmatprep.subr.bf16.mxu0 0
      %2130 = vmatpush2.bf16.msra.mxu0 0
      %2131 = vmatprep.subr.bf16.mxu0 0
      %2132 = vmatpush2.bf16.msra.mxu0 0
      %2133 = vmatprep.subr.bf16.mxu0 0
      %2134 = vmatpush2.bf16.msra.mxu0 0
      %2135 = vmatprep.mubr.bf16.mxu0 0
      %2136 = vmatmul.mubr.bf16.gmra.mxu0 %v2028
      %v2137 = vpop.f32.mrf.mxu0
      %v2138 = vadd.f32 %v2053, %v2137
      %v2139 = vpop.f32.mrf.mxu0
      %v2140 = vpop.f32.mrf.mxu0
      %v2141 = vadd.f32 %v2053, %v2140
      %v2142 = vpop.f32.mrf.mxu0
      %2143 = vmatprep.mubr.bf16.mxu0 0
      %2144 = vmatmul.mubr.bf16.gmra.mxu0 %v2029
      %v2145 = vpop.f32.mrf.mxu0
      %v2146 = vadd.f32 %v2053, %v2145
      %v2147 = vpop.f32.mrf.mxu0
      %v2148 = vpop.f32.mrf.mxu0
      %v2149 = vadd.f32 %v2053, %v2148
      %v2150 = vpop.f32.mrf.mxu0
      %2151 = vmatprep.mubr.bf16.mxu0 0
      %2152 = vmatmul.mubr.bf16.gmra.mxu0 %v2030
      %v2153 = vpop.f32.mrf.mxu0
      %v2154 = vadd.f32 %v2053, %v2153
      %v2155 = vpop.f32.mrf.mxu0
      %v2156 = vpop.f32.mrf.mxu0
      %v2157 = vadd.f32 %v2053, %v2156
      %v2158 = vpop.f32.mrf.mxu0
      %2159 = vmatprep.mubr.bf16.mxu0 0
      %2160 = vmatmul.mubr.bf16.gmra.mxu0 %v2031
      %v2161 = vpop.f32.mrf.mxu0
      %v2162 = vadd.f32 %v2053, %v2161
      %v2163 = vpop.f32.mrf.mxu0
      %v2164 = vpop.f32.mrf.mxu0
      %v2165 = vadd.f32 %v2053, %v2164
      %v2166 = vpop.f32.mrf.mxu0
      %2167 = vdwg.mxu0
      %v2168 = vsub.f32 0.0, %v2138
      %v2169 = vsub.f32 0.0, %v2141
      %v2170 = vsub.f32 0.0, %v2146
      %v2171 = vsub.f32 0.0, %v2149
      %v2172 = vsub.f32 0.0, %v2154
      %v2173 = vsub.f32 0.0, %v2157
      %v2174 = vsub.f32 0.0, %v2162
      %v2175 = vsub.f32 0.0, %v2165
      %v2176 = vmul.f32 %v2168, 1.442695
      %v2177 = vpow.pop %v2176
      %v2178 = vmul.f32 %v2169, 1.442695
      %v2179 = vpow.pop %v2178
      %v2180 = vmul.f32 %v2170, 1.442695
      %v2181 = vpow.pop %v2180
      %v2182 = vmul.f32 %v2171, 1.442695
      %v2183 = vpow.pop %v2182
      %v2184 = vmul.f32 %v2172, 1.442695
      %v2185 = vpow.pop %v2184
      %v2186 = vmul.f32 %v2173, 1.442695
      %v2187 = vpow.pop %v2186
      %v2188 = vmul.f32 %v2174, 1.442695
      %v2189 = vpow.pop %v2188
      %v2190 = vmul.f32 %v2175, 1.442695
      %v2191 = vpow.pop %v2190
      %v2192 = vadd.f32 %v2177, 1.0
      %v2193 = vadd.f32 %v2179, 1.0
      %v2194 = vadd.f32 %v2181, 1.0
      %v2195 = vadd.f32 %v2183, 1.0
      %v2196 = vadd.f32 %v2185, 1.0
      %v2197 = vadd.f32 %v2187, 1.0
      %v2198 = vadd.f32 %v2189, 1.0
      %v2199 = vadd.f32 %v2191, 1.0
      %v2200 = vrcp.pop %v2192
      %v2201 = vmul.f32 1.0, %v2200
      %v2202 = vrcp.pop %v2193
      %v2203 = vmul.f32 1.0, %v2202
      %v2204 = vrcp.pop %v2194
      %v2205 = vmul.f32 1.0, %v2204
      %v2206 = vrcp.pop %v2195
      %v2207 = vmul.f32 1.0, %v2206
      %v2208 = vrcp.pop %v2196
      %v2209 = vmul.f32 1.0, %v2208
      %v2210 = vrcp.pop %v2197
      %v2211 = vmul.f32 1.0, %v2210
      %v2212 = vrcp.pop %v2198
      %v2213 = vmul.f32 1.0, %v2212
      %v2214 = vrcp.pop %v2199
      %v2215 = vmul.f32 1.0, %v2214
      %v2216 = vlaneseq
      %v2217 = vand.u32 %v2216, 127
      %vm2218 = vcmp.lt.s32.totalorder %v2217, 8
      %v2219 = vsel %vm2218, %v2020, %v2201
      %v2220 = vsel %vm2218, %v2021, %v2203
      %v2221 = vsel %vm2218, %v2022, %v2205
      %v2222 = vsel %vm2218, %v2023, %v2207
      %v2223 = vsel %vm2218, %v2024, %v2209
      %v2224 = vsel %vm2218, %v2025, %v2211
      %v2225 = vsel %vm2218, %v2026, %v2213
      %v2226 = vsel %vm2218, %v2027, %v2215
      %2227 = vst [vmem:[%s246] sm:$0xff] %v2219
      %2228 = vst [vmem:[%s246 + $0x8] sm:$0xff] %v2220
      %2229 = vst [vmem:[%s246 + $0x10] sm:$0xff] %v2221
      %2230 = vst [vmem:[%s246 + $0x18] sm:$0xff] %v2222
      %2231 = vst [vmem:[%s246 + $0x20] sm:$0xff] %v2223
      %2232 = vst [vmem:[%s246 + $0x28] sm:$0xff] %v2224
      %2233 = vst [vmem:[%s246 + $0x30] sm:$0xff] %v2225
      %2234 = vst [vmem:[%s246 + $0x38] sm:$0xff] %v2226
      %s2235 = smul.u32 8, %s21
      %p2236 = scmp.lt.s32.totalorder %s20, 1
      %s2237 = scalar_select %p2236, %s20, 1
      %p2238 = scmp.lt.s32.totalorder %s2235, 7
      %s2239 = scalar_select %p2238, %s2235, 7
      %s2240 = smul.addr %s2237, 8
      %s2241 = sadd.s32 %s2239, %s2240
      %s2242 = smul.addr %s2241, 8
      %s2243 = scalar_lea.vmem %s5, %s2242
      // Predicated region
      $region41: #{a_call__.7} parent=39 // pred_check
        %p2244 = pneg %p158
      $region42: #{a_call__.7} parent=39 // pred_check_branch
        %2246 = sbr.rel (%p2244) target = $region44
      $region43: #{a_call__.7} parent=39 // pred_region
        %s2247 = smul.u32 8, %s21
      $region44: #{a_call__.7} parent=39 // pred_fallthru
        _
    $region40: #{a_call__.7} parent=5 // pred_fallthru
      _
    %p2248 = scmp.le.s32.totalorder 2, %s11
    // Predicated region
    $region45: #{a_call__.7} parent=5 // pred_check
      %p2249 = pneg %p2248
    $region46: #{a_call__.7} parent=5 // pred_check_branch
      %2251 = sbr.rel (%p2249) target = $region48
    $region47: #{a_call__.7} parent=5 // pred_region
      %s2252 = ssub.s32 %s11, 2
      // Predicated region
      $region49: #{a_call__.7} parent=47 // pred_check
        %p2253 = pneg %p164
      $region50: #{a_call__.7} parent=47 // pred_check_branch
        %2255 = sbr.rel (%p2253) target = $region52
      $region51: #{a_call__.7} parent=47 // pred_region
        %s2256 = smul.u32 8, %s23
        %p2257 = scmp.lt.s32.totalorder %s22, 1
        %s2258 = scalar_select %p2257, %s22, 1
        %p2259 = scmp.lt.s32.totalorder %s2256, 7
        %s2260 = scalar_select %p2259, %s2256, 7
        %s2261 = smul.addr %s2258, 8
        %s2262 = sadd.s32 %s2260, %s2261
        %s2263 = smul.addr %s2262, 8
        %s2264 = scalar_lea.vmem %s5, %s2263
      $region52: #{a_call__.7} parent=47 // pred_fallthru
        _
    $region48: #{a_call__.7} parent=5 // pred_fallthru
      _
  $region6: #{a_call__.7} parent=0 // loop_footer
    %s15 = sadd.s32 1, %s11
  $region7: #{a_call__.7} parent=0 // loop_footer_branch
    %10 = sbr.rel target = $region3
  $region8: #{a_call__.7} parent=0 // loop_exit
    _

</llo_original>
